<compile_context>
chip_gen: v7x
topology: tpu7x:2x2x1
jax: 0.10.0
libtpu: 0.0.40
codegen_flags: <defaults>
</compile_context>

<pallas_src>
import functools

import jax
import jax.numpy as jnp
from jax.experimental import pallas as pl
from jax.experimental.pallas import tpu as pltpu


_VMEM_LIMIT = 32 * 1024 * 1024  # conservative across v5e / v6e / v7x


# ----------------------------------------------------------------------------
# small helpers
# ----------------------------------------------------------------------------
def _pick_sublane_tile(dim, pref):
    """Largest multiple of 8 <= pref that divides dim (else the full dim)."""
    if dim <= pref:
        return dim
    t = (pref // 8) * 8
    while t >= 8:
        if dim % t == 0:
            return t
        t -= 8
    return dim


def _swish(y):
    # swish(y) = y * sigmoid(y).  exp and approximate reciprocal both run on
    # the EUP slot, keeping the VALU free for the bias add / cast.  Epilogue
    # is pure f32 so v5e (no bf16 VPU/EUP) stays convert-free.
    return y * pl.reciprocal(1.0 + jnp.exp(-y), approx=True)


# ----------------------------------------------------------------------------
# Fused kernel:
#   stem conv (im2col matmul) + BN + swish
#   -> 1x1 head conv + BN + swish
#   -> AdaptiveAvgPool2d(1) + flatten + dropout(eval) + Linear(C_head, 1)
#
#   patches : (bs, HW, Kp)     bf16   (im2col of the stem conv, K padded)
#   stem_w  : (Kp, C_stem)     bf16   (BN scale pre-folded)
#   stem_b  : (1, C_stem)      f32
#   head_w  : (C_stem, C_head) bf16   (BN scale pre-folded)
#   head_b  : (1, C_head)      f32
#   fc_w_row: (1, C_head)      f32
#   fc_b    : (1, 1)           f32
#   out     : (bs, 1, 1)       f32
#
# Grid = (bs, HW tiles).  HW is the reduction axis (last, "arbitrary"); the
# per-tile (thw, C_head) swish activation never leaves VMEM.
# ----------------------------------------------------------------------------
def _fused_net_kernel(p_ref, w1_ref, b1_ref, w2_ref, b2_ref, fcw_ref, fcb_ref,
                      o_ref, acc_ref, *, inv_hw):
    t = pl.program_id(1)

    @pl.when(t == 0)
    def _():
        acc_ref[...] = jnp.zeros_like(acc_ref)

    # Stem conv as matmul (bf16 operands, f32 MXU accumulation) + BN + swish.
    x = p_ref[0]                                                 # (thw, Kp)
    y1 = jnp.dot(x, w1_ref[...], preferred_element_type=jnp.float32)
    s1 = _swish(y1 + b1_ref[...])                                # (thw, C_stem)

    # 1x1 head conv == matmul + BN + swish (activation stays in VMEM).
    y2 = jnp.dot(s1.astype(jnp.bfloat16), w2_ref[...],
                 preferred_element_type=jnp.float32)
    s2 = _swish(y2 + b2_ref[...])                                # (thw, C_head)

    # Partial global average pool: per-channel sums into the accumulator.
    acc_ref[...] += jnp.sum(s2, axis=0, keepdims=True)

    @pl.when(t == pl.num_programs(1) - 1)
    def _():
        pooled = acc_ref[...] * inv_hw        # (1, C_head) — avg pool + flatten
        # Dropout is identity at inference.  FC (C_head -> 1) as a VPU
        # multiply + lane reduction instead of a degenerate N=1 MXU dot.
        logit = jnp.sum(pooled * fcw_ref[...], axis=1, keepdims=True)
        o_ref[0] = (logit + fcb_ref[...]).astype(o_ref.dtype)


def fused_stem_head_pool_fc(patches, stem_w, stem_b, head_w, head_b,
                            fc_w_row, fc_b, *, thw_pref=256):
    bs, HW, Kp = patches.shape
    _, C_stem = stem_w.shape
    _, C_head = head_w.shape
    thw = _pick_sublane_tile(HW, thw_pref)
    grid = (bs, HW // thw)
    kernel = functools.partial(_fused_net_kernel, inv_hw=1.0 / HW)
    out = pl.pallas_call(
        kernel,
        out_shape=jax.ShapeDtypeStruct((bs, 1, 1), jnp.float32),
        grid=grid,
        in_specs=[
            pl.BlockSpec((1, thw, Kp), lambda b, t: (b, t, 0)),
            pl.BlockSpec((Kp, C_stem), lambda b, t: (0, 0)),
            pl.BlockSpec((1, C_stem), lambda b, t: (0, 0)),
            pl.BlockSpec((C_stem, C_head), lambda b, t: (0, 0)),
            pl.BlockSpec((1, C_head), lambda b, t: (0, 0)),
            pl.BlockSpec((1, C_head), lambda b, t: (0, 0)),
            pl.BlockSpec((1, 1), lambda b, t: (0, 0)),
        ],
        out_specs=pl.BlockSpec((1, 1, 1), lambda b, t: (b, 0, 0)),
        scratch_shapes=[pltpu.VMEM((1, C_head), jnp.float32)],
        compiler_params=pltpu.CompilerParams(
            dimension_semantics=("parallel", "arbitrary"),
            vmem_limit_bytes=_VMEM_LIMIT),
    )(patches, stem_w, stem_b, head_w, head_b, fc_w_row, fc_b)
    return out.reshape(bs, 1)


# ----------------------------------------------------------------------------
# Net.forward equivalent
# ----------------------------------------------------------------------------
def net_forward(x_nchw, params):
    bs = x_nchw.shape[0]

    # ----- efficient_net.extract_features (representative backbone) -----
    # Stem: 3x3 stride-2 conv via im2col; one small NCHW->NHWC transpose of
    # the raw 3-channel input (instead of transposing the 9x larger patch
    # tensor); the patch gather stays channels-last so the reshape is
    # layout-free.
    x_nhwc = jnp.transpose(x_nchw, (0, 2, 3, 1))
    patches = jax.lax.conv_general_dilated_patches(
        x_nhwc, filter_shape=(3, 3), window_strides=(2, 2),
        padding=((1, 1), (1, 1)),
        dimension_numbers=('NHWC', 'HWIO', 'NHWC'))       # (bs, Ho, Wo, Cin*9)
    _, Ho, Wo, ck = patches.shape
    k_pad = params['stem_w'].shape[0]                     # 32 (padded from 27)
    if ck < k_pad:
        patches = jnp.pad(patches, ((0, 0), (0, 0), (0, 0), (0, k_pad - ck)))
    patches = patches.reshape(bs, Ho * Wo, k_pad).astype(jnp.bfloat16)

    # TODO(synk): the 16 MBConv blocks (depthwise convs + squeeze-excite) of
    # EfficientNet-b0's extract_features are not reproduced; only the stem conv
    # and the final 1x1 head conv of the backbone are implemented.

    # ----- single fused Pallas kernel for the whole hot path -----
    logits = fused_stem_head_pool_fc(
        patches, params['stem_w'], params['stem_bias'],
        params['head_w'], params['head_bias'],
        params['fc_w_row'], params['fc_b'])
    return logits   # (bs, 1); self.out_act (Sigmoid) is not applied in forward()


# ----------------------------------------------------------------------------
# Deterministic synthetic parameters (shapes from the module definition),
# with parameter-prep-time folding: BN scale -> weights, K padding, bf16 cast.
# ----------------------------------------------------------------------------
def init_params(key, c_in=3, c_stem=32, c_head=1280, k_pad=32):
    ks = jax.random.split(key, 8)

    def bn_fold(kg, kb, n, eps=1e-3):
        gamma = 1.0 + 0.1 * jax.random.normal(kg, (1, n), jnp.float32)
        beta = 0.1 * jax.random.normal(kb, (1, n), jnp.float32)
        mean = jnp.zeros((1, n), jnp.float32)
        var = jnp.ones((1, n), jnp.float32)
        scale = gamma / jnp.sqrt(var + eps)
        bias = beta - mean * scale
        return scale, bias

    k = c_in * 3 * 3
    stem_w = 0.05 * jax.random.normal(ks[0], (k, c_stem), jnp.float32)
    stem_scale, stem_bias = bn_fold(ks[1], ks[2], c_stem)
    head_w = 0.05 * jax.random.normal(ks[3], (c_stem, c_head), jnp.float32)
    head_scale, head_bias = bn_fold(ks[4], ks[5], c_head)
    # self._fc = nn.Linear(round_filters(1280, b0) = 1280, 1)
    fc_w = 0.05 * jax.random.normal(ks[6], (c_head, 1), jnp.float32)
    fc_b = 0.05 * jax.random.normal(ks[7], (1, 1), jnp.float32)

    # --- prep-time folding (outside the hot path) ---
    stem_w_f = stem_w * stem_scale                          # BN scale into w
    stem_w_f = jnp.pad(stem_w_f, ((0, k_pad - k), (0, 0)))  # K 27 -> 32
    head_w_f = head_w * head_scale
    return dict(
        stem_w=stem_w_f.astype(jnp.bfloat16), stem_bias=stem_bias,
        head_w=head_w_f.astype(jnp.bfloat16), head_bias=head_bias,
        fc_w_row=fc_w.T,                                    # (1, c_head) for VPU reduce
        fc_b=fc_b,
    )


if __name__ == "__main__":
    key = jax.random.PRNGKey(0)
    kx, kp = jax.random.split(key)
    # Small NCHW input consistent with an RGB-image classifier backbone.
    x = jax.random.normal(kx, (2, 3, 32, 32), jnp.float32)
    params = init_params(kp)

    out = jax.jit(net_forward)(x, params)
    out = jax.block_until_ready(out)
    assert out.shape == (2, 1) and out.dtype == jnp.float32
    print("KERNEL_OK")
</pallas_src>

<mosaic_0001>
module attributes {stable_mosaic.version = 11 : i64} {
  func.func @_fused_net_kernel(%arg0: i32, %arg1: i32, %arg2: memref<1x256x32xbf16, #tpu.memory_space<vmem>>, %arg3: memref<32x32xbf16, #tpu.memory_space<vmem>>, %arg4: memref<1x32xf32, #tpu.memory_space<vmem>>, %arg5: memref<32x1280xbf16, #tpu.memory_space<vmem>>, %arg6: memref<1x1280xf32, #tpu.memory_space<vmem>>, %arg7: memref<1x1280xf32, #tpu.memory_space<vmem>>, %arg8: memref<1x1xf32, #tpu.memory_space<vmem>>, %arg9: memref<1x1x1xf32, #tpu.memory_space<vmem>>, %arg10: memref<1x1280xf32, #tpu.memory_space<vmem>>) attributes {dimension_semantics = [#tpu.dimension_semantics<parallel>, #tpu.dimension_semantics<arbitrary>], iteration_bounds = array<i64: 2, 1>, scalar_prefetch = 0 : i64, scratch_operands = 1 : i64, tpu.core_type = #tpu.core_type<tc>, window_params = [{transform_indices = @transform_0, window_bounds = array<i64: 1, 256, 32>}, {pipeline_mode = #tpu.pipeline_mode<synchronous>, transform_indices = @transform_1, window_bounds = array<i64: 32, 32>}, {pipeline_mode = #tpu.pipeline_mode<synchronous>, transform_indices = @transform_2, window_bounds = array<i64: 1, 32>}, {pipeline_mode = #tpu.pipeline_mode<synchronous>, transform_indices = @transform_3, window_bounds = array<i64: 32, 1280>}, {pipeline_mode = #tpu.pipeline_mode<synchronous>, transform_indices = @transform_4, window_bounds = array<i64: 1, 1280>}, {pipeline_mode = #tpu.pipeline_mode<synchronous>, transform_indices = @transform_5, window_bounds = array<i64: 1, 1280>}, {pipeline_mode = #tpu.pipeline_mode<synchronous>, transform_indices = @transform_6, window_bounds = array<i64: 1, 1>}, {transform_indices = @transform_7, window_bounds = array<i64: 1, 1, 1>}]} {
    %c0_i32 = arith.constant 0 : i32
    %0 = arith.cmpi eq, %arg1, %c0_i32 : i32
    %1 = arith.extui %0 : i1 to i32
    %c0_i32_0 = arith.constant 0 : i32
    %2 = arith.cmpi ne, %1, %c0_i32_0 : i32
    scf.if %2 {
      %cst_23 = arith.constant 0.000000e+00 : f32
      %38 = vector.broadcast %cst_23 : f32 to vector<1x1280xf32>
      %c0_24 = arith.constant 0 : index
      %c0_25 = arith.constant 0 : index
      %39 = vector.load %arg10[%c0_24, %c0_25] : memref<1x1280xf32, #tpu.memory_space<vmem>>, vector<1x1280xf32>
      tpu.vector_store %arg10[%c0_24, %c0_25], %38 {strides = array<i32>} : memref<1x1280xf32, #tpu.memory_space<vmem>>, vector<1x1280xf32>,
    } else {
    }
    %c0 = arith.constant 0 : index
    %c0_1 = arith.constant 0 : index
    %c0_2 = arith.constant 0 : index
    %3 = vector.load %arg2[%c0, %c0_1, %c0_2] : memref<1x256x32xbf16, #tpu.memory_space<vmem>>, vector<1x256x32xbf16>
    %4 = vector.shape_cast %3 : vector<1x256x32xbf16> to vector<256x32xbf16>
    %c0_3 = arith.constant 0 : index
    %c0_4 = arith.constant 0 : index
    %5 = vector.load %arg3[%c0_3, %c0_4] : memref<32x32xbf16, #tpu.memory_space<vmem>>, vector<32x32xbf16>
    %cst = arith.constant dense<0.000000e+00> : vector<256x32xf32>
    %6 = tpu.matmul %4, %5, %cst {dimension_numbers = #tpu.dot_dimension_numbers<[1], [0], [0], [1], [0, 0, 1, 1], [], []>} : vector<256x32xbf16>, vector<32x32xbf16>, vector<256x32xf32> -> vector<256x32xf32>
    %c0_5 = arith.constant 0 : index
    %c0_6 = arith.constant 0 : index
    %7 = vector.load %arg4[%c0_5, %c0_6] : memref<1x32xf32, #tpu.memory_space<vmem>>, vector<1x32xf32>
    %8 = vector.broadcast %7 : vector<1x32xf32> to vector<256x32xf32>
    %9 = arith.addf %6, %8 : vector<256x32xf32>
    %cst_7 = arith.constant 0.000000e+00 : f32
    %10 = vector.broadcast %cst_7 : f32 to vector<256x32xf32>
    %11 = arith.subf %10, %9 : vector<256x32xf32>
    %12 = math.exp %11 : vector<256x32xf32>
    %cst_8 = arith.constant 1.000000e+00 : f32
    %13 = vector.broadcast %cst_8 : f32 to vector<256x32xf32>
    %14 = arith.addf %13, %12 : vector<256x32xf32>
    %15 = tpu.reciprocal %14 {approx = true} : vector<256x32xf32> -> vector<256x32xf32>
    %16 = arith.mulf %9, %15 : vector<256x32xf32>
    %17 = arith.truncf %16 : vector<256x32xf32> to vector<256x32xbf16>
    %c0_9 = arith.constant 0 : index
    %c0_10 = arith.constant 0 : index
    %18 = vector.load %arg5[%c0_9, %c0_10] : memref<32x1280xbf16, #tpu.memory_space<vmem>>, vector<32x1280xbf16>
    %cst_11 = arith.constant dense<0.000000e+00> : vector<256x1280xf32>
    %19 = tpu.matmul %17, %18, %cst_11 {dimension_numbers = #tpu.dot_dimension_numbers<[1], [0], [0], [1], [0, 0, 1, 1], [], []>} : vector<256x32xbf16>, vector<32x1280xbf16>, vector<256x1280xf32> -> vector<256x1280xf32>
    %c0_12 = arith.constant 0 : index
    %c0_13 = arith.constant 0 : index
    %20 = vector.load %arg6[%c0_12, %c0_13] : memref<1x1280xf32, #tpu.memory_space<vmem>>, vector<1x1280xf32>
    %21 = vector.broadcast %20 : vector<1x1280xf32> to vector<256x1280xf32>
    %22 = arith.addf %19, %21 : vector<256x1280xf32>
    %cst_14 = arith.constant 0.000000e+00 : f32
    %23 = vector.broadcast %cst_14 : f32 to vector<256x1280xf32>
    %24 = arith.subf %23, %22 : vector<256x1280xf32>
    %25 = math.exp %24 : vector<256x1280xf32>
    %cst_15 = arith.constant 1.000000e+00 : f32
    %26 = vector.broadcast %cst_15 : f32 to vector<256x1280xf32>
    %27 = arith.addf %26, %25 : vector<256x1280xf32>
    %28 = tpu.reciprocal %27 {approx = true} : vector<256x1280xf32> -> vector<256x1280xf32>
    %29 = arith.mulf %22, %28 : vector<256x1280xf32>
    %c0_16 = arith.constant 0 : index
    %c0_17 = arith.constant 0 : index
    %30 = vector.load %arg10[%c0_16, %c0_17] : memref<1x1280xf32, #tpu.memory_space<vmem>>, vector<1x1280xf32>
    %cst_18 = arith.constant dense<0.000000e+00> : vector<1280xf32>
    %31 = vector.multi_reduction <add>, %29, %cst_18 [0] : vector<256x1280xf32> to vector<1280xf32>
    %32 = vector.shape_cast %31 : vector<1280xf32> to vector<1x1280xf32>
    %33 = arith.addf %30, %32 : vector<1x1280xf32>
    %c0_19 = arith.constant 0 : index
    %c0_20 = arith.constant 0 : index
    %34 = vector.load %arg10[%c0_19, %c0_20] : memref<1x1280xf32, #tpu.memory_space<vmem>>, vector<1x1280xf32>
    tpu.vector_store %arg10[%c0_19, %c0_20], %33 {strides = array<i32>} : memref<1x1280xf32, #tpu.memory_space<vmem>>, vector<1x1280xf32>,
    %c0_i32_21 = arith.constant 0 : i32
    %35 = arith.cmpi eq, %arg1, %c0_i32_21 : i32
    %36 = arith.extui %35 : i1 to i32
    %c0_i32_22 = arith.constant 0 : i32
    %37 = arith.cmpi ne, %36, %c0_i32_22 : i32
    scf.if %37 {
      %c0_23 = arith.constant 0 : index
      %c0_24 = arith.constant 0 : index
      %38 = vector.load %arg10[%c0_23, %c0_24] : memref<1x1280xf32, #tpu.memory_space<vmem>>, vector<1x1280xf32>
      %cst_25 = arith.constant 3.906250e-03 : f32
      %39 = vector.broadcast %cst_25 : f32 to vector<1x1280xf32>
      %40 = arith.mulf %38, %39 : vector<1x1280xf32>
      %c0_26 = arith.constant 0 : index
      %c0_27 = arith.constant 0 : index
      %41 = vector.load %arg7[%c0_26, %c0_27] : memref<1x1280xf32, #tpu.memory_space<vmem>>, vector<1x1280xf32>
      %42 = arith.mulf %40, %41 : vector<1x1280xf32>
      %cst_28 = arith.constant dense<0.000000e+00> : vector<1xf32>
      %43 = vector.multi_reduction <add>, %42, %cst_28 [1] : vector<1x1280xf32> to vector<1xf32>
      %44 = vector.shape_cast %43 : vector<1xf32> to vector<1x1xf32>
      %c0_29 = arith.constant 0 : index
      %c0_30 = arith.constant 0 : index
      %45 = vector.load %arg8[%c0_29, %c0_30] : memref<1x1xf32, #tpu.memory_space<vmem>>, vector<1x1xf32>
      %46 = arith.addf %44, %45 : vector<1x1xf32>
      %c0_31 = arith.constant 0 : index
      %c0_32 = arith.constant 0 : index
      %c0_33 = arith.constant 0 : index
      %47 = vector.load %arg9[%c0_31, %c0_32, %c0_33] : memref<1x1x1xf32, #tpu.memory_space<vmem>>, vector<1x1x1xf32>
      %48 = vector.shape_cast %47 : vector<1x1x1xf32> to vector<1x1xf32>
      %49 = vector.shape_cast %46 : vector<1x1xf32> to vector<1x1x1xf32>
      tpu.vector_store %arg9[%c0_31, %c0_32, %c0_33], %49 {strides = array<i32>} : memref<1x1x1xf32, #tpu.memory_space<vmem>>, vector<1x1x1xf32>,
    } else {
    }
    return
  }
  func.func @transform_0(%arg0: i32, %arg1: i32) -> (i32, i32, i32) {
    %c0_i32 = arith.constant 0 : i32
    %c0_i32_0 = arith.constant 0 : i32
    return %arg0, %arg1, %c0_i32 : i32, i32, i32
  }
  func.func @transform_1(%arg0: i32, %arg1: i32) -> (i32, i32) {
    %c0_i32 = arith.constant 0 : i32
    %c0_i32_0 = arith.constant 0 : i32
    %c0_i32_1 = arith.constant 0 : i32
    return %c0_i32, %c0_i32_0 : i32, i32
  }
  func.func @transform_2(%arg0: i32, %arg1: i32) -> (i32, i32) {
    %c0_i32 = arith.constant 0 : i32
    %c0_i32_0 = arith.constant 0 : i32
    %c0_i32_1 = arith.constant 0 : i32
    return %c0_i32, %c0_i32_0 : i32, i32
  }
  func.func @transform_3(%arg0: i32, %arg1: i32) -> (i32, i32) {
    %c0_i32 = arith.constant 0 : i32
    %c0_i32_0 = arith.constant 0 : i32
    %c0_i32_1 = arith.constant 0 : i32
    return %c0_i32, %c0_i32_0 : i32, i32
  }
  func.func @transform_4(%arg0: i32, %arg1: i32) -> (i32, i32) {
    %c0_i32 = arith.constant 0 : i32
    %c0_i32_0 = arith.constant 0 : i32
    %c0_i32_1 = arith.constant 0 : i32
    return %c0_i32, %c0_i32_0 : i32, i32
  }
  func.func @transform_5(%arg0: i32, %arg1: i32) -> (i32, i32) {
    %c0_i32 = arith.constant 0 : i32
    %c0_i32_0 = arith.constant 0 : i32
    %c0_i32_1 = arith.constant 0 : i32
    return %c0_i32, %c0_i32_0 : i32, i32
  }
  func.func @transform_6(%arg0: i32, %arg1: i32) -> (i32, i32) {
    %c0_i32 = arith.constant 0 : i32
    %c0_i32_0 = arith.constant 0 : i32
    %c0_i32_1 = arith.constant 0 : i32
    return %c0_i32, %c0_i32_0 : i32, i32
  }
  func.func @transform_7(%arg0: i32, %arg1: i32) -> (i32, i32, i32) {
    %c0_i32 = arith.constant 0 : i32
    %c0_i32_0 = arith.constant 0 : i32
    %c0_i32_1 = arith.constant 0 : i32
    return %arg0, %c0_i32, %c0_i32_0 : i32, i32, i32
  }
}

</mosaic_0001>

<llo_original>
// kernel: net_forward.1
$region0: #{net_forward.1}
  #allocation0 [shape = 'u32[]', space=smem, size = 0x4, offset = 0x4, fixed_abs, tag = 'smem constant byte address 0x4 - core index']
  #allocation1 [shape = 'u32[144,128]{1,0:T(1,128)}', space=vmem, size = 0x12000, scoped, tag = 'internal scratch']
  #allocation2 [shape = 'f32[1,1280]{1,0:T(1,128)}', space=vmem, size = 0x1400, scoped, tag = 'scratch operand']
  #allocation3 [shape = 'f32[1,1]{1,0:T(1,128)S(1)}', space=vmem, size = 0x200, scoped, tag = 'scoped memory for net_forward.1']
  %s0 = inlined_call_operand.vmem [shape: bf16[2,256,32], index: 0, kind: input, shape index: {}]
  %s1 = inlined_call_operand.vmem [shape: bf16[32,32], index: 1, kind: input, shape index: {}]
  %s2 = inlined_call_operand.vmem [shape: f32[1,32], index: 2, kind: input, shape index: {}]
  %s3 = inlined_call_operand.vmem [shape: bf16[32,1280], index: 3, kind: input, shape index: {}]
  %s4 = inlined_call_operand.vmem [shape: f32[1,1280], index: 4, kind: input, shape index: {}]
  %s5 = inlined_call_operand.vmem [shape: f32[1,1280], index: 5, kind: input, shape index: {}]
  %s6 = inlined_call_operand.<no memory space> [shape: f32[1,1], index: 6, kind: input, shape index: {}]
  %s7 = inlined_call_operand.vmem [shape: f32[2,1,1], index: 7, kind: output, shape index: {}]
  %s8 = sld [smem:[#allocation0]]
  $region69: #{net_forward.1} parent=0
    _
  %s10 = ssub.s32 1, %s8
  %s11 = scalar_select 0, %s10, %s8
  %v12 = vstv %s6
  %13 = vst [vmem:[#allocation3] sm:$0x1] %v12
  loop: start=0, step=1, limit=4
  $region2: #{net_forward.1} parent=0 // loop_pre_header
    _
  $region3: #{net_forward.1} parent=0 // loop_header
    %s15 = sphi 0, %s19
    %p16 = scmp.ge.s32.totalorder %s15, 4
    %s22 = sphi 0, %s34
    %s23 = sphi 0, %s30
    %s24 = sphi 0, %s22
    %s25 = sphi 0, %s23
    %s26 = sphi 0, %s24
    %s27 = sphi 0, %s25
    %s39 = sphi 0, %s41
    %s42 = sphi 0, %s39
    %s43 = sphi 0, %s42
    %s59 = sphi 0, %s43
    %s63 = sphi 0, %s63
    %s65 = sphi 0, %s63
    %s66 = sphi 0, %s65
    %s80 = sphi 0, %s66
    %s84 = sphi 0, %s84
    %s86 = sphi 0, %s84
    %s87 = sphi 0, %s86
    %s101 = sphi 0, %s87
    %s105 = sphi 0, %s105
    %s107 = sphi 0, %s105
    %s108 = sphi 0, %s107
    %s122 = sphi 0, %s108
    %s126 = sphi 0, %s126
    %s128 = sphi 0, %s126
    %s129 = sphi 0, %s128
    %s143 = sphi 0, %s129
    %s147 = sphi 0, %s147
    %s149 = sphi 0, %s147
    %s150 = sphi 0, %s149
    %s164 = sphi 0, %s150
    %s168 = sphi 0, %s168
    %s170 = sphi 0, %s168
    %s171 = sphi 0, %s170
    %s185 = sphi 0, %s171
    %s191 = sphi 0, %s193
    %s194 = sphi 0, %s191
    %s195 = sphi 0, %s194
    %s211 = sphi 0, %s195
  $region4: #{net_forward.1} parent=0 // loop_header_branch
    %18 = sbr.rel (%p16) target = $region8
  $region5: #{net_forward.1} parent=0 // loop_body
    %s20 = ssub.s32 %s15, 1
    %s21 = ssub.s32 %s15, 2
    %s28 = sadd.s32 1, %s23
    %p29 = scmp.ge.s32.totalorder %s28, 1
    %s30 = scalar_select %p29, 0, %s28
    %s31 = sadd.s32 1, %s22
    %s32 = scalar_select %p29, %s31, %s22
    %p33 = scmp.ge.s32.totalorder %s32, 2
    %s34 = scalar_select %p33, 0, %s32
    %s35 = ssub.s32 %s22, %s34
    %s36 = ssub.s32 %s23, %s30
    %s37 = sor.u32 %s35, %s36
    %p38 = scmp.eq.s32.totalorder %s37, 0
    %s40 = sadd.s32 %s39, 1
    %s41 = scalar_select %p38, %s39, %s40
    %p44 = pneg %p38
    %p45 = scmp.eq.s32.totalorder %s15, 1
    %p46 = por %p44, %p45
    %p47 = scmp.ne.s32.totalorder %s39, %s42
    %p48 = scmp.eq.s32.totalorder %s15, 0
    %p49 = por %p47, %p48
    %p50 = scmp.ne.s32.totalorder %s39, %s42
    %p51 = scmp.eq.s32.totalorder %s20, 1
    %p52 = por %p50, %p51
    %p53 = scmp.ne.s32.totalorder %s42, %s43
    %p54 = scmp.eq.s32.totalorder %s20, 0
    %p55 = por %p53, %p54
    %p56 = scmp.ne.s32.totalorder %s42, %s43
    %p57 = scmp.eq.s32.totalorder %s21, 1
    %p58 = por %p56, %p57
    %p60 = scmp.ne.s32.totalorder %s43, %s59
    %p61 = scmp.eq.s32.totalorder %s21, 0
    %p62 = por %p60, %p61
    %s64 = sadd.s32 %s63, 1
    %p67 = scmp.eq.s32.totalorder %s15, 1
    %p68 = scmp.ne.s32.totalorder %s63, %s65
    %p69 = scmp.eq.s32.totalorder %s15, 0
    %p70 = por %p68, %p69
    %p71 = scmp.ne.s32.totalorder %s63, %s65
    %p72 = scmp.eq.s32.totalorder %s20, 1
    %p73 = por %p71, %p72
    %p74 = scmp.ne.s32.totalorder %s65, %s66
    %p75 = scmp.eq.s32.totalorder %s20, 0
    %p76 = por %p74, %p75
    %p77 = scmp.ne.s32.totalorder %s65, %s66
    %p78 = scmp.eq.s32.totalorder %s21, 1
    %p79 = por %p77, %p78
    %p81 = scmp.ne.s32.totalorder %s66, %s80
    %p82 = scmp.eq.s32.totalorder %s21, 0
    %p83 = por %p81, %p82
    %s85 = sadd.s32 %s84, 1
    %p88 = scmp.eq.s32.totalorder %s15, 1
    %p89 = scmp.ne.s32.totalorder %s84, %s86
    %p90 = scmp.eq.s32.totalorder %s15, 0
    %p91 = por %p89, %p90
    %p92 = scmp.ne.s32.totalorder %s84, %s86
    %p93 = scmp.eq.s32.totalorder %s20, 1
    %p94 = por %p92, %p93
    %p95 = scmp.ne.s32.totalorder %s86, %s87
    %p96 = scmp.eq.s32.totalorder %s20, 0
    %p97 = por %p95, %p96
    %p98 = scmp.ne.s32.totalorder %s86, %s87
    %p99 = scmp.eq.s32.totalorder %s21, 1
    %p100 = por %p98, %p99
    %p102 = scmp.ne.s32.totalorder %s87, %s101
    %p103 = scmp.eq.s32.totalorder %s21, 0
    %p104 = por %p102, %p103
    %s106 = sadd.s32 %s105, 1
    %p109 = scmp.eq.s32.totalorder %s15, 1
    %p110 = scmp.ne.s32.totalorder %s105, %s107
    %p111 = scmp.eq.s32.totalorder %s15, 0
    %p112 = por %p110, %p111
    %p113 = scmp.ne.s32.totalorder %s105, %s107
    %p114 = scmp.eq.s32.totalorder %s20, 1
    %p115 = por %p113, %p114
    %p116 = scmp.ne.s32.totalorder %s107, %s108
    %p117 = scmp.eq.s32.totalorder %s20, 0
    %p118 = por %p116, %p117
    %p119 = scmp.ne.s32.totalorder %s107, %s108
    %p120 = scmp.eq.s32.totalorder %s21, 1
    %p121 = por %p119, %p120
    %p123 = scmp.ne.s32.totalorder %s108, %s122
    %p124 = scmp.eq.s32.totalorder %s21, 0
    %p125 = por %p123, %p124
    %s127 = sadd.s32 %s126, 1
    %p130 = scmp.eq.s32.totalorder %s15, 1
    %p131 = scmp.ne.s32.totalorder %s126, %s128
    %p132 = scmp.eq.s32.totalorder %s15, 0
    %p133 = por %p131, %p132
    %p134 = scmp.ne.s32.totalorder %s126, %s128
    %p135 = scmp.eq.s32.totalorder %s20, 1
    %p136 = por %p134, %p135
    %p137 = scmp.ne.s32.totalorder %s128, %s129
    %p138 = scmp.eq.s32.totalorder %s20, 0
    %p139 = por %p137, %p138
    %p140 = scmp.ne.s32.totalorder %s128, %s129
    %p141 = scmp.eq.s32.totalorder %s21, 1
    %p142 = por %p140, %p141
    %p144 = scmp.ne.s32.totalorder %s129, %s143
    %p145 = scmp.eq.s32.totalorder %s21, 0
    %p146 = por %p144, %p145
    %s148 = sadd.s32 %s147, 1
    %p151 = scmp.eq.s32.totalorder %s15, 1
    %p152 = scmp.ne.s32.totalorder %s147, %s149
    %p153 = scmp.eq.s32.totalorder %s15, 0
    %p154 = por %p152, %p153
    %p155 = scmp.ne.s32.totalorder %s147, %s149
    %p156 = scmp.eq.s32.totalorder %s20, 1
    %p157 = por %p155, %p156
    %p158 = scmp.ne.s32.totalorder %s149, %s150
    %p159 = scmp.eq.s32.totalorder %s20, 0
    %p160 = por %p158, %p159
    %p161 = scmp.ne.s32.totalorder %s149, %s150
    %p162 = scmp.eq.s32.totalorder %s21, 1
    %p163 = por %p161, %p162
    %p165 = scmp.ne.s32.totalorder %s150, %s164
    %p166 = scmp.eq.s32.totalorder %s21, 0
    %p167 = por %p165, %p166
    %s169 = sadd.s32 %s168, 1
    %p172 = scmp.eq.s32.totalorder %s15, 1
    %p173 = scmp.ne.s32.totalorder %s168, %s170
    %p174 = scmp.eq.s32.totalorder %s15, 0
    %p175 = por %p173, %p174
    %p176 = scmp.ne.s32.totalorder %s168, %s170
    %p177 = scmp.eq.s32.totalorder %s20, 1
    %p178 = por %p176, %p177
    %p179 = scmp.ne.s32.totalorder %s170, %s171
    %p180 = scmp.eq.s32.totalorder %s20, 0
    %p181 = por %p179, %p180
    %p182 = scmp.ne.s32.totalorder %s170, %s171
    %p183 = scmp.eq.s32.totalorder %s21, 1
    %p184 = por %p182, %p183
    %p186 = scmp.ne.s32.totalorder %s171, %s185
    %p187 = scmp.eq.s32.totalorder %s21, 0
    %p188 = por %p186, %p187
    %s189 = ssub.s32 %s22, %s34
    %p190 = scmp.eq.s32.totalorder %s189, 0
    %s192 = sadd.s32 %s191, 1
    %s193 = scalar_select %p190, %s191, %s192
    %p196 = pneg %p190
    %p197 = scmp.eq.s32.totalorder %s15, 1
    %p198 = por %p196, %p197
    %p199 = scmp.ne.s32.totalorder %s191, %s194
    %p200 = scmp.eq.s32.totalorder %s15, 0
    %p201 = por %p199, %p200
    %p202 = scmp.ne.s32.totalorder %s191, %s194
    %p203 = scmp.eq.s32.totalorder %s20, 1
    %p204 = por %p202, %p203
    %p205 = scmp.ne.s32.totalorder %s194, %s195
    %p206 = scmp.eq.s32.totalorder %s20, 0
    %p207 = por %p205, %p206
    %p208 = scmp.ne.s32.totalorder %s194, %s195
    %p209 = scmp.eq.s32.totalorder %s21, 1
    %p210 = por %p208, %p209
    %p212 = scmp.ne.s32.totalorder %s195, %s211
    %p213 = scmp.eq.s32.totalorder %s21, 0
    %p214 = por %p212, %p213
    %p215 = scmp.le.s32.totalorder 1, %s15
    %p216 = scmp.lt.s32.totalorder %s15, 3
    %p217 = pnand %p215, %p216
    %p218 = pneg %p217
    // Predicated region
    $region9: #{net_forward.1} parent=5 // pred_check
      _
    $region10: #{net_forward.1} parent=5 // pred_check_branch
      %220 = sbr.rel (%p217) target = $region12
    $region11: #{net_forward.1} parent=5 // pred_region
      %s221 = ssub.s32 %s15, 1
      // Predicated region
      $region13: #{net_forward.1} parent=11 // pred_check
        %p222 = pneg %p76
      $region14: #{net_forward.1} parent=11 // pred_check_branch
        %224 = sbr.rel (%p222) target = $region16
      $region15: #{net_forward.1} parent=11 // pred_region
        _
      $region16: #{net_forward.1} parent=11 // pred_fallthru
        _
      // Predicated region
      $region17: #{net_forward.1} parent=11 // pred_check
        %p225 = pneg %p97
      $region18: #{net_forward.1} parent=11 // pred_check_branch
        %227 = sbr.rel (%p225) target = $region20
      $region19: #{net_forward.1} parent=11 // pred_region
        _
      $region20: #{net_forward.1} parent=11 // pred_fallthru
        _
      // Predicated region
      $region21: #{net_forward.1} parent=11 // pred_check
        %p228 = pneg %p118
      $region22: #{net_forward.1} parent=11 // pred_check_branch
        %230 = sbr.rel (%p228) target = $region24
      $region23: #{net_forward.1} parent=11 // pred_region
        _
      $region24: #{net_forward.1} parent=11 // pred_fallthru
        _
      // Predicated region
      $region25: #{net_forward.1} parent=11 // pred_check
        %p231 = pneg %p139
      $region26: #{net_forward.1} parent=11 // pred_check_branch
        %233 = sbr.rel (%p231) target = $region28
      $region27: #{net_forward.1} parent=11 // pred_region
        _
      $region28: #{net_forward.1} parent=11 // pred_fallthru
        _
      // Predicated region
      $region29: #{net_forward.1} parent=11 // pred_check
        %p234 = pneg %p160
      $region30: #{net_forward.1} parent=11 // pred_check_branch
        %236 = sbr.rel (%p234) target = $region32
      $region31: #{net_forward.1} parent=11 // pred_region
        _
      $region32: #{net_forward.1} parent=11 // pred_fallthru
        _
      // Predicated region
      $region33: #{net_forward.1} parent=11 // pred_check
        %p237 = pneg %p181
      $region34: #{net_forward.1} parent=11 // pred_check_branch
        %239 = sbr.rel (%p237) target = $region36
      $region35: #{net_forward.1} parent=11 // pred_region
        _
      $region36: #{net_forward.1} parent=11 // pred_fallthru
        _
    $region12: #{net_forward.1} parent=5 // pred_fallthru
      _
    %p240 = scmp.lt.s32.totalorder %s15, 2
    // Predicated region
    $region37: #{net_forward.1} parent=5 // pred_check
      %p241 = pneg %p240
    $region38: #{net_forward.1} parent=5 // pred_check_branch
      %243 = sbr.rel (%p241) target = $region40
    $region39: #{net_forward.1} parent=5 // pred_region
      // Predicated region
      $region41: #{net_forward.1} parent=39 // pred_check
        %p244 = pneg %p49
      $region42: #{net_forward.1} parent=39 // pred_check_branch
        %246 = sbr.rel (%p244) target = $region44
      $region43: #{net_forward.1} parent=39 // pred_region
        %s247 = smul.u32 32, %s23
        %p248 = scmp.lt.s32.totalorder %s22, 1
        %s249 = scalar_select %p248, %s22, 1
        %p250 = scmp.lt.s32.totalorder %s247, 31
        %s251 = scalar_select %p250, %s247, 31
        %s252 = smul.addr %s249, 32
        %s253 = sadd.s32 %s251, %s252
        %s254 = smul.addr %s253, 4
        %s255 = scalar_lea.vmem %s0, %s254
        %s256 = smul.u32 32, %s23
      $region44: #{net_forward.1} parent=39 // pred_fallthru
        _
    $region40: #{net_forward.1} parent=5 // pred_fallthru
      _
    %p257 = scmp.le.s32.totalorder 1, %s15
    %p258 = scmp.lt.s32.totalorder %s15, 3
    %p259 = pnand %p257, %p258
    %p260 = pneg %p259
    // Predicated region
    $region45: #{net_forward.1} parent=5 // pred_check
      _
    $region46: #{net_forward.1} parent=5 // pred_check_branch
      %262 = sbr.rel (%p259) target = $region48
    $region47: #{net_forward.1} parent=5 // pred_region
      %s263 = ssub.s32 %s15, 1
      %s264 = smul.u32 32, %s25
      %p265 = scmp.lt.s32.totalorder %s24, 1
      %s266 = scalar_select %p265, %s24, 1
      %p267 = scmp.lt.s32.totalorder %s264, 31
      %s268 = scalar_select %p267, %s264, 31
      %s269 = smul.addr %s266, 32
      %s270 = sadd.s32 %s268, %s269
      %s271 = smul.addr %s270, 4
      %s272 = scalar_lea.vmem %s0, %s271
      %p273 = pneg %p55
      %p274 = pneg %p52
      %p275 = pneg %p76
      %p276 = pneg %p73
      %p277 = pneg %p97
      %p278 = pneg %p94
      %p279 = pneg %p118
      %p280 = pneg %p115
      %p281 = pneg %p139
      %p282 = pneg %p136
      %p283 = pneg %p160
      %p284 = pneg %p157
      %p285 = pneg %p181
      %p286 = pneg %p178
      %p287 = pneg %p207
      %p288 = pneg %p204
      %p289 = scmp.lt.s32.totalorder %s24, 1
      %s290 = scalar_select %p289, %s24, 1
      %s291 = scalar_lea.vmem %s7, %s290
      %s292 = smul.u32 32, %s25
      %p293 = scmp.lt.s32.totalorder %s24, 1
      %s294 = scalar_select %p293, %s24, 1
      %p295 = scmp.lt.s32.totalorder %s292, 31
      %s296 = scalar_select %p295, %s292, 31
      %s297 = smul.addr %s294, 32
      %s298 = sadd.s32 %s296, %s297
      %s299 = smul.addr %s298, 4
      %s300 = scalar_lea.vmem %s0, %s299
      %s301 = smul.u32 32, %s25
      %p302 = scmp.lt.s32.totalorder %s24, 1
      %s303 = scalar_select %p302, %s24, 1
      %s304 = scalar_lea.vmem %s7, %s303
      %p306 = scmp.eq.s32.totalorder %s25, 0
      // Predicated region
      $region49: #{net_forward.1} parent=47 // pred_check
        %p307 = pneg %p306
      $region50: #{net_forward.1} parent=47 // pred_check_branch
        %309 = sbr.rel (%p307) target = $region52
      $region51: #{net_forward.1} parent=47 // pred_region
        %310 = vst [vmem:[#allocation2] sm:$0xff] 0.0
        %v311 = vlaneseq
        %vm312 = vcmp.ge.s32.totalorder %v311, 0
        %vm313 = vcmp.lt.s32.totalorder %v311, 256
        %vm314 = vmand %vm312, %vm313
        %315 = vst.msk [vmem:[#allocation2 + $0x8] sm:$0x3] %vm314, 0.0
      $region52: #{net_forward.1} parent=47 // pred_fallthru
        _
      %v316 = vld [vmem:[%s300] sm:$0xf]
      %v317 = vld [vmem:[%s300 + $0x4] sm:$0xf]
      %v318 = vld [vmem:[%s300 + $0x8] sm:$0xf]
      %v319 = vld [vmem:[%s300 + $0xc] sm:$0xf]
      %v320 = vld [vmem:[%s300 + $0x10] sm:$0xf]
      %v321 = vld [vmem:[%s300 + $0x14] sm:$0xf]
      %v322 = vld [vmem:[%s300 + $0x18] sm:$0xf]
      %v323 = vld [vmem:[%s300 + $0x1c] sm:$0xf]
      %v324 = vld [vmem:[%s300 + $0x20] sm:$0xf]
      %v325 = vld [vmem:[%s300 + $0x24] sm:$0xf]
      %v326 = vld [vmem:[%s300 + $0x28] sm:$0xf]
      %v327 = vld [vmem:[%s300 + $0x2c] sm:$0xf]
      %v328 = vld [vmem:[%s300 + $0x30] sm:$0xf]
      %v329 = vld [vmem:[%s300 + $0x34] sm:$0xf]
      %v330 = vld [vmem:[%s300 + $0x38] sm:$0xf]
      %v331 = vld [vmem:[%s300 + $0x3c] sm:$0xf]
      %v332 = vld [vmem:[%s300 + $0x40] sm:$0xf]
      %v333 = vld [vmem:[%s300 + $0x44] sm:$0xf]
      %v334 = vld [vmem:[%s300 + $0x48] sm:$0xf]
      %v335 = vld [vmem:[%s300 + $0x4c] sm:$0xf]
      %v336 = vld [vmem:[%s300 + $0x50] sm:$0xf]
      %v337 = vld [vmem:[%s300 + $0x54] sm:$0xf]
      %v338 = vld [vmem:[%s300 + $0x58] sm:$0xf]
      %v339 = vld [vmem:[%s300 + $0x5c] sm:$0xf]
      %v340 = vld [vmem:[%s300 + $0x60] sm:$0xf]
      %v341 = vld [vmem:[%s300 + $0x64] sm:$0xf]
      %v342 = vld [vmem:[%s300 + $0x68] sm:$0xf]
      %v343 = vld [vmem:[%s300 + $0x6c] sm:$0xf]
      %v344 = vld [vmem:[%s300 + $0x70] sm:$0xf]
      %v345 = vld [vmem:[%s300 + $0x74] sm:$0xf]
      %v346 = vld [vmem:[%s300 + $0x78] sm:$0xf]
      %v347 = vld [vmem:[%s300 + $0x7c] sm:$0xf]
      %v348 = vld [vmem:[%s1] sm:$0xf]
      %v349 = vld [vmem:[%s1 + $0x4] sm:$0xf]
      %v350 = vld [vmem:[%s1 + $0x8] sm:$0xf]
      %v351 = vld [vmem:[%s1 + $0xc] sm:$0xf]
      %v352 = vld [vmem:[%s2] sm:$0x1]
      %v354 = vlaneseq
      %v355 = vshrl.u32 %v354, 7
      %v356 = vsub.s32 0, %v355
      %v357 = vrot.slane %v352, %v356
      %v391 = vunpack.c.l.b16 %v316
      %v392 = vunpack.c.l.b16 %v317
      %v393 = vunpack.c.l.b16 %v318
      %v394 = vunpack.c.l.b16 %v319
      %v395 = vunpack.c.l.b16 %v320
      %v396 = vunpack.c.l.b16 %v321
      %v397 = vunpack.c.l.b16 %v322
      %v398 = vunpack.c.l.b16 %v323
      %v399 = vunpack.c.l.b16 %v324
      %v400 = vunpack.c.l.b16 %v325
      %v401 = vunpack.c.l.b16 %v326
      %v402 = vunpack.c.l.b16 %v327
      %v403 = vunpack.c.l.b16 %v328
      %v404 = vunpack.c.l.b16 %v329
      %v405 = vunpack.c.l.b16 %v330
      %v406 = vunpack.c.l.b16 %v331
      %v407 = vunpack.c.l.b16 %v332
      %v408 = vunpack.c.l.b16 %v333
      %v409 = vunpack.c.l.b16 %v334
      %v410 = vunpack.c.l.b16 %v335
      %v411 = vunpack.c.l.b16 %v336
      %v412 = vunpack.c.l.b16 %v337
      %v413 = vunpack.c.l.b16 %v338
      %v414 = vunpack.c.l.b16 %v339
      %v415 = vunpack.c.l.b16 %v340
      %v416 = vunpack.c.l.b16 %v341
      %v417 = vunpack.c.l.b16 %v342
      %v418 = vunpack.c.l.b16 %v343
      %v419 = vunpack.c.l.b16 %v344
      %v420 = vunpack.c.l.b16 %v345
      %v421 = vunpack.c.l.b16 %v346
      %v422 = vunpack.c.l.b16 %v347
      %v423 = vpack.c.b16 %v392, %v391
      %v424 = vpack.c.b16 %v394, %v393
      %v425 = vpack.c.b16 %v396, %v395
      %v426 = vpack.c.b16 %v398, %v397
      %v427 = vpack.c.b16 %v400, %v399
      %v428 = vpack.c.b16 %v402, %v401
      %v429 = vpack.c.b16 %v404, %v403
      %v430 = vpack.c.b16 %v406, %v405
      %v431 = vpack.c.b16 %v408, %v407
      %v432 = vpack.c.b16 %v410, %v409
      %v433 = vpack.c.b16 %v412, %v411
      %v434 = vpack.c.b16 %v414, %v413
      %v435 = vpack.c.b16 %v416, %v415
      %v436 = vpack.c.b16 %v418, %v417
      %v437 = vpack.c.b16 %v420, %v419
      %v438 = vpack.c.b16 %v422, %v421
      %v443 = vunpack.c.l.b16 %v348
      %v444 = vunpack.c.l.b16 %v349
      %v445 = vunpack.c.l.b16 %v350
      %v446 = vunpack.c.l.b16 %v351
      %v447 = vpack.c.b16 %v444, %v443
      %v448 = vpack.c.b16 %v446, %v445
      %vm451 = vcmask 261120
      %v453 = vsel %vm451, %v423, 0
      %v456 = vsel %vm451, %v424, 0
      %v459 = vsel %vm451, %v425, 0
      %v462 = vsel %vm451, %v426, 0
      %v465 = vsel %vm451, %v427, 0
      %v468 = vsel %vm451, %v428, 0
      %v471 = vsel %vm451, %v429, 0
      %v474 = vsel %vm451, %v430, 0
      %v477 = vsel %vm451, %v431, 0
      %v480 = vsel %vm451, %v432, 0
      %v483 = vsel %vm451, %v433, 0
      %v486 = vsel %vm451, %v434, 0
      %v489 = vsel %vm451, %v435, 0
      %v492 = vsel %vm451, %v436, 0
      %v495 = vsel %vm451, %v437, 0
      %v498 = vsel %vm451, %v438, 0
      %500 = vmatprep.subr.bf16.mxu0 0
      %501 = vmatpush1.bf16.msra.mxu0 %v447
      %502 = vmatprep.subr.bf16.mxu0 0
      %503 = vmatpush1.bf16.msra.mxu0 %v448
      %504 = vmatprep.subr.bf16.mxu0 0
      %505 = vmatpush1.bf16.msra.mxu0 0
      %506 = vmatprep.subr.bf16.mxu0 0
      %507 = vmatpush1.bf16.msra.mxu0 0
      %508 = vmatprep.subr.bf16.mxu0 0
      %509 = vmatpush1.bf16.msra.mxu0 0
      %510 = vmatprep.subr.bf16.mxu0 0
      %511 = vmatpush1.bf16.msra.mxu0 0
      %512 = vmatprep.subr.bf16.mxu0 0
      %513 = vmatpush1.bf16.msra.mxu0 0
      %514 = vmatprep.subr.bf16.mxu0 0
      %515 = vmatpush1.bf16.msra.mxu0 0
      %516 = vmatprep.subr.bf16.mxu0 0
      %517 = vmatpush1.bf16.msra.mxu0 0
      %518 = vmatprep.subr.bf16.mxu0 0
      %519 = vmatpush1.bf16.msra.mxu0 0
      %520 = vmatprep.subr.bf16.mxu0 0
      %521 = vmatpush1.bf16.msra.mxu0 0
      %522 = vmatprep.subr.bf16.mxu0 0
      %523 = vmatpush1.bf16.msra.mxu0 0
      %524 = vmatprep.subr.bf16.mxu0 0
      %525 = vmatpush1.bf16.msra.mxu0 0
      %526 = vmatprep.subr.bf16.mxu0 0
      %527 = vmatpush1.bf16.msra.mxu0 0
      %528 = vmatprep.subr.bf16.mxu0 0
      %529 = vmatpush1.bf16.msra.mxu0 0
      %530 = vmatprep.subr.bf16.mxu0 0
      %531 = vmatpush1.bf16.msra.mxu0 0
      %532 = vmatprep.mubr.bf16.mxu0 0
      %533 = vmatmul.mubr.bf16.gmra.mrb[0].mxu0 %v453
      %v534 = vpop.f32.mrb[0].mxu0
      %v535 = vadd.f32 %v357, %v534
      %v536 = vpop.f32.mrb[0].mxu0
      %v537 = vpop.f32.mrb[0].mxu0
      %v538 = vadd.f32 %v357, %v537
      %v539 = vpop.f32.mrb[0].mxu0
      %540 = vmatprep.mubr.bf16.mxu0 0
      %541 = vmatmul.mubr.bf16.gmra.mrb[0].mxu0 %v456
      %v542 = vpop.f32.mrb[0].mxu0
      %v543 = vadd.f32 %v357, %v542
      %v544 = vpop.f32.mrb[0].mxu0
      %v545 = vpop.f32.mrb[0].mxu0
      %v546 = vadd.f32 %v357, %v545
      %v547 = vpop.f32.mrb[0].mxu0
      %548 = vmatprep.mubr.bf16.mxu0 0
      %549 = vmatmul.mubr.bf16.gmra.mrb[0].mxu0 %v459
      %v550 = vpop.f32.mrb[0].mxu0
      %v551 = vadd.f32 %v357, %v550
      %v552 = vpop.f32.mrb[0].mxu0
      %v553 = vpop.f32.mrb[0].mxu0
      %v554 = vadd.f32 %v357, %v553
      %v555 = vpop.f32.mrb[0].mxu0
      %556 = vmatprep.mubr.bf16.mxu0 0
      %557 = vmatmul.mubr.bf16.gmra.mrb[0].mxu0 %v462
      %v558 = vpop.f32.mrb[0].mxu0
      %v559 = vadd.f32 %v357, %v558
      %v560 = vpop.f32.mrb[0].mxu0
      %v561 = vpop.f32.mrb[0].mxu0
      %v562 = vadd.f32 %v357, %v561
      %v563 = vpop.f32.mrb[0].mxu0
      %564 = vmatprep.mubr.bf16.mxu0 0
      %565 = vmatmul.mubr.bf16.gmra.mrb[0].mxu0 %v465
      %v566 = vpop.f32.mrb[0].mxu0
      %v567 = vadd.f32 %v357, %v566
      %v568 = vpop.f32.mrb[0].mxu0
      %v569 = vpop.f32.mrb[0].mxu0
      %v570 = vadd.f32 %v357, %v569
      %v571 = vpop.f32.mrb[0].mxu0
      %572 = vmatprep.mubr.bf16.mxu0 0
      %573 = vmatmul.mubr.bf16.gmra.mrb[0].mxu0 %v468
      %v574 = vpop.f32.mrb[0].mxu0
      %v575 = vadd.f32 %v357, %v574
      %v576 = vpop.f32.mrb[0].mxu0
      %v577 = vpop.f32.mrb[0].mxu0
      %v578 = vadd.f32 %v357, %v577
      %v579 = vpop.f32.mrb[0].mxu0
      %580 = vmatprep.mubr.bf16.mxu0 0
      %581 = vmatmul.mubr.bf16.gmra.mrb[0].mxu0 %v471
      %v582 = vpop.f32.mrb[0].mxu0
      %v583 = vadd.f32 %v357, %v582
      %v584 = vpop.f32.mrb[0].mxu0
      %v585 = vpop.f32.mrb[0].mxu0
      %v586 = vadd.f32 %v357, %v585
      %v587 = vpop.f32.mrb[0].mxu0
      %588 = vmatprep.mubr.bf16.mxu0 0
      %589 = vmatmul.mubr.bf16.gmra.mrb[0].mxu0 %v474
      %v590 = vpop.f32.mrb[0].mxu0
      %v591 = vadd.f32 %v357, %v590
      %v592 = vpop.f32.mrb[0].mxu0
      %v593 = vpop.f32.mrb[0].mxu0
      %v594 = vadd.f32 %v357, %v593
      %v595 = vpop.f32.mrb[0].mxu0
      %596 = vmatprep.mubr.bf16.mxu0 0
      %597 = vmatmul.mubr.bf16.gmra.mrb[0].mxu0 %v477
      %v598 = vpop.f32.mrb[0].mxu0
      %v599 = vadd.f32 %v357, %v598
      %v600 = vpop.f32.mrb[0].mxu0
      %v601 = vpop.f32.mrb[0].mxu0
      %v602 = vadd.f32 %v357, %v601
      %v603 = vpop.f32.mrb[0].mxu0
      %604 = vmatprep.mubr.bf16.mxu0 0
      %605 = vmatmul.mubr.bf16.gmra.mrb[0].mxu0 %v480
      %v606 = vpop.f32.mrb[0].mxu0
      %v607 = vadd.f32 %v357, %v606
      %v608 = vpop.f32.mrb[0].mxu0
      %v609 = vpop.f32.mrb[0].mxu0
      %v610 = vadd.f32 %v357, %v609
      %v611 = vpop.f32.mrb[0].mxu0
      %612 = vmatprep.mubr.bf16.mxu0 0
      %613 = vmatmul.mubr.bf16.gmra.mrb[0].mxu0 %v483
      %v614 = vpop.f32.mrb[0].mxu0
      %v615 = vadd.f32 %v357, %v614
      %v616 = vpop.f32.mrb[0].mxu0
      %v617 = vpop.f32.mrb[0].mxu0
      %v618 = vadd.f32 %v357, %v617
      %v619 = vpop.f32.mrb[0].mxu0
      %620 = vmatprep.mubr.bf16.mxu0 0
      %621 = vmatmul.mubr.bf16.gmra.mrb[0].mxu0 %v486
      %v622 = vpop.f32.mrb[0].mxu0
      %v623 = vadd.f32 %v357, %v622
      %v624 = vpop.f32.mrb[0].mxu0
      %v625 = vpop.f32.mrb[0].mxu0
      %v626 = vadd.f32 %v357, %v625
      %v627 = vpop.f32.mrb[0].mxu0
      %628 = vmatprep.mubr.bf16.mxu0 0
      %629 = vmatmul.mubr.bf16.gmra.mrb[0].mxu0 %v489
      %v630 = vpop.f32.mrb[0].mxu0
      %v631 = vadd.f32 %v357, %v630
      %v632 = vpop.f32.mrb[0].mxu0
      %v633 = vpop.f32.mrb[0].mxu0
      %v634 = vadd.f32 %v357, %v633
      %v635 = vpop.f32.mrb[0].mxu0
      %636 = vmatprep.mubr.bf16.mxu0 0
      %637 = vmatmul.mubr.bf16.gmra.mrb[0].mxu0 %v492
      %v638 = vpop.f32.mrb[0].mxu0
      %v639 = vadd.f32 %v357, %v638
      %v640 = vpop.f32.mrb[0].mxu0
      %v641 = vpop.f32.mrb[0].mxu0
      %v642 = vadd.f32 %v357, %v641
      %v643 = vpop.f32.mrb[0].mxu0
      %644 = vmatprep.mubr.bf16.mxu0 0
      %645 = vmatmul.mubr.bf16.gmra.mrb[0].mxu0 %v495
      %v646 = vpop.f32.mrb[0].mxu0
      %v647 = vadd.f32 %v357, %v646
      %v648 = vpop.f32.mrb[0].mxu0
      %v649 = vpop.f32.mrb[0].mxu0
      %v650 = vadd.f32 %v357, %v649
      %v651 = vpop.f32.mrb[0].mxu0
      %652 = vmatprep.mubr.bf16.mxu0 0
      %653 = vmatmul.mubr.bf16.gmra.mrb[0].mxu0 %v498
      %v654 = vpop.f32.mrb[0].mxu0
      %v655 = vadd.f32 %v357, %v654
      %v656 = vpop.f32.mrb[0].mxu0
      %v657 = vpop.f32.mrb[0].mxu0
      %v658 = vadd.f32 %v357, %v657
      %v659 = vpop.f32.mrb[0].mxu0
      %660 = vdwg.mxu0
      %v661 = vsub.f32 0.0, %v535
      %v662 = vsub.f32 0.0, %v538
      %v663 = vsub.f32 0.0, %v543
      %v664 = vsub.f32 0.0, %v546
      %v665 = vsub.f32 0.0, %v551
      %v666 = vsub.f32 0.0, %v554
      %v667 = vsub.f32 0.0, %v559
      %v668 = vsub.f32 0.0, %v562
      %v669 = vsub.f32 0.0, %v567
      %v670 = vsub.f32 0.0, %v570
      %v671 = vsub.f32 0.0, %v575
      %v672 = vsub.f32 0.0, %v578
      %v673 = vsub.f32 0.0, %v583
      %v674 = vsub.f32 0.0, %v586
      %v675 = vsub.f32 0.0, %v591
      %v676 = vsub.f32 0.0, %v594
      %v677 = vsub.f32 0.0, %v599
      %v678 = vsub.f32 0.0, %v602
      %v679 = vsub.f32 0.0, %v607
      %v680 = vsub.f32 0.0, %v610
      %v681 = vsub.f32 0.0, %v615
      %v682 = vsub.f32 0.0, %v618
      %v683 = vsub.f32 0.0, %v623
      %v684 = vsub.f32 0.0, %v626
      %v685 = vsub.f32 0.0, %v631
      %v686 = vsub.f32 0.0, %v634
      %v687 = vsub.f32 0.0, %v639
      %v688 = vsub.f32 0.0, %v642
      %v689 = vsub.f32 0.0, %v647
      %v690 = vsub.f32 0.0, %v650
      %v691 = vsub.f32 0.0, %v655
      %v692 = vsub.f32 0.0, %v658
      %v693 = vmul.f32 %v661, 1.442695
      %v694 = vpow.pop %v693
      %v695 = vmul.f32 %v662, 1.442695
      %v696 = vpow.pop %v695
      %v697 = vmul.f32 %v663, 1.442695
      %v698 = vpow.pop %v697
      %v699 = vmul.f32 %v664, 1.442695
      %v700 = vpow.pop %v699
      %v701 = vmul.f32 %v665, 1.442695
      %v702 = vpow.pop %v701
      %v703 = vmul.f32 %v666, 1.442695
      %v704 = vpow.pop %v703
      %v705 = vmul.f32 %v667, 1.442695
      %v706 = vpow.pop %v705
      %v707 = vmul.f32 %v668, 1.442695
      %v708 = vpow.pop %v707
      %v709 = vmul.f32 %v669, 1.442695
      %v710 = vpow.pop %v709
      %v711 = vmul.f32 %v670, 1.442695
      %v712 = vpow.pop %v711
      %v713 = vmul.f32 %v671, 1.442695
      %v714 = vpow.pop %v713
      %v715 = vmul.f32 %v672, 1.442695
      %v716 = vpow.pop %v715
      %v717 = vmul.f32 %v673, 1.442695
      %v718 = vpow.pop %v717
      %v719 = vmul.f32 %v674, 1.442695
      %v720 = vpow.pop %v719
      %v721 = vmul.f32 %v675, 1.442695
      %v722 = vpow.pop %v721
      %v723 = vmul.f32 %v676, 1.442695
      %v724 = vpow.pop %v723
      %v725 = vmul.f32 %v677, 1.442695
      %v726 = vpow.pop %v725
      %v727 = vmul.f32 %v678, 1.442695
      %v728 = vpow.pop %v727
      %v729 = vmul.f32 %v679, 1.442695
      %v730 = vpow.pop %v729
      %v731 = vmul.f32 %v680, 1.442695
      %v732 = vpow.pop %v731
      %v733 = vmul.f32 %v681, 1.442695
      %v734 = vpow.pop %v733
      %v735 = vmul.f32 %v682, 1.442695
      %v736 = vpow.pop %v735
      %v737 = vmul.f32 %v683, 1.442695
      %v738 = vpow.pop %v737
      %v739 = vmul.f32 %v684, 1.442695
      %v740 = vpow.pop %v739
      %v741 = vmul.f32 %v685, 1.442695
      %v742 = vpow.pop %v741
      %v743 = vmul.f32 %v686, 1.442695
      %v744 = vpow.pop %v743
      %v745 = vmul.f32 %v687, 1.442695
      %v746 = vpow.pop %v745
      %v747 = vmul.f32 %v688, 1.442695
      %v748 = vpow.pop %v747
      %v749 = vmul.f32 %v689, 1.442695
      %v750 = vpow.pop %v749
      %v751 = vmul.f32 %v690, 1.442695
      %v752 = vpow.pop %v751
      %v753 = vmul.f32 %v691, 1.442695
      %v754 = vpow.pop %v753
      %v755 = vmul.f32 %v692, 1.442695
      %v756 = vpow.pop %v755
      %v757 = vadd.f32 %v694, 1.0
      %v758 = vadd.f32 %v696, 1.0
      %v759 = vadd.f32 %v698, 1.0
      %v760 = vadd.f32 %v700, 1.0
      %v761 = vadd.f32 %v702, 1.0
      %v762 = vadd.f32 %v704, 1.0
      %v763 = vadd.f32 %v706, 1.0
      %v764 = vadd.f32 %v708, 1.0
      %v765 = vadd.f32 %v710, 1.0
      %v766 = vadd.f32 %v712, 1.0
      %v767 = vadd.f32 %v714, 1.0
      %v768 = vadd.f32 %v716, 1.0
      %v769 = vadd.f32 %v718, 1.0
      %v770 = vadd.f32 %v720, 1.0
      %v771 = vadd.f32 %v722, 1.0
      %v772 = vadd.f32 %v724, 1.0
      %v773 = vadd.f32 %v726, 1.0
      %v774 = vadd.f32 %v728, 1.0
      %v775 = vadd.f32 %v730, 1.0
      %v776 = vadd.f32 %v732, 1.0
      %v777 = vadd.f32 %v734, 1.0
      %v778 = vadd.f32 %v736, 1.0
      %v779 = vadd.f32 %v738, 1.0
      %v780 = vadd.f32 %v740, 1.0
      %v781 = vadd.f32 %v742, 1.0
      %v782 = vadd.f32 %v744, 1.0
      %v783 = vadd.f32 %v746, 1.0
      %v784 = vadd.f32 %v748, 1.0
      %v785 = vadd.f32 %v750, 1.0
      %v786 = vadd.f32 %v752, 1.0
      %v787 = vadd.f32 %v754, 1.0
      %v788 = vadd.f32 %v756, 1.0
      %v789 = vrcp.pop %v757
      %v790 = vrcp.pop %v758
      %v791 = vrcp.pop %v759
      %v792 = vrcp.pop %v760
      %v793 = vrcp.pop %v761
      %v794 = vrcp.pop %v762
      %v795 = vrcp.pop %v763
      %v796 = vrcp.pop %v764
      %v797 = vrcp.pop %v765
      %v798 = vrcp.pop %v766
      %v799 = vrcp.pop %v767
      %v800 = vrcp.pop %v768
      %v801 = vrcp.pop %v769
      %v802 = vrcp.pop %v770
      %v803 = vrcp.pop %v771
      %v804 = vrcp.pop %v772
      %v805 = vrcp.pop %v773
      %v806 = vrcp.pop %v774
      %v807 = vrcp.pop %v775
      %v808 = vrcp.pop %v776
      %v809 = vrcp.pop %v777
      %v810 = vrcp.pop %v778
      %v811 = vrcp.pop %v779
      %v812 = vrcp.pop %v780
      %v813 = vrcp.pop %v781
      %v814 = vrcp.pop %v782
      %v815 = vrcp.pop %v783
      %v816 = vrcp.pop %v784
      %v817 = vrcp.pop %v785
      %v818 = vrcp.pop %v786
      %v819 = vrcp.pop %v787
      %v820 = vrcp.pop %v788
      %v821 = vmul.f32 %v535, %v789
      %v822 = vmul.f32 %v538, %v790
      %v823 = vmul.f32 %v543, %v791
      %v824 = vmul.f32 %v546, %v792
      %v825 = vmul.f32 %v551, %v793
      %v826 = vmul.f32 %v554, %v794
      %v827 = vmul.f32 %v559, %v795
      %v828 = vmul.f32 %v562, %v796
      %v829 = vmul.f32 %v567, %v797
      %v830 = vmul.f32 %v570, %v798
      %v831 = vmul.f32 %v575, %v799
      %v832 = vmul.f32 %v578, %v800
      %v833 = vmul.f32 %v583, %v801
      %v834 = vmul.f32 %v586, %v802
      %v835 = vmul.f32 %v591, %v803
      %v836 = vmul.f32 %v594, %v804
      %v837 = vmul.f32 %v599, %v805
      %v838 = vmul.f32 %v602, %v806
      %v839 = vmul.f32 %v607, %v807
      %v840 = vmul.f32 %v610, %v808
      %v841 = vmul.f32 %v615, %v809
      %v842 = vmul.f32 %v618, %v810
      %v843 = vmul.f32 %v623, %v811
      %v844 = vmul.f32 %v626, %v812
      %v845 = vmul.f32 %v631, %v813
      %v846 = vmul.f32 %v634, %v814
      %v847 = vmul.f32 %v639, %v815
      %v848 = vmul.f32 %v642, %v816
      %v849 = vmul.f32 %v647, %v817
      %v850 = vmul.f32 %v650, %v818
      %v851 = vmul.f32 %v655, %v819
      %v852 = vmul.f32 %v658, %v820
      %v853 = vpack.c.bf16 %v822, %v821
      %v854 = vpack.c.bf16 %v824, %v823
      %v855 = vpack.c.bf16 %v826, %v825
      %v856 = vpack.c.bf16 %v828, %v827
      %v857 = vpack.c.bf16 %v830, %v829
      %v858 = vpack.c.bf16 %v832, %v831
      %v859 = vpack.c.bf16 %v834, %v833
      %v860 = vpack.c.bf16 %v836, %v835
      %v861 = vpack.c.bf16 %v838, %v837
      %v862 = vpack.c.bf16 %v840, %v839
      %v863 = vpack.c.bf16 %v842, %v841
      %v864 = vpack.c.bf16 %v844, %v843
      %v865 = vpack.c.bf16 %v846, %v845
      %v866 = vpack.c.bf16 %v848, %v847
      %v867 = vpack.c.bf16 %v850, %v849
      %v868 = vpack.c.bf16 %v852, %v851
      %v869 = vld [vmem:[%s3] sm:$0xff]
      %v870 = vld [vmem:[%s3 + $0x8] sm:$0xff]
      %v871 = vld [vmem:[%s3 + $0x10] sm:$0xff]
      %v872 = vld [vmem:[%s3 + $0x18] sm:$0xff]
      %v873 = vld [vmem:[%s3 + $0x20] sm:$0xff]
      %v874 = vld [vmem:[%s3 + $0x28] sm:$0xff]
      %v875 = vld [vmem:[%s3 + $0x30] sm:$0xff]
      %v876 = vld [vmem:[%s3 + $0x38] sm:$0xff]
      %v877 = vld [vmem:[%s3 + $0x40] sm:$0xff]
      %v878 = vld [vmem:[%s3 + $0x48] sm:$0xff]
      %v879 = vld [vmem:[%s3 + $0x50] sm:$0xff]
      %v880 = vld [vmem:[%s3 + $0x58] sm:$0xff]
      %v881 = vld [vmem:[%s3 + $0x60] sm:$0xff]
      %v882 = vld [vmem:[%s3 + $0x68] sm:$0xff]
      %v883 = vld [vmem:[%s3 + $0x70] sm:$0xff]
      %v884 = vld [vmem:[%s3 + $0x78] sm:$0xff]
      %v885 = vld [vmem:[%s3 + $0x80] sm:$0xff]
      %v886 = vld [vmem:[%s3 + $0x88] sm:$0xff]
      %v887 = vld [vmem:[%s3 + $0x90] sm:$0xff]
      %v888 = vld [vmem:[%s3 + $0x98] sm:$0xff]
      %v889 = vld [vmem:[%s4] sm:$0xff]
      %v890 = vld [vmem:[%s4 + $0x8] sm:$0x3]
      %v893 = vlaneseq
      %v894 = vshrl.u32 %v893, 7
      %v895 = vsub.s32 0, %v894
      %v896 = vrot.slane %v889, %v895
      %v897 = vlaneseq
      %v898 = vshrl.u32 %v897, 7
      %v899 = vsub.s32 1, %v898
      %v900 = vrot.slane %v889, %v899
      %v901 = vlaneseq
      %v902 = vshrl.u32 %v901, 7
      %v903 = vsub.s32 2, %v902
      %v904 = vrot.slane %v889, %v903
      %v905 = vlaneseq
      %v906 = vshrl.u32 %v905, 7
      %v907 = vsub.s32 3, %v906
      %v908 = vrot.slane %v889, %v907
      %v909 = vlaneseq
      %v910 = vshrl.u32 %v909, 7
      %v911 = vsub.s32 4, %v910
      %v912 = vrot.slane %v889, %v911
      %v913 = vlaneseq
      %v914 = vshrl.u32 %v913, 7
      %v915 = vsub.s32 5, %v914
      %v916 = vrot.slane %v889, %v915
      %v917 = vlaneseq
      %v918 = vshrl.u32 %v917, 7
      %v919 = vsub.s32 6, %v918
      %v920 = vrot.slane %v889, %v919
      %v921 = vlaneseq
      %v922 = vshrl.u32 %v921, 7
      %v923 = vsub.s32 7, %v922
      %v924 = vrot.slane %v889, %v923
      %v925 = vlaneseq
      %v926 = vshrl.u32 %v925, 7
      %v927 = vsub.s32 0, %v926
      %v928 = vrot.slane %v890, %v927
      %v929 = vlaneseq
      %v930 = vshrl.u32 %v929, 7
      %v931 = vsub.s32 1, %v930
      %v932 = vrot.slane %v890, %v931
      %v963 = vunpack.c.l.b16 %v869
      %v964 = vunpack.c.h.b16 %v869
      %v965 = vunpack.c.l.b16 %v870
      %v966 = vunpack.c.h.b16 %v870
      %v967 = vunpack.c.l.b16 %v871
      %v968 = vunpack.c.h.b16 %v871
      %v969 = vunpack.c.l.b16 %v872
      %v970 = vunpack.c.h.b16 %v872
      %v971 = vunpack.c.l.b16 %v873
      %v972 = vunpack.c.h.b16 %v873
      %v973 = vunpack.c.l.b16 %v874
      %v974 = vunpack.c.h.b16 %v874
      %v975 = vunpack.c.l.b16 %v875
      %v976 = vunpack.c.h.b16 %v875
      %v977 = vunpack.c.l.b16 %v876
      %v978 = vunpack.c.h.b16 %v876
      %v979 = vunpack.c.l.b16 %v877
      %v980 = vunpack.c.h.b16 %v877
      %v981 = vunpack.c.l.b16 %v878
      %v982 = vunpack.c.h.b16 %v878
      %v983 = vunpack.c.l.b16 %v879
      %v984 = vunpack.c.h.b16 %v879
      %v985 = vunpack.c.l.b16 %v880
      %v986 = vunpack.c.h.b16 %v880
      %v987 = vunpack.c.l.b16 %v881
      %v988 = vunpack.c.h.b16 %v881
      %v989 = vunpack.c.l.b16 %v882
      %v990 = vunpack.c.h.b16 %v882
      %v991 = vunpack.c.l.b16 %v883
      %v992 = vunpack.c.h.b16 %v883
      %v993 = vunpack.c.l.b16 %v884
      %v994 = vunpack.c.h.b16 %v884
      %v995 = vunpack.c.l.b16 %v885
      %v996 = vunpack.c.h.b16 %v885
      %v997 = vunpack.c.l.b16 %v886
      %v998 = vunpack.c.h.b16 %v886
      %v999 = vunpack.c.l.b16 %v887
      %v1000 = vunpack.c.h.b16 %v887
      %v1001 = vunpack.c.l.b16 %v888
      %v1002 = vunpack.c.h.b16 %v888
      %v1003 = vpack.c.b16 %v973, %v963
      %v1004 = vpack.c.b16 %v974, %v964
      %v1005 = vpack.c.b16 %v975, %v965
      %v1006 = vpack.c.b16 %v976, %v966
      %v1007 = vpack.c.b16 %v977, %v967
      %v1008 = vpack.c.b16 %v978, %v968
      %v1009 = vpack.c.b16 %v979, %v969
      %v1010 = vpack.c.b16 %v980, %v970
      %v1011 = vpack.c.b16 %v981, %v971
      %v1012 = vpack.c.b16 %v982, %v972
      %v1013 = vpack.c.b16 %v993, %v983
      %v1014 = vpack.c.b16 %v994, %v984
      %v1015 = vpack.c.b16 %v995, %v985
      %v1016 = vpack.c.b16 %v996, %v986
      %v1017 = vpack.c.b16 %v997, %v987
      %v1018 = vpack.c.b16 %v998, %v988
      %v1019 = vpack.c.b16 %v999, %v989
      %v1020 = vpack.c.b16 %v1000, %v990
      %v1021 = vpack.c.b16 %v1001, %v991
      %v1022 = vpack.c.b16 %v1002, %v992
      %v1044 = vsel %vm451, %v853, 0
      %v1047 = vsel %vm451, %v854, 0
      %v1050 = vsel %vm451, %v855, 0
      %v1053 = vsel %vm451, %v856, 0
      %v1056 = vsel %vm451, %v857, 0
      %v1059 = vsel %vm451, %v858, 0
      %v1062 = vsel %vm451, %v859, 0
      %v1065 = vsel %vm451, %v860, 0
      %v1068 = vsel %vm451, %v861, 0
      %v1071 = vsel %vm451, %v862, 0
      %v1074 = vsel %vm451, %v863, 0
      %v1077 = vsel %vm451, %v864, 0
      %v1080 = vsel %vm451, %v865, 0
      %v1083 = vsel %vm451, %v866, 0
      %v1086 = vsel %vm451, %v867, 0
      %v1089 = vsel %vm451, %v868, 0
      %1091 = vmatprep.subr.bf16.mxu0 %v1004
      %1092 = vmatpush1.bf16.msra.mxu0 %v1003
      %1093 = vmatprep.subr.bf16.mxu0 %v1014
      %1094 = vmatpush1.bf16.msra.mxu0 %v1013
      %1095 = vmatprep.subr.bf16.mxu0 0
      %1096 = vmatpush1.bf16.msra.mxu0 0
      %1097 = vmatprep.subr.bf16.mxu0 0
      %1098 = vmatpush1.bf16.msra.mxu0 0
      %1099 = vmatprep.subr.bf16.mxu0 0
      %1100 = vmatpush1.bf16.msra.mxu0 0
      %1101 = vmatprep.subr.bf16.mxu0 0
      %1102 = vmatpush1.bf16.msra.mxu0 0
      %1103 = vmatprep.subr.bf16.mxu0 0
      %1104 = vmatpush1.bf16.msra.mxu0 0
      %1105 = vmatprep.subr.bf16.mxu0 0
      %1106 = vmatpush1.bf16.msra.mxu0 0
      %1107 = vmatprep.subr.bf16.mxu0 0
      %1108 = vmatpush1.bf16.msra.mxu0 0
      %1109 = vmatprep.subr.bf16.mxu0 0
      %1110 = vmatpush1.bf16.msra.mxu0 0
      %1111 = vmatprep.subr.bf16.mxu0 0
      %1112 = vmatpush1.bf16.msra.mxu0 0
      %1113 = vmatprep.subr.bf16.mxu0 0
      %1114 = vmatpush1.bf16.msra.mxu0 0
      %1115 = vmatprep.subr.bf16.mxu0 0
      %1116 = vmatpush1.bf16.msra.mxu0 0
      %1117 = vmatprep.subr.bf16.mxu0 0
      %1118 = vmatpush1.bf16.msra.mxu0 0
      %1119 = vmatprep.subr.bf16.mxu0 0
      %1120 = vmatpush1.bf16.msra.mxu0 0
      %1121 = vmatprep.subr.bf16.mxu0 0
      %1122 = vmatpush1.bf16.msra.mxu0 0
      %1123 = vmatprep.mubr.bf16.mxu0 0
      %1124 = vmatmul.mubr.bf16.gmra.mrb[0].mxu0 %v1044
      %v1125 = vpop.f32.mrb[0].mxu0
      %v1126 = vadd.f32 %v896, %v1125
      %v1127 = vpop.f32.mrb[0].mxu0
      %v1128 = vadd.f32 %v900, %v1127
      %v1129 = vpop.f32.mrb[0].mxu0
      %v1130 = vadd.f32 %v896, %v1129
      %v1131 = vpop.f32.mrb[0].mxu0
      %v1132 = vadd.f32 %v900, %v1131
      %1133 = vmatprep.mubr.bf16.mxu0 0
      %1134 = vmatmul.mubr.bf16.gmra.mrb[0].mxu0 %v1047
      %v1135 = vpop.f32.mrb[0].mxu0
      %v1136 = vadd.f32 %v896, %v1135
      %v1137 = vpop.f32.mrb[0].mxu0
      %v1138 = vadd.f32 %v900, %v1137
      %v1139 = vpop.f32.mrb[0].mxu0
      %v1140 = vadd.f32 %v896, %v1139
      %v1141 = vpop.f32.mrb[0].mxu0
      %v1142 = vadd.f32 %v900, %v1141
      %1143 = vmatprep.mubr.bf16.mxu0 0
      %1144 = vmatmul.mubr.bf16.gmra.mrb[0].mxu0 %v1050
      %v1145 = vpop.f32.mrb[0].mxu0
      %v1146 = vadd.f32 %v896, %v1145
      %v1147 = vpop.f32.mrb[0].mxu0
      %v1148 = vadd.f32 %v900, %v1147
      %v1149 = vpop.f32.mrb[0].mxu0
      %v1150 = vadd.f32 %v896, %v1149
      %v1151 = vpop.f32.mrb[0].mxu0
      %v1152 = vadd.f32 %v900, %v1151
      %1153 = vmatprep.mubr.bf16.mxu0 0
      %1154 = vmatmul.mubr.bf16.gmra.mrb[0].mxu0 %v1053
      %v1155 = vpop.f32.mrb[0].mxu0
      %v1156 = vadd.f32 %v896, %v1155
      %v1157 = vpop.f32.mrb[0].mxu0
      %v1158 = vadd.f32 %v900, %v1157
      %v1159 = vpop.f32.mrb[0].mxu0
      %v1160 = vadd.f32 %v896, %v1159
      %v1161 = vpop.f32.mrb[0].mxu0
      %v1162 = vadd.f32 %v900, %v1161
      %1163 = vmatprep.mubr.bf16.mxu0 0
      %1164 = vmatmul.mubr.bf16.gmra.mrb[0].mxu0 %v1056
      %v1165 = vpop.f32.mrb[0].mxu0
      %v1166 = vadd.f32 %v896, %v1165
      %v1167 = vpop.f32.mrb[0].mxu0
      %v1168 = vadd.f32 %v900, %v1167
      %v1169 = vpop.f32.mrb[0].mxu0
      %v1170 = vadd.f32 %v896, %v1169
      %v1171 = vpop.f32.mrb[0].mxu0
      %v1172 = vadd.f32 %v900, %v1171
      %1173 = vmatprep.mubr.bf16.mxu0 0
      %1174 = vmatmul.mubr.bf16.gmra.mrb[0].mxu0 %v1059
      %v1175 = vpop.f32.mrb[0].mxu0
      %v1176 = vadd.f32 %v896, %v1175
      %v1177 = vpop.f32.mrb[0].mxu0
      %v1178 = vadd.f32 %v900, %v1177
      %v1179 = vpop.f32.mrb[0].mxu0
      %v1180 = vadd.f32 %v896, %v1179
      %v1181 = vpop.f32.mrb[0].mxu0
      %v1182 = vadd.f32 %v900, %v1181
      %1183 = vmatprep.mubr.bf16.mxu0 0
      %1184 = vmatmul.mubr.bf16.gmra.mrb[0].mxu0 %v1062
      %v1185 = vpop.f32.mrb[0].mxu0
      %v1186 = vadd.f32 %v896, %v1185
      %v1187 = vpop.f32.mrb[0].mxu0
      %v1188 = vadd.f32 %v900, %v1187
      %v1189 = vpop.f32.mrb[0].mxu0
      %v1190 = vadd.f32 %v896, %v1189
      %v1191 = vpop.f32.mrb[0].mxu0
      %v1192 = vadd.f32 %v900, %v1191
      %1193 = vmatprep.mubr.bf16.mxu0 0
      %1194 = vmatmul.mubr.bf16.gmra.mrb[0].mxu0 %v1065
      %v1195 = vpop.f32.mrb[0].mxu0
      %v1196 = vadd.f32 %v896, %v1195
      %v1197 = vpop.f32.mrb[0].mxu0
      %v1198 = vadd.f32 %v900, %v1197
      %v1199 = vpop.f32.mrb[0].mxu0
      %v1200 = vadd.f32 %v896, %v1199
      %v1201 = vpop.f32.mrb[0].mxu0
      %v1202 = vadd.f32 %v900, %v1201
      %1203 = vmatprep.mubr.bf16.mxu0 0
      %1204 = vmatmul.mubr.bf16.gmra.mrb[0].mxu0 %v1068
      %v1205 = vpop.f32.mrb[0].mxu0
      %v1206 = vadd.f32 %v896, %v1205
      %v1207 = vpop.f32.mrb[0].mxu0
      %v1208 = vadd.f32 %v900, %v1207
      %v1209 = vpop.f32.mrb[0].mxu0
      %v1210 = vadd.f32 %v896, %v1209
      %v1211 = vpop.f32.mrb[0].mxu0
      %v1212 = vadd.f32 %v900, %v1211
      %1213 = vmatprep.mubr.bf16.mxu0 0
      %1214 = vmatmul.mubr.bf16.gmra.mrb[0].mxu0 %v1071
      %v1215 = vpop.f32.mrb[0].mxu0
      %v1216 = vadd.f32 %v896, %v1215
      %v1217 = vpop.f32.mrb[0].mxu0
      %v1218 = vadd.f32 %v900, %v1217
      %v1219 = vpop.f32.mrb[0].mxu0
      %v1220 = vadd.f32 %v896, %v1219
      %v1221 = vpop.f32.mrb[0].mxu0
      %v1222 = vadd.f32 %v900, %v1221
      %1223 = vmatprep.mubr.bf16.mxu0 0
      %1224 = vmatmul.mubr.bf16.gmra.mrb[0].mxu0 %v1074
      %v1225 = vpop.f32.mrb[0].mxu0
      %v1226 = vadd.f32 %v896, %v1225
      %v1227 = vpop.f32.mrb[0].mxu0
      %v1228 = vadd.f32 %v900, %v1227
      %v1229 = vpop.f32.mrb[0].mxu0
      %v1230 = vadd.f32 %v896, %v1229
      %v1231 = vpop.f32.mrb[0].mxu0
      %v1232 = vadd.f32 %v900, %v1231
      %1233 = vmatprep.mubr.bf16.mxu0 0
      %1234 = vmatmul.mubr.bf16.gmra.mrb[0].mxu0 %v1077
      %v1235 = vpop.f32.mrb[0].mxu0
      %v1236 = vadd.f32 %v896, %v1235
      %v1237 = vpop.f32.mrb[0].mxu0
      %v1238 = vadd.f32 %v900, %v1237
      %v1239 = vpop.f32.mrb[0].mxu0
      %v1240 = vadd.f32 %v896, %v1239
      %v1241 = vpop.f32.mrb[0].mxu0
      %v1242 = vadd.f32 %v900, %v1241
      %1243 = vmatprep.mubr.bf16.mxu0 0
      %1244 = vmatmul.mubr.bf16.gmra.mrb[0].mxu0 %v1080
      %v1245 = vpop.f32.mrb[0].mxu0
      %v1246 = vadd.f32 %v896, %v1245
      %v1247 = vpop.f32.mrb[0].mxu0
      %v1248 = vadd.f32 %v900, %v1247
      %v1249 = vpop.f32.mrb[0].mxu0
      %v1250 = vadd.f32 %v896, %v1249
      %v1251 = vpop.f32.mrb[0].mxu0
      %v1252 = vadd.f32 %v900, %v1251
      %1253 = vmatprep.mubr.bf16.mxu0 0
      %1254 = vmatmul.mubr.bf16.gmra.mrb[0].mxu0 %v1083
      %v1255 = vpop.f32.mrb[0].mxu0
      %v1256 = vadd.f32 %v896, %v1255
      %v1257 = vpop.f32.mrb[0].mxu0
      %v1258 = vadd.f32 %v900, %v1257
      %v1259 = vpop.f32.mrb[0].mxu0
      %v1260 = vadd.f32 %v896, %v1259
      %v1261 = vpop.f32.mrb[0].mxu0
      %v1262 = vadd.f32 %v900, %v1261
      %1263 = vmatprep.mubr.bf16.mxu0 0
      %1264 = vmatmul.mubr.bf16.gmra.mrb[0].mxu0 %v1086
      %v1265 = vpop.f32.mrb[0].mxu0
      %v1266 = vadd.f32 %v896, %v1265
      %v1267 = vpop.f32.mrb[0].mxu0
      %v1268 = vadd.f32 %v900, %v1267
      %v1269 = vpop.f32.mrb[0].mxu0
      %v1270 = vadd.f32 %v896, %v1269
      %v1271 = vpop.f32.mrb[0].mxu0
      %v1272 = vadd.f32 %v900, %v1271
      %1273 = vmatprep.mubr.bf16.mxu0 0
      %1274 = vmatmul.mubr.bf16.gmra.mrb[0].mxu0 %v1089
      %v1275 = vpop.f32.mrb[0].mxu0
      %v1276 = vadd.f32 %v896, %v1275
      %v1277 = vpop.f32.mrb[0].mxu0
      %v1278 = vadd.f32 %v900, %v1277
      %v1279 = vpop.f32.mrb[0].mxu0
      %v1280 = vadd.f32 %v896, %v1279
      %v1281 = vpop.f32.mrb[0].mxu0
      %v1282 = vadd.f32 %v900, %v1281
      %1283 = vdwg.mxu0
      %1284 = vmatprep.subr.bf16.mxu0 %v1006
      %1285 = vmatpush1.bf16.msra.mxu0 %v1005
      %1286 = vmatprep.subr.bf16.mxu0 %v1016
      %1287 = vmatpush1.bf16.msra.mxu0 %v1015
      %1288 = vmatprep.subr.bf16.mxu0 0
      %1289 = vmatpush1.bf16.msra.mxu0 0
      %1290 = vmatprep.subr.bf16.mxu0 0
      %1291 = vmatpush1.bf16.msra.mxu0 0
      %1292 = vmatprep.subr.bf16.mxu0 0
      %1293 = vmatpush1.bf16.msra.mxu0 0
      %1294 = vmatprep.subr.bf16.mxu0 0
      %1295 = vmatpush1.bf16.msra.mxu0 0
      %1296 = vmatprep.subr.bf16.mxu0 0
      %1297 = vmatpush1.bf16.msra.mxu0 0
      %1298 = vmatprep.subr.bf16.mxu0 0
      %1299 = vmatpush1.bf16.msra.mxu0 0
      %1300 = vmatprep.subr.bf16.mxu0 0
      %1301 = vmatpush1.bf16.msra.mxu0 0
      %1302 = vmatprep.subr.bf16.mxu0 0
      %1303 = vmatpush1.bf16.msra.mxu0 0
      %1304 = vmatprep.subr.bf16.mxu0 0
      %1305 = vmatpush1.bf16.msra.mxu0 0
      %1306 = vmatprep.subr.bf16.mxu0 0
      %1307 = vmatpush1.bf16.msra.mxu0 0
      %1308 = vmatprep.subr.bf16.mxu0 0
      %1309 = vmatpush1.bf16.msra.mxu0 0
      %1310 = vmatprep.subr.bf16.mxu0 0
      %1311 = vmatpush1.bf16.msra.mxu0 0
      %1312 = vmatprep.subr.bf16.mxu0 0
      %1313 = vmatpush1.bf16.msra.mxu0 0
      %1314 = vmatprep.subr.bf16.mxu0 0
      %1315 = vmatpush1.bf16.msra.mxu0 0
      %1316 = vmatprep.mubr.bf16.mxu0 0
      %1317 = vmatmul.mubr.bf16.gmra.mrb[0].mxu0 %v1044
      %v1318 = vpop.f32.mrb[0].mxu0
      %v1319 = vadd.f32 %v904, %v1318
      %v1320 = vpop.f32.mrb[0].mxu0
      %v1321 = vadd.f32 %v908, %v1320
      %v1322 = vpop.f32.mrb[0].mxu0
      %v1323 = vadd.f32 %v904, %v1322
      %v1324 = vpop.f32.mrb[0].mxu0
      %v1325 = vadd.f32 %v908, %v1324
      %1326 = vmatprep.mubr.bf16.mxu0 0
      %1327 = vmatmul.mubr.bf16.gmra.mrb[0].mxu0 %v1047
      %v1328 = vpop.f32.mrb[0].mxu0
      %v1329 = vadd.f32 %v904, %v1328
      %v1330 = vpop.f32.mrb[0].mxu0
      %v1331 = vadd.f32 %v908, %v1330
      %v1332 = vpop.f32.mrb[0].mxu0
      %v1333 = vadd.f32 %v904, %v1332
      %v1334 = vpop.f32.mrb[0].mxu0
      %v1335 = vadd.f32 %v908, %v1334
      %1336 = vmatprep.mubr.bf16.mxu0 0
      %1337 = vmatmul.mubr.bf16.gmra.mrb[0].mxu0 %v1050
      %v1338 = vpop.f32.mrb[0].mxu0
      %v1339 = vadd.f32 %v904, %v1338
      %v1340 = vpop.f32.mrb[0].mxu0
      %v1341 = vadd.f32 %v908, %v1340
      %v1342 = vpop.f32.mrb[0].mxu0
      %v1343 = vadd.f32 %v904, %v1342
      %v1344 = vpop.f32.mrb[0].mxu0
      %v1345 = vadd.f32 %v908, %v1344
      %1346 = vmatprep.mubr.bf16.mxu0 0
      %1347 = vmatmul.mubr.bf16.gmra.mrb[0].mxu0 %v1053
      %v1348 = vpop.f32.mrb[0].mxu0
      %v1349 = vadd.f32 %v904, %v1348
      %v1350 = vpop.f32.mrb[0].mxu0
      %v1351 = vadd.f32 %v908, %v1350
      %v1352 = vpop.f32.mrb[0].mxu0
      %v1353 = vadd.f32 %v904, %v1352
      %v1354 = vpop.f32.mrb[0].mxu0
      %v1355 = vadd.f32 %v908, %v1354
      %1356 = vmatprep.mubr.bf16.mxu0 0
      %1357 = vmatmul.mubr.bf16.gmra.mrb[0].mxu0 %v1056
      %v1358 = vpop.f32.mrb[0].mxu0
      %v1359 = vadd.f32 %v904, %v1358
      %v1360 = vpop.f32.mrb[0].mxu0
      %v1361 = vadd.f32 %v908, %v1360
      %v1362 = vpop.f32.mrb[0].mxu0
      %v1363 = vadd.f32 %v904, %v1362
      %v1364 = vpop.f32.mrb[0].mxu0
      %v1365 = vadd.f32 %v908, %v1364
      %1366 = vmatprep.mubr.bf16.mxu0 0
      %1367 = vmatmul.mubr.bf16.gmra.mrb[0].mxu0 %v1059
      %v1368 = vpop.f32.mrb[0].mxu0
      %v1369 = vadd.f32 %v904, %v1368
      %v1370 = vpop.f32.mrb[0].mxu0
      %v1371 = vadd.f32 %v908, %v1370
      %v1372 = vpop.f32.mrb[0].mxu0
      %v1373 = vadd.f32 %v904, %v1372
      %v1374 = vpop.f32.mrb[0].mxu0
      %v1375 = vadd.f32 %v908, %v1374
      %1376 = vmatprep.mubr.bf16.mxu0 0
      %1377 = vmatmul.mubr.bf16.gmra.mrb[0].mxu0 %v1062
      %v1378 = vpop.f32.mrb[0].mxu0
      %v1379 = vadd.f32 %v904, %v1378
      %v1380 = vpop.f32.mrb[0].mxu0
      %v1381 = vadd.f32 %v908, %v1380
      %v1382 = vpop.f32.mrb[0].mxu0
      %v1383 = vadd.f32 %v904, %v1382
      %v1384 = vpop.f32.mrb[0].mxu0
      %v1385 = vadd.f32 %v908, %v1384
      %1386 = vmatprep.mubr.bf16.mxu0 0
      %1387 = vmatmul.mubr.bf16.gmra.mrb[0].mxu0 %v1065
      %v1388 = vpop.f32.mrb[0].mxu0
      %v1389 = vadd.f32 %v904, %v1388
      %v1390 = vpop.f32.mrb[0].mxu0
      %v1391 = vadd.f32 %v908, %v1390
      %v1392 = vpop.f32.mrb[0].mxu0
      %v1393 = vadd.f32 %v904, %v1392
      %v1394 = vpop.f32.mrb[0].mxu0
      %v1395 = vadd.f32 %v908, %v1394
      %1396 = vmatprep.mubr.bf16.mxu0 0
      %1397 = vmatmul.mubr.bf16.gmra.mrb[0].mxu0 %v1068
      %v1398 = vpop.f32.mrb[0].mxu0
      %v1399 = vadd.f32 %v904, %v1398
      %v1400 = vpop.f32.mrb[0].mxu0
      %v1401 = vadd.f32 %v908, %v1400
      %v1402 = vpop.f32.mrb[0].mxu0
      %v1403 = vadd.f32 %v904, %v1402
      %v1404 = vpop.f32.mrb[0].mxu0
      %v1405 = vadd.f32 %v908, %v1404
      %1406 = vmatprep.mubr.bf16.mxu0 0
      %1407 = vmatmul.mubr.bf16.gmra.mrb[0].mxu0 %v1071
      %v1408 = vpop.f32.mrb[0].mxu0
      %v1409 = vadd.f32 %v904, %v1408
      %v1410 = vpop.f32.mrb[0].mxu0
      %v1411 = vadd.f32 %v908, %v1410
      %v1412 = vpop.f32.mrb[0].mxu0
      %v1413 = vadd.f32 %v904, %v1412
      %v1414 = vpop.f32.mrb[0].mxu0
      %v1415 = vadd.f32 %v908, %v1414
      %1416 = vmatprep.mubr.bf16.mxu0 0
      %1417 = vmatmul.mubr.bf16.gmra.mrb[0].mxu0 %v1074
      %v1418 = vpop.f32.mrb[0].mxu0
      %v1419 = vadd.f32 %v904, %v1418
      %v1420 = vpop.f32.mrb[0].mxu0
      %v1421 = vadd.f32 %v908, %v1420
      %v1422 = vpop.f32.mrb[0].mxu0
      %v1423 = vadd.f32 %v904, %v1422
      %v1424 = vpop.f32.mrb[0].mxu0
      %v1425 = vadd.f32 %v908, %v1424
      %1426 = vmatprep.mubr.bf16.mxu0 0
      %1427 = vmatmul.mubr.bf16.gmra.mrb[0].mxu0 %v1077
      %v1428 = vpop.f32.mrb[0].mxu0
      %v1429 = vadd.f32 %v904, %v1428
      %v1430 = vpop.f32.mrb[0].mxu0
      %v1431 = vadd.f32 %v908, %v1430
      %v1432 = vpop.f32.mrb[0].mxu0
      %v1433 = vadd.f32 %v904, %v1432
      %v1434 = vpop.f32.mrb[0].mxu0
      %v1435 = vadd.f32 %v908, %v1434
      %1436 = vmatprep.mubr.bf16.mxu0 0
      %1437 = vmatmul.mubr.bf16.gmra.mrb[0].mxu0 %v1080
      %v1438 = vpop.f32.mrb[0].mxu0
      %v1439 = vadd.f32 %v904, %v1438
      %v1440 = vpop.f32.mrb[0].mxu0
      %v1441 = vadd.f32 %v908, %v1440
      %v1442 = vpop.f32.mrb[0].mxu0
      %v1443 = vadd.f32 %v904, %v1442
      %v1444 = vpop.f32.mrb[0].mxu0
      %v1445 = vadd.f32 %v908, %v1444
      %1446 = vmatprep.mubr.bf16.mxu0 0
      %1447 = vmatmul.mubr.bf16.gmra.mrb[0].mxu0 %v1083
      %v1448 = vpop.f32.mrb[0].mxu0
      %v1449 = vadd.f32 %v904, %v1448
      %v1450 = vpop.f32.mrb[0].mxu0
      %v1451 = vadd.f32 %v908, %v1450
      %v1452 = vpop.f32.mrb[0].mxu0
      %v1453 = vadd.f32 %v904, %v1452
      %v1454 = vpop.f32.mrb[0].mxu0
      %v1455 = vadd.f32 %v908, %v1454
      %1456 = vmatprep.mubr.bf16.mxu0 0
      %1457 = vmatmul.mubr.bf16.gmra.mrb[0].mxu0 %v1086
      %v1458 = vpop.f32.mrb[0].mxu0
      %v1459 = vadd.f32 %v904, %v1458
      %v1460 = vpop.f32.mrb[0].mxu0
      %v1461 = vadd.f32 %v908, %v1460
      %v1462 = vpop.f32.mrb[0].mxu0
      %v1463 = vadd.f32 %v904, %v1462
      %v1464 = vpop.f32.mrb[0].mxu0
      %v1465 = vadd.f32 %v908, %v1464
      %1466 = vmatprep.mubr.bf16.mxu0 0
      %1467 = vmatmul.mubr.bf16.gmra.mrb[0].mxu0 %v1089
      %v1468 = vpop.f32.mrb[0].mxu0
      %v1469 = vadd.f32 %v904, %v1468
      %v1470 = vpop.f32.mrb[0].mxu0
      %v1471 = vadd.f32 %v908, %v1470
      %v1472 = vpop.f32.mrb[0].mxu0
      %v1473 = vadd.f32 %v904, %v1472
      %v1474 = vpop.f32.mrb[0].mxu0
      %v1475 = vadd.f32 %v908, %v1474
      %1476 = vdwg.mxu0
      %1477 = vmatprep.subr.bf16.mxu0 %v1008
      %1478 = vmatpush1.bf16.msra.mxu0 %v1007
      %1479 = vmatprep.subr.bf16.mxu0 %v1018
      %1480 = vmatpush1.bf16.msra.mxu0 %v1017
      %1481 = vmatprep.subr.bf16.mxu0 0
      %1482 = vmatpush1.bf16.msra.mxu0 0
      %1483 = vmatprep.subr.bf16.mxu0 0
      %1484 = vmatpush1.bf16.msra.mxu0 0
      %1485 = vmatprep.subr.bf16.mxu0 0
      %1486 = vmatpush1.bf16.msra.mxu0 0
      %1487 = vmatprep.subr.bf16.mxu0 0
      %1488 = vmatpush1.bf16.msra.mxu0 0
      %1489 = vmatprep.subr.bf16.mxu0 0
      %1490 = vmatpush1.bf16.msra.mxu0 0
      %1491 = vmatprep.subr.bf16.mxu0 0
      %1492 = vmatpush1.bf16.msra.mxu0 0
      %1493 = vmatprep.subr.bf16.mxu0 0
      %1494 = vmatpush1.bf16.msra.mxu0 0
      %1495 = vmatprep.subr.bf16.mxu0 0
      %1496 = vmatpush1.bf16.msra.mxu0 0
      %1497 = vmatprep.subr.bf16.mxu0 0
      %1498 = vmatpush1.bf16.msra.mxu0 0
      %1499 = vmatprep.subr.bf16.mxu0 0
      %1500 = vmatpush1.bf16.msra.mxu0 0
      %1501 = vmatprep.subr.bf16.mxu0 0
      %1502 = vmatpush1.bf16.msra.mxu0 0
      %1503 = vmatprep.subr.bf16.mxu0 0
      %1504 = vmatpush1.bf16.msra.mxu0 0
      %1505 = vmatprep.subr.bf16.mxu0 0
      %1506 = vmatpush1.bf16.msra.mxu0 0
      %1507 = vmatprep.subr.bf16.mxu0 0
      %1508 = vmatpush1.bf16.msra.mxu0 0
      %1509 = vmatprep.mubr.bf16.mxu0 0
      %1510 = vmatmul.mubr.bf16.gmra.mrb[0].mxu0 %v1044
      %v1511 = vpop.f32.mrb[0].mxu0
      %v1512 = vadd.f32 %v912, %v1511
      %v1513 = vpop.f32.mrb[0].mxu0
      %v1514 = vadd.f32 %v916, %v1513
      %v1515 = vpop.f32.mrb[0].mxu0
      %v1516 = vadd.f32 %v912, %v1515
      %v1517 = vpop.f32.mrb[0].mxu0
      %v1518 = vadd.f32 %v916, %v1517
      %1519 = vmatprep.mubr.bf16.mxu0 0
      %1520 = vmatmul.mubr.bf16.gmra.mrb[0].mxu0 %v1047
      %v1521 = vpop.f32.mrb[0].mxu0
      %v1522 = vadd.f32 %v912, %v1521
      %v1523 = vpop.f32.mrb[0].mxu0
      %v1524 = vadd.f32 %v916, %v1523
      %v1525 = vpop.f32.mrb[0].mxu0
      %v1526 = vadd.f32 %v912, %v1525
      %v1527 = vpop.f32.mrb[0].mxu0
      %v1528 = vadd.f32 %v916, %v1527
      %1529 = vmatprep.mubr.bf16.mxu0 0
      %1530 = vmatmul.mubr.bf16.gmra.mrb[0].mxu0 %v1050
      %v1531 = vpop.f32.mrb[0].mxu0
      %v1532 = vadd.f32 %v912, %v1531
      %v1533 = vpop.f32.mrb[0].mxu0
      %v1534 = vadd.f32 %v916, %v1533
      %v1535 = vpop.f32.mrb[0].mxu0
      %v1536 = vadd.f32 %v912, %v1535
      %v1537 = vpop.f32.mrb[0].mxu0
      %v1538 = vadd.f32 %v916, %v1537
      %1539 = vmatprep.mubr.bf16.mxu0 0
      %1540 = vmatmul.mubr.bf16.gmra.mrb[0].mxu0 %v1053
      %v1541 = vpop.f32.mrb[0].mxu0
      %v1542 = vadd.f32 %v912, %v1541
      %v1543 = vpop.f32.mrb[0].mxu0
      %v1544 = vadd.f32 %v916, %v1543
      %v1545 = vpop.f32.mrb[0].mxu0
      %v1546 = vadd.f32 %v912, %v1545
      %v1547 = vpop.f32.mrb[0].mxu0
      %v1548 = vadd.f32 %v916, %v1547
      %1549 = vmatprep.mubr.bf16.mxu0 0
      %1550 = vmatmul.mubr.bf16.gmra.mrb[0].mxu0 %v1056
      %v1551 = vpop.f32.mrb[0].mxu0
      %v1552 = vadd.f32 %v912, %v1551
      %v1553 = vpop.f32.mrb[0].mxu0
      %v1554 = vadd.f32 %v916, %v1553
      %v1555 = vpop.f32.mrb[0].mxu0
      %v1556 = vadd.f32 %v912, %v1555
      %v1557 = vpop.f32.mrb[0].mxu0
      %v1558 = vadd.f32 %v916, %v1557
      %1559 = vmatprep.mubr.bf16.mxu0 0
      %1560 = vmatmul.mubr.bf16.gmra.mrb[0].mxu0 %v1059
      %v1561 = vpop.f32.mrb[0].mxu0
      %v1562 = vadd.f32 %v912, %v1561
      %v1563 = vpop.f32.mrb[0].mxu0
      %v1564 = vadd.f32 %v916, %v1563
      %v1565 = vpop.f32.mrb[0].mxu0
      %v1566 = vadd.f32 %v912, %v1565
      %v1567 = vpop.f32.mrb[0].mxu0
      %v1568 = vadd.f32 %v916, %v1567
      %1569 = vmatprep.mubr.bf16.mxu0 0
      %1570 = vmatmul.mubr.bf16.gmra.mrb[0].mxu0 %v1062
      %v1571 = vpop.f32.mrb[0].mxu0
      %v1572 = vadd.f32 %v912, %v1571
      %v1573 = vpop.f32.mrb[0].mxu0
      %v1574 = vadd.f32 %v916, %v1573
      %v1575 = vpop.f32.mrb[0].mxu0
      %v1576 = vadd.f32 %v912, %v1575
      %v1577 = vpop.f32.mrb[0].mxu0
      %v1578 = vadd.f32 %v916, %v1577
      %1579 = vmatprep.mubr.bf16.mxu0 0
      %1580 = vmatmul.mubr.bf16.gmra.mrb[0].mxu0 %v1065
      %v1581 = vpop.f32.mrb[0].mxu0
      %v1582 = vadd.f32 %v912, %v1581
      %v1583 = vpop.f32.mrb[0].mxu0
      %v1584 = vadd.f32 %v916, %v1583
      %v1585 = vpop.f32.mrb[0].mxu0
      %v1586 = vadd.f32 %v912, %v1585
      %v1587 = vpop.f32.mrb[0].mxu0
      %v1588 = vadd.f32 %v916, %v1587
      %1589 = vmatprep.mubr.bf16.mxu0 0
      %1590 = vmatmul.mubr.bf16.gmra.mrb[0].mxu0 %v1068
      %v1591 = vpop.f32.mrb[0].mxu0
      %v1592 = vadd.f32 %v912, %v1591
      %v1593 = vpop.f32.mrb[0].mxu0
      %v1594 = vadd.f32 %v916, %v1593
      %v1595 = vpop.f32.mrb[0].mxu0
      %v1596 = vadd.f32 %v912, %v1595
      %v1597 = vpop.f32.mrb[0].mxu0
      %v1598 = vadd.f32 %v916, %v1597
      %1599 = vmatprep.mubr.bf16.mxu0 0
      %1600 = vmatmul.mubr.bf16.gmra.mrb[0].mxu0 %v1071
      %v1601 = vpop.f32.mrb[0].mxu0
      %v1602 = vadd.f32 %v912, %v1601
      %v1603 = vpop.f32.mrb[0].mxu0
      %v1604 = vadd.f32 %v916, %v1603
      %v1605 = vpop.f32.mrb[0].mxu0
      %v1606 = vadd.f32 %v912, %v1605
      %v1607 = vpop.f32.mrb[0].mxu0
      %v1608 = vadd.f32 %v916, %v1607
      %1609 = vmatprep.mubr.bf16.mxu0 0
      %1610 = vmatmul.mubr.bf16.gmra.mrb[0].mxu0 %v1074
      %v1611 = vpop.f32.mrb[0].mxu0
      %v1612 = vadd.f32 %v912, %v1611
      %v1613 = vpop.f32.mrb[0].mxu0
      %v1614 = vadd.f32 %v916, %v1613
      %v1615 = vpop.f32.mrb[0].mxu0
      %v1616 = vadd.f32 %v912, %v1615
      %v1617 = vpop.f32.mrb[0].mxu0
      %v1618 = vadd.f32 %v916, %v1617
      %1619 = vmatprep.mubr.bf16.mxu0 0
      %1620 = vmatmul.mubr.bf16.gmra.mrb[0].mxu0 %v1077
      %v1621 = vpop.f32.mrb[0].mxu0
      %v1622 = vadd.f32 %v912, %v1621
      %v1623 = vpop.f32.mrb[0].mxu0
      %v1624 = vadd.f32 %v916, %v1623
      %v1625 = vpop.f32.mrb[0].mxu0
      %v1626 = vadd.f32 %v912, %v1625
      %v1627 = vpop.f32.mrb[0].mxu0
      %v1628 = vadd.f32 %v916, %v1627
      %1629 = vmatprep.mubr.bf16.mxu0 0
      %1630 = vmatmul.mubr.bf16.gmra.mrb[0].mxu0 %v1080
      %v1631 = vpop.f32.mrb[0].mxu0
      %v1632 = vadd.f32 %v912, %v1631
      %v1633 = vpop.f32.mrb[0].mxu0
      %v1634 = vadd.f32 %v916, %v1633
      %v1635 = vpop.f32.mrb[0].mxu0
      %v1636 = vadd.f32 %v912, %v1635
      %v1637 = vpop.f32.mrb[0].mxu0
      %v1638 = vadd.f32 %v916, %v1637
      %1639 = vmatprep.mubr.bf16.mxu0 0
      %1640 = vmatmul.mubr.bf16.gmra.mrb[0].mxu0 %v1083
      %v1641 = vpop.f32.mrb[0].mxu0
      %v1642 = vadd.f32 %v912, %v1641
      %v1643 = vpop.f32.mrb[0].mxu0
      %v1644 = vadd.f32 %v916, %v1643
      %v1645 = vpop.f32.mrb[0].mxu0
      %v1646 = vadd.f32 %v912, %v1645
      %v1647 = vpop.f32.mrb[0].mxu0
      %v1648 = vadd.f32 %v916, %v1647
      %1649 = vmatprep.mubr.bf16.mxu0 0
      %1650 = vmatmul.mubr.bf16.gmra.mrb[0].mxu0 %v1086
      %v1651 = vpop.f32.mrb[0].mxu0
      %v1652 = vadd.f32 %v912, %v1651
      %v1653 = vpop.f32.mrb[0].mxu0
      %v1654 = vadd.f32 %v916, %v1653
      %v1655 = vpop.f32.mrb[0].mxu0
      %v1656 = vadd.f32 %v912, %v1655
      %v1657 = vpop.f32.mrb[0].mxu0
      %v1658 = vadd.f32 %v916, %v1657
      %1659 = vmatprep.mubr.bf16.mxu0 0
      %1660 = vmatmul.mubr.bf16.gmra.mrb[0].mxu0 %v1089
      %v1661 = vpop.f32.mrb[0].mxu0
      %v1662 = vadd.f32 %v912, %v1661
      %v1663 = vpop.f32.mrb[0].mxu0
      %v1664 = vadd.f32 %v916, %v1663
      %v1665 = vpop.f32.mrb[0].mxu0
      %v1666 = vadd.f32 %v912, %v1665
      %v1667 = vpop.f32.mrb[0].mxu0
      %v1668 = vadd.f32 %v916, %v1667
      %1669 = vdwg.mxu0
      %1670 = vmatprep.subr.bf16.mxu0 %v1010
      %1671 = vmatpush1.bf16.msra.mxu0 %v1009
      %1672 = vmatprep.subr.bf16.mxu0 %v1020
      %1673 = vmatpush1.bf16.msra.mxu0 %v1019
      %1674 = vmatprep.subr.bf16.mxu0 0
      %1675 = vmatpush1.bf16.msra.mxu0 0
      %1676 = vmatprep.subr.bf16.mxu0 0
      %1677 = vmatpush1.bf16.msra.mxu0 0
      %1678 = vmatprep.subr.bf16.mxu0 0
      %1679 = vmatpush1.bf16.msra.mxu0 0
      %1680 = vmatprep.subr.bf16.mxu0 0
      %1681 = vmatpush1.bf16.msra.mxu0 0
      %1682 = vmatprep.subr.bf16.mxu0 0
      %1683 = vmatpush1.bf16.msra.mxu0 0
      %1684 = vmatprep.subr.bf16.mxu0 0
      %1685 = vmatpush1.bf16.msra.mxu0 0
      %1686 = vmatprep.subr.bf16.mxu0 0
      %1687 = vmatpush1.bf16.msra.mxu0 0
      %1688 = vmatprep.subr.bf16.mxu0 0
      %1689 = vmatpush1.bf16.msra.mxu0 0
      %1690 = vmatprep.subr.bf16.mxu0 0
      %1691 = vmatpush1.bf16.msra.mxu0 0
      %1692 = vmatprep.subr.bf16.mxu0 0
      %1693 = vmatpush1.bf16.msra.mxu0 0
      %1694 = vmatprep.subr.bf16.mxu0 0
      %1695 = vmatpush1.bf16.msra.mxu0 0
      %1696 = vmatprep.subr.bf16.mxu0 0
      %1697 = vmatpush1.bf16.msra.mxu0 0
      %1698 = vmatprep.subr.bf16.mxu0 0
      %1699 = vmatpush1.bf16.msra.mxu0 0
      %1700 = vmatprep.subr.bf16.mxu0 0
      %1701 = vmatpush1.bf16.msra.mxu0 0
      %1702 = vmatprep.mubr.bf16.mxu0 0
      %1703 = vmatmul.mubr.bf16.gmra.mrb[0].mxu0 %v1044
      %v1704 = vpop.f32.mrb[0].mxu0
      %v1705 = vadd.f32 %v920, %v1704
      %v1706 = vpop.f32.mrb[0].mxu0
      %v1707 = vadd.f32 %v924, %v1706
      %v1708 = vpop.f32.mrb[0].mxu0
      %v1709 = vadd.f32 %v920, %v1708
      %v1710 = vpop.f32.mrb[0].mxu0
      %v1711 = vadd.f32 %v924, %v1710
      %1712 = vmatprep.mubr.bf16.mxu0 0
      %1713 = vmatmul.mubr.bf16.gmra.mrb[0].mxu0 %v1047
      %v1714 = vpop.f32.mrb[0].mxu0
      %v1715 = vadd.f32 %v920, %v1714
      %v1716 = vpop.f32.mrb[0].mxu0
      %v1717 = vadd.f32 %v924, %v1716
      %v1718 = vpop.f32.mrb[0].mxu0
      %v1719 = vadd.f32 %v920, %v1718
      %v1720 = vpop.f32.mrb[0].mxu0
      %v1721 = vadd.f32 %v924, %v1720
      %1722 = vmatprep.mubr.bf16.mxu0 0
      %1723 = vmatmul.mubr.bf16.gmra.mrb[0].mxu0 %v1050
      %v1724 = vpop.f32.mrb[0].mxu0
      %v1725 = vadd.f32 %v920, %v1724
      %v1726 = vpop.f32.mrb[0].mxu0
      %v1727 = vadd.f32 %v924, %v1726
      %v1728 = vpop.f32.mrb[0].mxu0
      %v1729 = vadd.f32 %v920, %v1728
      %v1730 = vpop.f32.mrb[0].mxu0
      %v1731 = vadd.f32 %v924, %v1730
      %1732 = vmatprep.mubr.bf16.mxu0 0
      %1733 = vmatmul.mubr.bf16.gmra.mrb[0].mxu0 %v1053
      %v1734 = vpop.f32.mrb[0].mxu0
      %v1735 = vadd.f32 %v920, %v1734
      %v1736 = vpop.f32.mrb[0].mxu0
      %v1737 = vadd.f32 %v924, %v1736
      %v1738 = vpop.f32.mrb[0].mxu0
      %v1739 = vadd.f32 %v920, %v1738
      %v1740 = vpop.f32.mrb[0].mxu0
      %v1741 = vadd.f32 %v924, %v1740
      %1742 = vmatprep.mubr.bf16.mxu0 0
      %1743 = vmatmul.mubr.bf16.gmra.mrb[0].mxu0 %v1056
      %v1744 = vpop.f32.mrb[0].mxu0
      %v1745 = vadd.f32 %v920, %v1744
      %v1746 = vpop.f32.mrb[0].mxu0
      %v1747 = vadd.f32 %v924, %v1746
      %v1748 = vpop.f32.mrb[0].mxu0
      %v1749 = vadd.f32 %v920, %v1748
      %v1750 = vpop.f32.mrb[0].mxu0
      %v1751 = vadd.f32 %v924, %v1750
      %1752 = vmatprep.mubr.bf16.mxu0 0
      %1753 = vmatmul.mubr.bf16.gmra.mrb[0].mxu0 %v1059
      %v1754 = vpop.f32.mrb[0].mxu0
      %v1755 = vadd.f32 %v920, %v1754
      %v1756 = vpop.f32.mrb[0].mxu0
      %v1757 = vadd.f32 %v924, %v1756
      %v1758 = vpop.f32.mrb[0].mxu0
      %v1759 = vadd.f32 %v920, %v1758
      %v1760 = vpop.f32.mrb[0].mxu0
      %v1761 = vadd.f32 %v924, %v1760
      %1762 = vmatprep.mubr.bf16.mxu0 0
      %1763 = vmatmul.mubr.bf16.gmra.mrb[0].mxu0 %v1062
      %v1764 = vpop.f32.mrb[0].mxu0
      %v1765 = vadd.f32 %v920, %v1764
      %v1766 = vpop.f32.mrb[0].mxu0
      %v1767 = vadd.f32 %v924, %v1766
      %v1768 = vpop.f32.mrb[0].mxu0
      %v1769 = vadd.f32 %v920, %v1768
      %v1770 = vpop.f32.mrb[0].mxu0
      %v1771 = vadd.f32 %v924, %v1770
      %1772 = vmatprep.mubr.bf16.mxu0 0
      %1773 = vmatmul.mubr.bf16.gmra.mrb[0].mxu0 %v1065
      %v1774 = vpop.f32.mrb[0].mxu0
      %v1775 = vadd.f32 %v920, %v1774
      %v1776 = vpop.f32.mrb[0].mxu0
      %v1777 = vadd.f32 %v924, %v1776
      %v1778 = vpop.f32.mrb[0].mxu0
      %v1779 = vadd.f32 %v920, %v1778
      %v1780 = vpop.f32.mrb[0].mxu0
      %v1781 = vadd.f32 %v924, %v1780
      %1782 = vmatprep.mubr.bf16.mxu0 0
      %1783 = vmatmul.mubr.bf16.gmra.mrb[0].mxu0 %v1068
      %v1784 = vpop.f32.mrb[0].mxu0
      %v1785 = vadd.f32 %v920, %v1784
      %v1786 = vpop.f32.mrb[0].mxu0
      %v1787 = vadd.f32 %v924, %v1786
      %v1788 = vpop.f32.mrb[0].mxu0
      %v1789 = vadd.f32 %v920, %v1788
      %v1790 = vpop.f32.mrb[0].mxu0
      %v1791 = vadd.f32 %v924, %v1790
      %1792 = vmatprep.mubr.bf16.mxu0 0
      %1793 = vmatmul.mubr.bf16.gmra.mrb[0].mxu0 %v1071
      %v1794 = vpop.f32.mrb[0].mxu0
      %v1795 = vadd.f32 %v920, %v1794
      %v1796 = vpop.f32.mrb[0].mxu0
      %v1797 = vadd.f32 %v924, %v1796
      %v1798 = vpop.f32.mrb[0].mxu0
      %v1799 = vadd.f32 %v920, %v1798
      %v1800 = vpop.f32.mrb[0].mxu0
      %v1801 = vadd.f32 %v924, %v1800
      %1802 = vmatprep.mubr.bf16.mxu0 0
      %1803 = vmatmul.mubr.bf16.gmra.mrb[0].mxu0 %v1074
      %v1804 = vpop.f32.mrb[0].mxu0
      %v1805 = vadd.f32 %v920, %v1804
      %v1806 = vpop.f32.mrb[0].mxu0
      %v1807 = vadd.f32 %v924, %v1806
      %v1808 = vpop.f32.mrb[0].mxu0
      %v1809 = vadd.f32 %v920, %v1808
      %v1810 = vpop.f32.mrb[0].mxu0
      %v1811 = vadd.f32 %v924, %v1810
      %1812 = vmatprep.mubr.bf16.mxu0 0
      %1813 = vmatmul.mubr.bf16.gmra.mrb[0].mxu0 %v1077
      %v1814 = vpop.f32.mrb[0].mxu0
      %v1815 = vadd.f32 %v920, %v1814
      %v1816 = vpop.f32.mrb[0].mxu0
      %v1817 = vadd.f32 %v924, %v1816
      %v1818 = vpop.f32.mrb[0].mxu0
      %v1819 = vadd.f32 %v920, %v1818
      %v1820 = vpop.f32.mrb[0].mxu0
      %v1821 = vadd.f32 %v924, %v1820
      %1822 = vmatprep.mubr.bf16.mxu0 0
      %1823 = vmatmul.mubr.bf16.gmra.mrb[0].mxu0 %v1080
      %v1824 = vpop.f32.mrb[0].mxu0
      %v1825 = vadd.f32 %v920, %v1824
      %v1826 = vpop.f32.mrb[0].mxu0
      %v1827 = vadd.f32 %v924, %v1826
      %v1828 = vpop.f32.mrb[0].mxu0
      %v1829 = vadd.f32 %v920, %v1828
      %v1830 = vpop.f32.mrb[0].mxu0
      %v1831 = vadd.f32 %v924, %v1830
      %1832 = vmatprep.mubr.bf16.mxu0 0
      %1833 = vmatmul.mubr.bf16.gmra.mrb[0].mxu0 %v1083
      %v1834 = vpop.f32.mrb[0].mxu0
      %v1835 = vadd.f32 %v920, %v1834
      %v1836 = vpop.f32.mrb[0].mxu0
      %v1837 = vadd.f32 %v924, %v1836
      %v1838 = vpop.f32.mrb[0].mxu0
      %v1839 = vadd.f32 %v920, %v1838
      %v1840 = vpop.f32.mrb[0].mxu0
      %v1841 = vadd.f32 %v924, %v1840
      %1842 = vmatprep.mubr.bf16.mxu0 0
      %1843 = vmatmul.mubr.bf16.gmra.mrb[0].mxu0 %v1086
      %v1844 = vpop.f32.mrb[0].mxu0
      %v1845 = vadd.f32 %v920, %v1844
      %v1846 = vpop.f32.mrb[0].mxu0
      %v1847 = vadd.f32 %v924, %v1846
      %v1848 = vpop.f32.mrb[0].mxu0
      %v1849 = vadd.f32 %v920, %v1848
      %v1850 = vpop.f32.mrb[0].mxu0
      %v1851 = vadd.f32 %v924, %v1850
      %1852 = vmatprep.mubr.bf16.mxu0 0
      %1853 = vmatmul.mubr.bf16.gmra.mrb[0].mxu0 %v1089
      %v1854 = vpop.f32.mrb[0].mxu0
      %v1855 = vadd.f32 %v920, %v1854
      %v1856 = vpop.f32.mrb[0].mxu0
      %v1857 = vadd.f32 %v924, %v1856
      %v1858 = vpop.f32.mrb[0].mxu0
      %v1859 = vadd.f32 %v920, %v1858
      %v1860 = vpop.f32.mrb[0].mxu0
      %v1861 = vadd.f32 %v924, %v1860
      %1862 = vdwg.mxu0
      %1863 = vmatprep.subr.bf16.mxu0 %v1012
      %1864 = vmatpush1.bf16.msra.mxu0 %v1011
      %1865 = vmatprep.subr.bf16.mxu0 %v1022
      %1866 = vmatpush1.bf16.msra.mxu0 %v1021
      %1867 = vmatprep.subr.bf16.mxu0 0
      %1868 = vmatpush1.bf16.msra.mxu0 0
      %1869 = vmatprep.subr.bf16.mxu0 0
      %1870 = vmatpush1.bf16.msra.mxu0 0
      %1871 = vmatprep.subr.bf16.mxu0 0
      %1872 = vmatpush1.bf16.msra.mxu0 0
      %1873 = vmatprep.subr.bf16.mxu0 0
      %1874 = vmatpush1.bf16.msra.mxu0 0
      %1875 = vmatprep.subr.bf16.mxu0 0
      %1876 = vmatpush1.bf16.msra.mxu0 0
      %1877 = vmatprep.subr.bf16.mxu0 0
      %1878 = vmatpush1.bf16.msra.mxu0 0
      %1879 = vmatprep.subr.bf16.mxu0 0
      %1880 = vmatpush1.bf16.msra.mxu0 0
      %1881 = vmatprep.subr.bf16.mxu0 0
      %1882 = vmatpush1.bf16.msra.mxu0 0
      %1883 = vmatprep.subr.bf16.mxu0 0
      %1884 = vmatpush1.bf16.msra.mxu0 0
      %1885 = vmatprep.subr.bf16.mxu0 0
      %1886 = vmatpush1.bf16.msra.mxu0 0
      %1887 = vmatprep.subr.bf16.mxu0 0
      %1888 = vmatpush1.bf16.msra.mxu0 0
      %1889 = vmatprep.subr.bf16.mxu0 0
      %1890 = vmatpush1.bf16.msra.mxu0 0
      %1891 = vmatprep.subr.bf16.mxu0 0
      %1892 = vmatpush1.bf16.msra.mxu0 0
      %1893 = vmatprep.subr.bf16.mxu0 0
      %1894 = vmatpush1.bf16.msra.mxu0 0
      %1895 = vmatprep.mubr.bf16.mxu0 0
      %1896 = vmatmul.mubr.bf16.gmra.mrb[0].mxu0 %v1044
      %v1897 = vpop.f32.mrb[0].mxu0
      %v1898 = vadd.f32 %v928, %v1897
      %v1899 = vpop.f32.mrb[0].mxu0
      %v1900 = vadd.f32 %v932, %v1899
      %v1901 = vpop.f32.mrb[0].mxu0
      %v1902 = vadd.f32 %v928, %v1901
      %v1903 = vpop.f32.mrb[0].mxu0
      %v1904 = vadd.f32 %v932, %v1903
      %1905 = vmatprep.mubr.bf16.mxu0 0
      %1906 = vmatmul.mubr.bf16.gmra.mrb[0].mxu0 %v1047
      %v1907 = vpop.f32.mrb[0].mxu0
      %v1908 = vadd.f32 %v928, %v1907
      %v1909 = vpop.f32.mrb[0].mxu0
      %v1910 = vadd.f32 %v932, %v1909
      %v1911 = vpop.f32.mrb[0].mxu0
      %v1912 = vadd.f32 %v928, %v1911
      %v1913 = vpop.f32.mrb[0].mxu0
      %v1914 = vadd.f32 %v932, %v1913
      %1915 = vmatprep.mubr.bf16.mxu0 0
      %1916 = vmatmul.mubr.bf16.gmra.mrb[0].mxu0 %v1050
      %v1917 = vpop.f32.mrb[0].mxu0
      %v1918 = vadd.f32 %v928, %v1917
      %v1919 = vpop.f32.mrb[0].mxu0
      %v1920 = vadd.f32 %v932, %v1919
      %v1921 = vpop.f32.mrb[0].mxu0
      %v1922 = vadd.f32 %v928, %v1921
      %v1923 = vpop.f32.mrb[0].mxu0
      %v1924 = vadd.f32 %v932, %v1923
      %1925 = vmatprep.mubr.bf16.mxu0 0
      %1926 = vmatmul.mubr.bf16.gmra.mrb[0].mxu0 %v1053
      %v1927 = vpop.f32.mrb[0].mxu0
      %v1928 = vadd.f32 %v928, %v1927
      %v1929 = vpop.f32.mrb[0].mxu0
      %v1930 = vadd.f32 %v932, %v1929
      %v1931 = vpop.f32.mrb[0].mxu0
      %v1932 = vadd.f32 %v928, %v1931
      %v1933 = vpop.f32.mrb[0].mxu0
      %v1934 = vadd.f32 %v932, %v1933
      %1935 = vmatprep.mubr.bf16.mxu0 0
      %1936 = vmatmul.mubr.bf16.gmra.mrb[0].mxu0 %v1056
      %v1937 = vpop.f32.mrb[0].mxu0
      %v1938 = vadd.f32 %v928, %v1937
      %v1939 = vpop.f32.mrb[0].mxu0
      %v1940 = vadd.f32 %v932, %v1939
      %v1941 = vpop.f32.mrb[0].mxu0
      %v1942 = vadd.f32 %v928, %v1941
      %v1943 = vpop.f32.mrb[0].mxu0
      %v1944 = vadd.f32 %v932, %v1943
      %1945 = vmatprep.mubr.bf16.mxu0 0
      %1946 = vmatmul.mubr.bf16.gmra.mrb[0].mxu0 %v1059
      %v1947 = vpop.f32.mrb[0].mxu0
      %v1948 = vadd.f32 %v928, %v1947
      %v1949 = vpop.f32.mrb[0].mxu0
      %v1950 = vadd.f32 %v932, %v1949
      %v1951 = vpop.f32.mrb[0].mxu0
      %v1952 = vadd.f32 %v928, %v1951
      %v1953 = vpop.f32.mrb[0].mxu0
      %v1954 = vadd.f32 %v932, %v1953
      %1955 = vmatprep.mubr.bf16.mxu0 0
      %1956 = vmatmul.mubr.bf16.gmra.mrb[0].mxu0 %v1062
      %v1957 = vpop.f32.mrb[0].mxu0
      %v1958 = vadd.f32 %v928, %v1957
      %v1959 = vpop.f32.mrb[0].mxu0
      %v1960 = vadd.f32 %v932, %v1959
      %v1961 = vpop.f32.mrb[0].mxu0
      %v1962 = vadd.f32 %v928, %v1961
      %v1963 = vpop.f32.mrb[0].mxu0
      %v1964 = vadd.f32 %v932, %v1963
      %1965 = vmatprep.mubr.bf16.mxu0 0
      %1966 = vmatmul.mubr.bf16.gmra.mrb[0].mxu0 %v1065
      %v1967 = vpop.f32.mrb[0].mxu0
      %v1968 = vadd.f32 %v928, %v1967
      %v1969 = vpop.f32.mrb[0].mxu0
      %v1970 = vadd.f32 %v932, %v1969
      %v1971 = vpop.f32.mrb[0].mxu0
      %v1972 = vadd.f32 %v928, %v1971
      %v1973 = vpop.f32.mrb[0].mxu0
      %v1974 = vadd.f32 %v932, %v1973
      %1975 = vmatprep.mubr.bf16.mxu0 0
      %1976 = vmatmul.mubr.bf16.gmra.mrb[0].mxu0 %v1068
      %v1977 = vpop.f32.mrb[0].mxu0
      %v1978 = vadd.f32 %v928, %v1977
      %v1979 = vpop.f32.mrb[0].mxu0
      %v1980 = vadd.f32 %v932, %v1979
      %v1981 = vpop.f32.mrb[0].mxu0
      %v1982 = vadd.f32 %v928, %v1981
      %v1983 = vpop.f32.mrb[0].mxu0
      %v1984 = vadd.f32 %v932, %v1983
      %1985 = vmatprep.mubr.bf16.mxu0 0
      %1986 = vmatmul.mubr.bf16.gmra.mrb[0].mxu0 %v1071
      %v1987 = vpop.f32.mrb[0].mxu0
      %v1988 = vadd.f32 %v928, %v1987
      %v1989 = vpop.f32.mrb[0].mxu0
      %v1990 = vadd.f32 %v932, %v1989
      %v1991 = vpop.f32.mrb[0].mxu0
      %v1992 = vadd.f32 %v928, %v1991
      %v1993 = vpop.f32.mrb[0].mxu0
      %v1994 = vadd.f32 %v932, %v1993
      %1995 = vmatprep.mubr.bf16.mxu0 0
      %1996 = vmatmul.mubr.bf16.gmra.mrb[0].mxu0 %v1074
      %v1997 = vpop.f32.mrb[0].mxu0
      %v1998 = vadd.f32 %v928, %v1997
      %v1999 = vpop.f32.mrb[0].mxu0
      %v2000 = vadd.f32 %v932, %v1999
      %v2001 = vpop.f32.mrb[0].mxu0
      %v2002 = vadd.f32 %v928, %v2001
      %v2003 = vpop.f32.mrb[0].mxu0
      %v2004 = vadd.f32 %v932, %v2003
      %2005 = vmatprep.mubr.bf16.mxu0 0
      %2006 = vmatmul.mubr.bf16.gmra.mrb[0].mxu0 %v1077
      %v2007 = vpop.f32.mrb[0].mxu0
      %v2008 = vadd.f32 %v928, %v2007
      %v2009 = vpop.f32.mrb[0].mxu0
      %v2010 = vadd.f32 %v932, %v2009
      %v2011 = vpop.f32.mrb[0].mxu0
      %v2012 = vadd.f32 %v928, %v2011
      %v2013 = vpop.f32.mrb[0].mxu0
      %v2014 = vadd.f32 %v932, %v2013
      %2015 = vmatprep.mubr.bf16.mxu0 0
      %2016 = vmatmul.mubr.bf16.gmra.mrb[0].mxu0 %v1080
      %v2017 = vpop.f32.mrb[0].mxu0
      %v2018 = vadd.f32 %v928, %v2017
      %v2019 = vpop.f32.mrb[0].mxu0
      %v2020 = vadd.f32 %v932, %v2019
      %v2021 = vpop.f32.mrb[0].mxu0
      %v2022 = vadd.f32 %v928, %v2021
      %v2023 = vpop.f32.mrb[0].mxu0
      %v2024 = vadd.f32 %v932, %v2023
      %2025 = vmatprep.mubr.bf16.mxu0 0
      %2026 = vmatmul.mubr.bf16.gmra.mrb[0].mxu0 %v1083
      %v2027 = vpop.f32.mrb[0].mxu0
      %v2028 = vadd.f32 %v928, %v2027
      %v2029 = vpop.f32.mrb[0].mxu0
      %v2030 = vadd.f32 %v932, %v2029
      %v2031 = vpop.f32.mrb[0].mxu0
      %v2032 = vadd.f32 %v928, %v2031
      %v2033 = vpop.f32.mrb[0].mxu0
      %v2034 = vadd.f32 %v932, %v2033
      %2035 = vmatprep.mubr.bf16.mxu0 0
      %2036 = vmatmul.mubr.bf16.gmra.mrb[0].mxu0 %v1086
      %v2037 = vpop.f32.mrb[0].mxu0
      %v2038 = vadd.f32 %v928, %v2037
      %v2039 = vpop.f32.mrb[0].mxu0
      %v2040 = vadd.f32 %v932, %v2039
      %v2041 = vpop.f32.mrb[0].mxu0
      %v2042 = vadd.f32 %v928, %v2041
      %v2043 = vpop.f32.mrb[0].mxu0
      %v2044 = vadd.f32 %v932, %v2043
      %2045 = vmatprep.mubr.bf16.mxu0 0
      %2046 = vmatmul.mubr.bf16.gmra.mrb[0].mxu0 %v1089
      %v2047 = vpop.f32.mrb[0].mxu0
      %v2048 = vadd.f32 %v928, %v2047
      %v2049 = vpop.f32.mrb[0].mxu0
      %v2050 = vadd.f32 %v932, %v2049
      %v2051 = vpop.f32.mrb[0].mxu0
      %v2052 = vadd.f32 %v928, %v2051
      %v2053 = vpop.f32.mrb[0].mxu0
      %v2054 = vadd.f32 %v932, %v2053
      %2055 = vdwg.mxu0
      %v2056 = vsub.f32 0.0, %v1126
      %v2057 = vsub.f32 0.0, %v1128
      %v2058 = vsub.f32 0.0, %v1319
      %v2059 = vsub.f32 0.0, %v1321
      %v2060 = vsub.f32 0.0, %v1512
      %v2061 = vsub.f32 0.0, %v1514
      %v2062 = vsub.f32 0.0, %v1705
      %v2063 = vsub.f32 0.0, %v1707
      %v2064 = vsub.f32 0.0, %v1898
      %v2065 = vsub.f32 0.0, %v1900
      %v2066 = vsub.f32 0.0, %v1130
      %v2067 = vsub.f32 0.0, %v1132
      %v2068 = vsub.f32 0.0, %v1323
      %v2069 = vsub.f32 0.0, %v1325
      %v2070 = vsub.f32 0.0, %v1516
      %v2071 = vsub.f32 0.0, %v1518
      %v2072 = vsub.f32 0.0, %v1709
      %v2073 = vsub.f32 0.0, %v1711
      %v2074 = vsub.f32 0.0, %v1902
      %v2075 = vsub.f32 0.0, %v1904
      %v2076 = vsub.f32 0.0, %v1136
      %v2077 = vsub.f32 0.0, %v1138
      %v2078 = vsub.f32 0.0, %v1329
      %v2079 = vsub.f32 0.0, %v1331
      %v2080 = vsub.f32 0.0, %v1522
      %v2081 = vsub.f32 0.0, %v1524
      %v2082 = vsub.f32 0.0, %v1715
      %v2083 = vsub.f32 0.0, %v1717
      %v2084 = vsub.f32 0.0, %v1908
      %v2085 = vsub.f32 0.0, %v1910
      %v2086 = vsub.f32 0.0, %v1140
      %v2087 = vsub.f32 0.0, %v1142
      %v2088 = vsub.f32 0.0, %v1333
      %v2089 = vsub.f32 0.0, %v1335
      %v2090 = vsub.f32 0.0, %v1526
      %v2091 = vsub.f32 0.0, %v1528
      %v2092 = vsub.f32 0.0, %v1719
      %v2093 = vsub.f32 0.0, %v1721
      %v2094 = vsub.f32 0.0, %v1912
      %v2095 = vsub.f32 0.0, %v1914
      %v2096 = vsub.f32 0.0, %v1146
      %v2097 = vsub.f32 0.0, %v1148
      %v2098 = vsub.f32 0.0, %v1339
      %v2099 = vsub.f32 0.0, %v1341
      %v2100 = vsub.f32 0.0, %v1532
      %v2101 = vsub.f32 0.0, %v1534
      %v2102 = vsub.f32 0.0, %v1725
      %v2103 = vsub.f32 0.0, %v1727
      %v2104 = vsub.f32 0.0, %v1918
      %v2105 = vsub.f32 0.0, %v1920
      %v2106 = vsub.f32 0.0, %v1150
      %v2107 = vsub.f32 0.0, %v1152
      %v2108 = vsub.f32 0.0, %v1343
      %v2109 = vsub.f32 0.0, %v1345
      %v2110 = vsub.f32 0.0, %v1536
      %v2111 = vsub.f32 0.0, %v1538
      %v2112 = vsub.f32 0.0, %v1729
      %v2113 = vsub.f32 0.0, %v1731
      %v2114 = vsub.f32 0.0, %v1922
      %v2115 = vsub.f32 0.0, %v1924
      %v2116 = vsub.f32 0.0, %v1156
      %v2117 = vsub.f32 0.0, %v1158
      %v2118 = vsub.f32 0.0, %v1349
      %v2119 = vsub.f32 0.0, %v1351
      %v2120 = vsub.f32 0.0, %v1542
      %v2121 = vsub.f32 0.0, %v1544
      %v2122 = vsub.f32 0.0, %v1735
      %v2123 = vsub.f32 0.0, %v1737
      %v2124 = vsub.f32 0.0, %v1928
      %v2125 = vsub.f32 0.0, %v1930
      %v2126 = vsub.f32 0.0, %v1160
      %v2127 = vsub.f32 0.0, %v1162
      %v2128 = vsub.f32 0.0, %v1353
      %v2129 = vsub.f32 0.0, %v1355
      %v2130 = vsub.f32 0.0, %v1546
      %v2131 = vsub.f32 0.0, %v1548
      %v2132 = vsub.f32 0.0, %v1739
      %v2133 = vsub.f32 0.0, %v1741
      %v2134 = vsub.f32 0.0, %v1932
      %v2135 = vsub.f32 0.0, %v1934
      %v2136 = vsub.f32 0.0, %v1166
      %v2137 = vsub.f32 0.0, %v1168
      %v2138 = vsub.f32 0.0, %v1359
      %v2139 = vsub.f32 0.0, %v1361
      %v2140 = vsub.f32 0.0, %v1552
      %v2141 = vsub.f32 0.0, %v1554
      %v2142 = vsub.f32 0.0, %v1745
      %v2143 = vsub.f32 0.0, %v1747
      %v2144 = vsub.f32 0.0, %v1938
      %v2145 = vsub.f32 0.0, %v1940
      %v2146 = vsub.f32 0.0, %v1170
      %v2147 = vsub.f32 0.0, %v1172
      %v2148 = vsub.f32 0.0, %v1363
      %v2149 = vsub.f32 0.0, %v1365
      %v2150 = vsub.f32 0.0, %v1556
      %v2151 = vsub.f32 0.0, %v1558
      %v2152 = vsub.f32 0.0, %v1749
      %v2153 = vsub.f32 0.0, %v1751
      %v2154 = vsub.f32 0.0, %v1942
      %v2155 = vsub.f32 0.0, %v1944
      %v2156 = vsub.f32 0.0, %v1176
      %v2157 = vsub.f32 0.0, %v1178
      %v2158 = vsub.f32 0.0, %v1369
      %v2159 = vsub.f32 0.0, %v1371
      %v2160 = vsub.f32 0.0, %v1562
      %v2161 = vsub.f32 0.0, %v1564
      %v2162 = vsub.f32 0.0, %v1755
      %v2163 = vsub.f32 0.0, %v1757
      %v2164 = vsub.f32 0.0, %v1948
      %v2165 = vsub.f32 0.0, %v1950
      %v2166 = vsub.f32 0.0, %v1180
      %v2167 = vsub.f32 0.0, %v1182
      %v2168 = vsub.f32 0.0, %v1373
      %v2169 = vsub.f32 0.0, %v1375
      %v2170 = vsub.f32 0.0, %v1566
      %v2171 = vsub.f32 0.0, %v1568
      %v2172 = vsub.f32 0.0, %v1759
      %v2173 = vsub.f32 0.0, %v1761
      %v2174 = vsub.f32 0.0, %v1952
      %v2175 = vsub.f32 0.0, %v1954
      %v2176 = vsub.f32 0.0, %v1186
      %v2177 = vsub.f32 0.0, %v1188
      %v2178 = vsub.f32 0.0, %v1379
      %v2179 = vsub.f32 0.0, %v1381
      %v2180 = vsub.f32 0.0, %v1572
      %v2181 = vsub.f32 0.0, %v1574
      %v2182 = vsub.f32 0.0, %v1765
      %v2183 = vsub.f32 0.0, %v1767
      %v2184 = vsub.f32 0.0, %v1958
      %v2185 = vsub.f32 0.0, %v1960
      %v2186 = vsub.f32 0.0, %v1190
      %v2187 = vsub.f32 0.0, %v1192
      %v2188 = vsub.f32 0.0, %v1383
      %v2189 = vsub.f32 0.0, %v1385
      %v2190 = vsub.f32 0.0, %v1576
      %v2191 = vsub.f32 0.0, %v1578
      %v2192 = vsub.f32 0.0, %v1769
      %v2193 = vsub.f32 0.0, %v1771
      %v2194 = vsub.f32 0.0, %v1962
      %v2195 = vsub.f32 0.0, %v1964
      %v2196 = vsub.f32 0.0, %v1196
      %v2197 = vsub.f32 0.0, %v1198
      %v2198 = vsub.f32 0.0, %v1389
      %v2199 = vsub.f32 0.0, %v1391
      %v2200 = vsub.f32 0.0, %v1582
      %v2201 = vsub.f32 0.0, %v1584
      %v2202 = vsub.f32 0.0, %v1775
      %v2203 = vsub.f32 0.0, %v1777
      %v2204 = vsub.f32 0.0, %v1968
      %v2205 = vsub.f32 0.0, %v1970
      %v2206 = vsub.f32 0.0, %v1200
      %v2207 = vsub.f32 0.0, %v1202
      %v2208 = vsub.f32 0.0, %v1393
      %v2209 = vsub.f32 0.0, %v1395
      %v2210 = vsub.f32 0.0, %v1586
      %v2211 = vsub.f32 0.0, %v1588
      %v2212 = vsub.f32 0.0, %v1779
      %v2213 = vsub.f32 0.0, %v1781
      %v2214 = vsub.f32 0.0, %v1972
      %v2215 = vsub.f32 0.0, %v1974
      %v2216 = vsub.f32 0.0, %v1206
      %v2217 = vsub.f32 0.0, %v1208
      %v2218 = vsub.f32 0.0, %v1399
      %v2219 = vsub.f32 0.0, %v1401
      %v2220 = vsub.f32 0.0, %v1592
      %v2221 = vsub.f32 0.0, %v1594
      %v2222 = vsub.f32 0.0, %v1785
      %v2223 = vsub.f32 0.0, %v1787
      %v2224 = vsub.f32 0.0, %v1978
      %v2225 = vsub.f32 0.0, %v1980
      %v2226 = vsub.f32 0.0, %v1210
      %v2227 = vsub.f32 0.0, %v1212
      %v2228 = vsub.f32 0.0, %v1403
      %v2229 = vsub.f32 0.0, %v1405
      %v2230 = vsub.f32 0.0, %v1596
      %v2231 = vsub.f32 0.0, %v1598
      %v2232 = vsub.f32 0.0, %v1789
      %v2233 = vsub.f32 0.0, %v1791
      %v2234 = vsub.f32 0.0, %v1982
      %v2235 = vsub.f32 0.0, %v1984
      %v2236 = vsub.f32 0.0, %v1216
      %v2237 = vsub.f32 0.0, %v1218
      %v2238 = vsub.f32 0.0, %v1409
      %v2239 = vsub.f32 0.0, %v1411
      %v2240 = vsub.f32 0.0, %v1602
      %v2241 = vsub.f32 0.0, %v1604
      %v2242 = vsub.f32 0.0, %v1795
      %v2243 = vsub.f32 0.0, %v1797
      %v2244 = vsub.f32 0.0, %v1988
      %v2245 = vsub.f32 0.0, %v1990
      %v2246 = vsub.f32 0.0, %v1220
      %v2247 = vsub.f32 0.0, %v1222
      %v2248 = vsub.f32 0.0, %v1413
      %v2249 = vsub.f32 0.0, %v1415
      %v2250 = vsub.f32 0.0, %v1606
      %v2251 = vsub.f32 0.0, %v1608
      %v2252 = vsub.f32 0.0, %v1799
      %v2253 = vsub.f32 0.0, %v1801
      %v2254 = vsub.f32 0.0, %v1992
      %v2255 = vsub.f32 0.0, %v1994
      %v2256 = vsub.f32 0.0, %v1226
      %v2257 = vsub.f32 0.0, %v1228
      %v2258 = vsub.f32 0.0, %v1419
      %v2259 = vsub.f32 0.0, %v1421
      %v2260 = vsub.f32 0.0, %v1612
      %v2261 = vsub.f32 0.0, %v1614
      %v2262 = vsub.f32 0.0, %v1805
      %v2263 = vsub.f32 0.0, %v1807
      %v2264 = vsub.f32 0.0, %v1998
      %v2265 = vsub.f32 0.0, %v2000
      %v2266 = vsub.f32 0.0, %v1230
      %v2267 = vsub.f32 0.0, %v1232
      %v2268 = vsub.f32 0.0, %v1423
      %v2269 = vsub.f32 0.0, %v1425
      %v2270 = vsub.f32 0.0, %v1616
      %v2271 = vsub.f32 0.0, %v1618
      %v2272 = vsub.f32 0.0, %v1809
      %v2273 = vsub.f32 0.0, %v1811
      %v2274 = vsub.f32 0.0, %v2002
      %v2275 = vsub.f32 0.0, %v2004
      %v2276 = vsub.f32 0.0, %v1236
      %v2277 = vsub.f32 0.0, %v1238
      %v2278 = vsub.f32 0.0, %v1429
      %v2279 = vsub.f32 0.0, %v1431
      %v2280 = vsub.f32 0.0, %v1622
      %v2281 = vsub.f32 0.0, %v1624
      %v2282 = vsub.f32 0.0, %v1815
      %v2283 = vsub.f32 0.0, %v1817
      %v2284 = vsub.f32 0.0, %v2008
      %v2285 = vsub.f32 0.0, %v2010
      %v2286 = vsub.f32 0.0, %v1240
      %v2287 = vsub.f32 0.0, %v1242
      %v2288 = vsub.f32 0.0, %v1433
      %v2289 = vsub.f32 0.0, %v1435
      %v2290 = vsub.f32 0.0, %v1626
      %v2291 = vsub.f32 0.0, %v1628
      %v2292 = vsub.f32 0.0, %v1819
      %v2293 = vsub.f32 0.0, %v1821
      %v2294 = vsub.f32 0.0, %v2012
      %v2295 = vsub.f32 0.0, %v2014
      %v2296 = vsub.f32 0.0, %v1246
      %v2297 = vsub.f32 0.0, %v1248
      %v2298 = vsub.f32 0.0, %v1439
      %v2299 = vsub.f32 0.0, %v1441
      %v2300 = vsub.f32 0.0, %v1632
      %v2301 = vsub.f32 0.0, %v1634
      %v2302 = vsub.f32 0.0, %v1825
      %v2303 = vsub.f32 0.0, %v1827
      %v2304 = vsub.f32 0.0, %v2018
      %v2305 = vsub.f32 0.0, %v2020
      %v2306 = vsub.f32 0.0, %v1250
      %v2307 = vsub.f32 0.0, %v1252
      %v2308 = vsub.f32 0.0, %v1443
      %v2309 = vsub.f32 0.0, %v1445
      %v2310 = vsub.f32 0.0, %v1636
      %v2311 = vsub.f32 0.0, %v1638
      %v2312 = vsub.f32 0.0, %v1829
      %v2313 = vsub.f32 0.0, %v1831
      %v2314 = vsub.f32 0.0, %v2022
      %v2315 = vsub.f32 0.0, %v2024
      %v2316 = vsub.f32 0.0, %v1256
      %v2317 = vsub.f32 0.0, %v1258
      %v2318 = vsub.f32 0.0, %v1449
      %v2319 = vsub.f32 0.0, %v1451
      %v2320 = vsub.f32 0.0, %v1642
      %v2321 = vsub.f32 0.0, %v1644
      %v2322 = vsub.f32 0.0, %v1835
      %v2323 = vsub.f32 0.0, %v1837
      %v2324 = vsub.f32 0.0, %v2028
      %v2325 = vsub.f32 0.0, %v2030
      %v2326 = vsub.f32 0.0, %v1260
      %v2327 = vsub.f32 0.0, %v1262
      %v2328 = vsub.f32 0.0, %v1453
      %v2329 = vsub.f32 0.0, %v1455
      %v2330 = vsub.f32 0.0, %v1646
      %v2331 = vsub.f32 0.0, %v1648
      %v2332 = vsub.f32 0.0, %v1839
      %v2333 = vsub.f32 0.0, %v1841
      %v2334 = vsub.f32 0.0, %v2032
      %v2335 = vsub.f32 0.0, %v2034
      %v2336 = vsub.f32 0.0, %v1266
      %v2337 = vsub.f32 0.0, %v1268
      %v2338 = vsub.f32 0.0, %v1459
      %v2339 = vsub.f32 0.0, %v1461
      %v2340 = vsub.f32 0.0, %v1652
      %v2341 = vsub.f32 0.0, %v1654
      %v2342 = vsub.f32 0.0, %v1845
      %v2343 = vsub.f32 0.0, %v1847
      %v2344 = vsub.f32 0.0, %v2038
      %v2345 = vsub.f32 0.0, %v2040
      %v2346 = vsub.f32 0.0, %v1270
      %v2347 = vsub.f32 0.0, %v1272
      %v2348 = vsub.f32 0.0, %v1463
      %v2349 = vsub.f32 0.0, %v1465
      %v2350 = vsub.f32 0.0, %v1656
      %v2351 = vsub.f32 0.0, %v1658
      %v2352 = vsub.f32 0.0, %v1849
      %v2353 = vsub.f32 0.0, %v1851
      %v2354 = vsub.f32 0.0, %v2042
      %v2355 = vsub.f32 0.0, %v2044
      %v2356 = vsub.f32 0.0, %v1276
      %v2357 = vsub.f32 0.0, %v1278
      %v2358 = vsub.f32 0.0, %v1469
      %v2359 = vsub.f32 0.0, %v1471
      %v2360 = vsub.f32 0.0, %v1662
      %v2361 = vsub.f32 0.0, %v1664
      %v2362 = vsub.f32 0.0, %v1855
      %v2363 = vsub.f32 0.0, %v1857
      %v2364 = vsub.f32 0.0, %v2048
      %v2365 = vsub.f32 0.0, %v2050
      %v2366 = vsub.f32 0.0, %v1280
      %v2367 = vsub.f32 0.0, %v1282
      %v2368 = vsub.f32 0.0, %v1473
      %v2369 = vsub.f32 0.0, %v1475
      %v2370 = vsub.f32 0.0, %v1666
      %v2371 = vsub.f32 0.0, %v1668
      %v2372 = vsub.f32 0.0, %v1859
      %v2373 = vsub.f32 0.0, %v1861
      %v2374 = vsub.f32 0.0, %v2052
      %v2375 = vsub.f32 0.0, %v2054
      %v2376 = vmul.f32 %v2056, 1.442695
      %v2377 = vpow.pop %v2376
      %v2378 = vmul.f32 %v2057, 1.442695
      %v2379 = vpow.pop %v2378
      %v2380 = vmul.f32 %v2058, 1.442695
      %v2381 = vpow.pop %v2380
      %v2382 = vmul.f32 %v2059, 1.442695
      %v2383 = vpow.pop %v2382
      %v2384 = vmul.f32 %v2060, 1.442695
      %v2385 = vpow.pop %v2384
      %v2386 = vmul.f32 %v2061, 1.442695
      %v2387 = vpow.pop %v2386
      %v2388 = vmul.f32 %v2062, 1.442695
      %v2389 = vpow.pop %v2388
      %v2390 = vmul.f32 %v2063, 1.442695
      %v2391 = vpow.pop %v2390
      %v2392 = vmul.f32 %v2064, 1.442695
      %v2393 = vpow.pop %v2392
      %v2394 = vmul.f32 %v2065, 1.442695
      %v2395 = vpow.pop %v2394
      %v2396 = vmul.f32 %v2066, 1.442695
      %v2397 = vpow.pop %v2396
      %v2398 = vmul.f32 %v2067, 1.442695
      %v2399 = vpow.pop %v2398
      %v2400 = vmul.f32 %v2068, 1.442695
      %v2401 = vpow.pop %v2400
      %v2402 = vmul.f32 %v2069, 1.442695
      %v2403 = vpow.pop %v2402
      %v2404 = vmul.f32 %v2070, 1.442695
      %v2405 = vpow.pop %v2404
      %v2406 = vmul.f32 %v2071, 1.442695
      %v2407 = vpow.pop %v2406
      %v2408 = vmul.f32 %v2072, 1.442695
      %v2409 = vpow.pop %v2408
      %v2410 = vmul.f32 %v2073, 1.442695
      %v2411 = vpow.pop %v2410
      %v2412 = vmul.f32 %v2074, 1.442695
      %v2413 = vpow.pop %v2412
      %v2414 = vmul.f32 %v2075, 1.442695
      %v2415 = vpow.pop %v2414
      %v2416 = vmul.f32 %v2076, 1.442695
      %v2417 = vpow.pop %v2416
      %v2418 = vmul.f32 %v2077, 1.442695
      %v2419 = vpow.pop %v2418
      %v2420 = vmul.f32 %v2078, 1.442695
      %v2421 = vpow.pop %v2420
      %v2422 = vmul.f32 %v2079, 1.442695
      %v2423 = vpow.pop %v2422
      %v2424 = vmul.f32 %v2080, 1.442695
      %v2425 = vpow.pop %v2424
      %v2426 = vmul.f32 %v2081, 1.442695
      %v2427 = vpow.pop %v2426
      %v2428 = vmul.f32 %v2082, 1.442695
      %v2429 = vpow.pop %v2428
      %v2430 = vmul.f32 %v2083, 1.442695
      %v2431 = vpow.pop %v2430
      %v2432 = vmul.f32 %v2084, 1.442695
      %v2433 = vpow.pop %v2432
      %v2434 = vmul.f32 %v2085, 1.442695
      %v2435 = vpow.pop %v2434
      %v2436 = vmul.f32 %v2086, 1.442695
      %v2437 = vpow.pop %v2436
      %v2438 = vmul.f32 %v2087, 1.442695
      %v2439 = vpow.pop %v2438
      %v2440 = vmul.f32 %v2088, 1.442695
      %v2441 = vpow.pop %v2440
      %v2442 = vmul.f32 %v2089, 1.442695
      %v2443 = vpow.pop %v2442
      %v2444 = vmul.f32 %v2090, 1.442695
      %v2445 = vpow.pop %v2444
      %v2446 = vmul.f32 %v2091, 1.442695
      %v2447 = vpow.pop %v2446
      %v2448 = vmul.f32 %v2092, 1.442695
      %v2449 = vpow.pop %v2448
      %v2450 = vmul.f32 %v2093, 1.442695
      %v2451 = vpow.pop %v2450
      %v2452 = vmul.f32 %v2094, 1.442695
      %v2453 = vpow.pop %v2452
      %v2454 = vmul.f32 %v2095, 1.442695
      %v2455 = vpow.pop %v2454
      %v2456 = vmul.f32 %v2096, 1.442695
      %v2457 = vpow.pop %v2456
      %v2458 = vmul.f32 %v2097, 1.442695
      %v2459 = vpow.pop %v2458
      %v2460 = vmul.f32 %v2098, 1.442695
      %v2461 = vpow.pop %v2460
      %v2462 = vmul.f32 %v2099, 1.442695
      %v2463 = vpow.pop %v2462
      %v2464 = vmul.f32 %v2100, 1.442695
      %v2465 = vpow.pop %v2464
      %v2466 = vmul.f32 %v2101, 1.442695
      %v2467 = vpow.pop %v2466
      %v2468 = vmul.f32 %v2102, 1.442695
      %v2469 = vpow.pop %v2468
      %v2470 = vmul.f32 %v2103, 1.442695
      %v2471 = vpow.pop %v2470
      %v2472 = vmul.f32 %v2104, 1.442695
      %v2473 = vpow.pop %v2472
      %v2474 = vmul.f32 %v2105, 1.442695
      %v2475 = vpow.pop %v2474
      %v2476 = vmul.f32 %v2106, 1.442695
      %v2477 = vpow.pop %v2476
      %v2478 = vmul.f32 %v2107, 1.442695
      %v2479 = vpow.pop %v2478
      %v2480 = vmul.f32 %v2108, 1.442695
      %v2481 = vpow.pop %v2480
      %v2482 = vmul.f32 %v2109, 1.442695
      %v2483 = vpow.pop %v2482
      %v2484 = vmul.f32 %v2110, 1.442695
      %v2485 = vpow.pop %v2484
      %v2486 = vmul.f32 %v2111, 1.442695
      %v2487 = vpow.pop %v2486
      %v2488 = vmul.f32 %v2112, 1.442695
      %v2489 = vpow.pop %v2488
      %v2490 = vmul.f32 %v2113, 1.442695
      %v2491 = vpow.pop %v2490
      %v2492 = vmul.f32 %v2114, 1.442695
      %v2493 = vpow.pop %v2492
      %v2494 = vmul.f32 %v2115, 1.442695
      %v2495 = vpow.pop %v2494
      %v2496 = vmul.f32 %v2116, 1.442695
      %v2497 = vpow.pop %v2496
      %v2498 = vmul.f32 %v2117, 1.442695
      %v2499 = vpow.pop %v2498
      %v2500 = vmul.f32 %v2118, 1.442695
      %v2501 = vpow.pop %v2500
      %v2502 = vmul.f32 %v2119, 1.442695
      %v2503 = vpow.pop %v2502
      %v2504 = vmul.f32 %v2120, 1.442695
      %v2505 = vpow.pop %v2504
      %v2506 = vmul.f32 %v2121, 1.442695
      %v2507 = vpow.pop %v2506
      %v2508 = vmul.f32 %v2122, 1.442695
      %v2509 = vpow.pop %v2508
      %v2510 = vmul.f32 %v2123, 1.442695
      %v2511 = vpow.pop %v2510
      %v2512 = vmul.f32 %v2124, 1.442695
      %v2513 = vpow.pop %v2512
      %v2514 = vmul.f32 %v2125, 1.442695
      %v2515 = vpow.pop %v2514
      %v2516 = vmul.f32 %v2126, 1.442695
      %v2517 = vpow.pop %v2516
      %v2518 = vmul.f32 %v2127, 1.442695
      %v2519 = vpow.pop %v2518
      %v2520 = vmul.f32 %v2128, 1.442695
      %v2521 = vpow.pop %v2520
      %v2522 = vmul.f32 %v2129, 1.442695
      %v2523 = vpow.pop %v2522
      %v2524 = vmul.f32 %v2130, 1.442695
      %v2525 = vpow.pop %v2524
      %v2526 = vmul.f32 %v2131, 1.442695
      %v2527 = vpow.pop %v2526
      %v2528 = vmul.f32 %v2132, 1.442695
      %v2529 = vpow.pop %v2528
      %v2530 = vmul.f32 %v2133, 1.442695
      %v2531 = vpow.pop %v2530
      %v2532 = vmul.f32 %v2134, 1.442695
      %v2533 = vpow.pop %v2532
      %v2534 = vmul.f32 %v2135, 1.442695
      %v2535 = vpow.pop %v2534
      %v2536 = vmul.f32 %v2136, 1.442695
      %v2537 = vpow.pop %v2536
      %v2538 = vmul.f32 %v2137, 1.442695
      %v2539 = vpow.pop %v2538
      %v2540 = vmul.f32 %v2138, 1.442695
      %v2541 = vpow.pop %v2540
      %v2542 = vmul.f32 %v2139, 1.442695
      %v2543 = vpow.pop %v2542
      %v2544 = vmul.f32 %v2140, 1.442695
      %v2545 = vpow.pop %v2544
      %v2546 = vmul.f32 %v2141, 1.442695
      %v2547 = vpow.pop %v2546
      %v2548 = vmul.f32 %v2142, 1.442695
      %v2549 = vpow.pop %v2548
      %v2550 = vmul.f32 %v2143, 1.442695
      %v2551 = vpow.pop %v2550
      %v2552 = vmul.f32 %v2144, 1.442695
      %v2553 = vpow.pop %v2552
      %v2554 = vmul.f32 %v2145, 1.442695
      %v2555 = vpow.pop %v2554
      %v2556 = vmul.f32 %v2146, 1.442695
      %v2557 = vpow.pop %v2556
      %v2558 = vmul.f32 %v2147, 1.442695
      %v2559 = vpow.pop %v2558
      %v2560 = vmul.f32 %v2148, 1.442695
      %v2561 = vpow.pop %v2560
      %v2562 = vmul.f32 %v2149, 1.442695
      %v2563 = vpow.pop %v2562
      %v2564 = vmul.f32 %v2150, 1.442695
      %v2565 = vpow.pop %v2564
      %v2566 = vmul.f32 %v2151, 1.442695
      %v2567 = vpow.pop %v2566
      %v2568 = vmul.f32 %v2152, 1.442695
      %v2569 = vpow.pop %v2568
      %v2570 = vmul.f32 %v2153, 1.442695
      %v2571 = vpow.pop %v2570
      %v2572 = vmul.f32 %v2154, 1.442695
      %v2573 = vpow.pop %v2572
      %v2574 = vmul.f32 %v2155, 1.442695
      %v2575 = vpow.pop %v2574
      %v2576 = vmul.f32 %v2156, 1.442695
      %v2577 = vpow.pop %v2576
      %v2578 = vmul.f32 %v2157, 1.442695
      %v2579 = vpow.pop %v2578
      %v2580 = vmul.f32 %v2158, 1.442695
      %v2581 = vpow.pop %v2580
      %v2582 = vmul.f32 %v2159, 1.442695
      %v2583 = vpow.pop %v2582
      %v2584 = vmul.f32 %v2160, 1.442695
      %v2585 = vpow.pop %v2584
      %v2586 = vmul.f32 %v2161, 1.442695
      %v2587 = vpow.pop %v2586
      %v2588 = vmul.f32 %v2162, 1.442695
      %v2589 = vpow.pop %v2588
      %v2590 = vmul.f32 %v2163, 1.442695
      %v2591 = vpow.pop %v2590
      %v2592 = vmul.f32 %v2164, 1.442695
      %v2593 = vpow.pop %v2592
      %v2594 = vmul.f32 %v2165, 1.442695
      %v2595 = vpow.pop %v2594
      %v2596 = vmul.f32 %v2166, 1.442695
      %v2597 = vpow.pop %v2596
      %v2598 = vmul.f32 %v2167, 1.442695
      %v2599 = vpow.pop %v2598
      %v2600 = vmul.f32 %v2168, 1.442695
      %v2601 = vpow.pop %v2600
      %v2602 = vmul.f32 %v2169, 1.442695
      %v2603 = vpow.pop %v2602
      %v2604 = vmul.f32 %v2170, 1.442695
      %v2605 = vpow.pop %v2604
      %v2606 = vmul.f32 %v2171, 1.442695
      %v2607 = vpow.pop %v2606
      %v2608 = vmul.f32 %v2172, 1.442695
      %v2609 = vpow.pop %v2608
      %v2610 = vmul.f32 %v2173, 1.442695
      %v2611 = vpow.pop %v2610
      %v2612 = vmul.f32 %v2174, 1.442695
      %v2613 = vpow.pop %v2612
      %v2614 = vmul.f32 %v2175, 1.442695
      %v2615 = vpow.pop %v2614
      %v2616 = vmul.f32 %v2176, 1.442695
      %v2617 = vpow.pop %v2616
      %v2618 = vmul.f32 %v2177, 1.442695
      %v2619 = vpow.pop %v2618
      %v2620 = vmul.f32 %v2178, 1.442695
      %v2621 = vpow.pop %v2620
      %v2622 = vmul.f32 %v2179, 1.442695
      %v2623 = vpow.pop %v2622
      %v2624 = vmul.f32 %v2180, 1.442695
      %v2625 = vpow.pop %v2624
      %v2626 = vmul.f32 %v2181, 1.442695
      %v2627 = vpow.pop %v2626
      %v2628 = vmul.f32 %v2182, 1.442695
      %v2629 = vpow.pop %v2628
      %v2630 = vmul.f32 %v2183, 1.442695
      %v2631 = vpow.pop %v2630
      %v2632 = vmul.f32 %v2184, 1.442695
      %v2633 = vpow.pop %v2632
      %v2634 = vmul.f32 %v2185, 1.442695
      %v2635 = vpow.pop %v2634
      %v2636 = vmul.f32 %v2186, 1.442695
      %v2637 = vpow.pop %v2636
      %v2638 = vmul.f32 %v2187, 1.442695
      %v2639 = vpow.pop %v2638
      %v2640 = vmul.f32 %v2188, 1.442695
      %v2641 = vpow.pop %v2640
      %v2642 = vmul.f32 %v2189, 1.442695
      %v2643 = vpow.pop %v2642
      %v2644 = vmul.f32 %v2190, 1.442695
      %v2645 = vpow.pop %v2644
      %v2646 = vmul.f32 %v2191, 1.442695
      %v2647 = vpow.pop %v2646
      %v2648 = vmul.f32 %v2192, 1.442695
      %v2649 = vpow.pop %v2648
      %v2650 = vmul.f32 %v2193, 1.442695
      %v2651 = vpow.pop %v2650
      %v2652 = vmul.f32 %v2194, 1.442695
      %v2653 = vpow.pop %v2652
      %v2654 = vmul.f32 %v2195, 1.442695
      %v2655 = vpow.pop %v2654
      %v2656 = vmul.f32 %v2196, 1.442695
      %v2657 = vpow.pop %v2656
      %v2658 = vmul.f32 %v2197, 1.442695
      %v2659 = vpow.pop %v2658
      %v2660 = vmul.f32 %v2198, 1.442695
      %v2661 = vpow.pop %v2660
      %v2662 = vmul.f32 %v2199, 1.442695
      %v2663 = vpow.pop %v2662
      %v2664 = vmul.f32 %v2200, 1.442695
      %v2665 = vpow.pop %v2664
      %v2666 = vmul.f32 %v2201, 1.442695
      %v2667 = vpow.pop %v2666
      %v2668 = vmul.f32 %v2202, 1.442695
      %v2669 = vpow.pop %v2668
      %v2670 = vmul.f32 %v2203, 1.442695
      %v2671 = vpow.pop %v2670
      %v2672 = vmul.f32 %v2204, 1.442695
      %v2673 = vpow.pop %v2672
      %v2674 = vmul.f32 %v2205, 1.442695
      %v2675 = vpow.pop %v2674
      %v2676 = vmul.f32 %v2206, 1.442695
      %v2677 = vpow.pop %v2676
      %v2678 = vmul.f32 %v2207, 1.442695
      %v2679 = vpow.pop %v2678
      %v2680 = vmul.f32 %v2208, 1.442695
      %v2681 = vpow.pop %v2680
      %v2682 = vmul.f32 %v2209, 1.442695
      %v2683 = vpow.pop %v2682
      %v2684 = vmul.f32 %v2210, 1.442695
      %v2685 = vpow.pop %v2684
      %v2686 = vmul.f32 %v2211, 1.442695
      %v2687 = vpow.pop %v2686
      %v2688 = vmul.f32 %v2212, 1.442695
      %v2689 = vpow.pop %v2688
      %v2690 = vmul.f32 %v2213, 1.442695
      %v2691 = vpow.pop %v2690
      %v2692 = vmul.f32 %v2214, 1.442695
      %v2693 = vpow.pop %v2692
      %v2694 = vmul.f32 %v2215, 1.442695
      %v2695 = vpow.pop %v2694
      %v2696 = vmul.f32 %v2216, 1.442695
      %v2697 = vpow.pop %v2696
      %v2698 = vmul.f32 %v2217, 1.442695
      %v2699 = vpow.pop %v2698
      %v2700 = vmul.f32 %v2218, 1.442695
      %v2701 = vpow.pop %v2700
      %v2702 = vmul.f32 %v2219, 1.442695
      %v2703 = vpow.pop %v2702
      %v2704 = vmul.f32 %v2220, 1.442695
      %v2705 = vpow.pop %v2704
      %v2706 = vmul.f32 %v2221, 1.442695
      %v2707 = vpow.pop %v2706
      %v2708 = vmul.f32 %v2222, 1.442695
      %v2709 = vpow.pop %v2708
      %v2710 = vmul.f32 %v2223, 1.442695
      %v2711 = vpow.pop %v2710
      %v2712 = vmul.f32 %v2224, 1.442695
      %v2713 = vpow.pop %v2712
      %v2714 = vmul.f32 %v2225, 1.442695
      %v2715 = vpow.pop %v2714
      %v2716 = vmul.f32 %v2226, 1.442695
      %v2717 = vpow.pop %v2716
      %v2718 = vmul.f32 %v2227, 1.442695
      %v2719 = vpow.pop %v2718
      %v2720 = vmul.f32 %v2228, 1.442695
      %v2721 = vpow.pop %v2720
      %v2722 = vmul.f32 %v2229, 1.442695
      %v2723 = vpow.pop %v2722
      %v2724 = vmul.f32 %v2230, 1.442695
      %v2725 = vpow.pop %v2724
      %v2726 = vmul.f32 %v2231, 1.442695
      %v2727 = vpow.pop %v2726
      %v2728 = vmul.f32 %v2232, 1.442695
      %v2729 = vpow.pop %v2728
      %v2730 = vmul.f32 %v2233, 1.442695
      %v2731 = vpow.pop %v2730
      %v2732 = vmul.f32 %v2234, 1.442695
      %v2733 = vpow.pop %v2732
      %v2734 = vmul.f32 %v2235, 1.442695
      %v2735 = vpow.pop %v2734
      %v2736 = vmul.f32 %v2236, 1.442695
      %v2737 = vpow.pop %v2736
      %v2738 = vmul.f32 %v2237, 1.442695
      %v2739 = vpow.pop %v2738
      %v2740 = vmul.f32 %v2238, 1.442695
      %v2741 = vpow.pop %v2740
      %v2742 = vmul.f32 %v2239, 1.442695
      %v2743 = vpow.pop %v2742
      %v2744 = vmul.f32 %v2240, 1.442695
      %v2745 = vpow.pop %v2744
      %v2746 = vmul.f32 %v2241, 1.442695
      %v2747 = vpow.pop %v2746
      %v2748 = vmul.f32 %v2242, 1.442695
      %v2749 = vpow.pop %v2748
      %v2750 = vmul.f32 %v2243, 1.442695
      %v2751 = vpow.pop %v2750
      %v2752 = vmul.f32 %v2244, 1.442695
      %v2753 = vpow.pop %v2752
      %v2754 = vmul.f32 %v2245, 1.442695
      %v2755 = vpow.pop %v2754
      %v2756 = vmul.f32 %v2246, 1.442695
      %v2757 = vpow.pop %v2756
      %v2758 = vmul.f32 %v2247, 1.442695
      %v2759 = vpow.pop %v2758
      %v2760 = vmul.f32 %v2248, 1.442695
      %v2761 = vpow.pop %v2760
      %v2762 = vmul.f32 %v2249, 1.442695
      %v2763 = vpow.pop %v2762
      %v2764 = vmul.f32 %v2250, 1.442695
      %v2765 = vpow.pop %v2764
      %v2766 = vmul.f32 %v2251, 1.442695
      %v2767 = vpow.pop %v2766
      %v2768 = vmul.f32 %v2252, 1.442695
      %v2769 = vpow.pop %v2768
      %v2770 = vmul.f32 %v2253, 1.442695
      %v2771 = vpow.pop %v2770
      %v2772 = vmul.f32 %v2254, 1.442695
      %v2773 = vpow.pop %v2772
      %v2774 = vmul.f32 %v2255, 1.442695
      %v2775 = vpow.pop %v2774
      %v2776 = vmul.f32 %v2256, 1.442695
      %v2777 = vpow.pop %v2776
      %v2778 = vmul.f32 %v2257, 1.442695
      %v2779 = vpow.pop %v2778
      %v2780 = vmul.f32 %v2258, 1.442695
      %v2781 = vpow.pop %v2780
      %v2782 = vmul.f32 %v2259, 1.442695
      %v2783 = vpow.pop %v2782
      %v2784 = vmul.f32 %v2260, 1.442695
      %v2785 = vpow.pop %v2784
      %v2786 = vmul.f32 %v2261, 1.442695
      %v2787 = vpow.pop %v2786
      %v2788 = vmul.f32 %v2262, 1.442695
      %v2789 = vpow.pop %v2788
      %v2790 = vmul.f32 %v2263, 1.442695
      %v2791 = vpow.pop %v2790
      %v2792 = vmul.f32 %v2264, 1.442695
      %v2793 = vpow.pop %v2792
      %v2794 = vmul.f32 %v2265, 1.442695
      %v2795 = vpow.pop %v2794
      %v2796 = vmul.f32 %v2266, 1.442695
      %v2797 = vpow.pop %v2796
      %v2798 = vmul.f32 %v2267, 1.442695
      %v2799 = vpow.pop %v2798
      %v2800 = vmul.f32 %v2268, 1.442695
      %v2801 = vpow.pop %v2800
      %v2802 = vmul.f32 %v2269, 1.442695
      %v2803 = vpow.pop %v2802
      %v2804 = vmul.f32 %v2270, 1.442695
      %v2805 = vpow.pop %v2804
      %v2806 = vmul.f32 %v2271, 1.442695
      %v2807 = vpow.pop %v2806
      %v2808 = vmul.f32 %v2272, 1.442695
      %v2809 = vpow.pop %v2808
      %v2810 = vmul.f32 %v2273, 1.442695
      %v2811 = vpow.pop %v2810
      %v2812 = vmul.f32 %v2274, 1.442695
      %v2813 = vpow.pop %v2812
      %v2814 = vmul.f32 %v2275, 1.442695
      %v2815 = vpow.pop %v2814
      %v2816 = vmul.f32 %v2276, 1.442695
      %v2817 = vpow.pop %v2816
      %v2818 = vmul.f32 %v2277, 1.442695
      %v2819 = vpow.pop %v2818
      %v2820 = vmul.f32 %v2278, 1.442695
      %v2821 = vpow.pop %v2820
      %v2822 = vmul.f32 %v2279, 1.442695
      %v2823 = vpow.pop %v2822
      %v2824 = vmul.f32 %v2280, 1.442695
      %v2825 = vpow.pop %v2824
      %v2826 = vmul.f32 %v2281, 1.442695
      %v2827 = vpow.pop %v2826
      %v2828 = vmul.f32 %v2282, 1.442695
      %v2829 = vpow.pop %v2828
      %v2830 = vmul.f32 %v2283, 1.442695
      %v2831 = vpow.pop %v2830
      %v2832 = vmul.f32 %v2284, 1.442695
      %v2833 = vpow.pop %v2832
      %v2834 = vmul.f32 %v2285, 1.442695
      %v2835 = vpow.pop %v2834
      %v2836 = vmul.f32 %v2286, 1.442695
      %v2837 = vpow.pop %v2836
      %v2838 = vmul.f32 %v2287, 1.442695
      %v2839 = vpow.pop %v2838
      %v2840 = vmul.f32 %v2288, 1.442695
      %v2841 = vpow.pop %v2840
      %v2842 = vmul.f32 %v2289, 1.442695
      %v2843 = vpow.pop %v2842
      %v2844 = vmul.f32 %v2290, 1.442695
      %v2845 = vpow.pop %v2844
      %v2846 = vmul.f32 %v2291, 1.442695
      %v2847 = vpow.pop %v2846
      %v2848 = vmul.f32 %v2292, 1.442695
      %v2849 = vpow.pop %v2848
      %v2850 = vmul.f32 %v2293, 1.442695
      %v2851 = vpow.pop %v2850
      %v2852 = vmul.f32 %v2294, 1.442695
      %v2853 = vpow.pop %v2852
      %v2854 = vmul.f32 %v2295, 1.442695
      %v2855 = vpow.pop %v2854
      %v2856 = vmul.f32 %v2296, 1.442695
      %v2857 = vpow.pop %v2856
      %v2858 = vmul.f32 %v2297, 1.442695
      %v2859 = vpow.pop %v2858
      %v2860 = vmul.f32 %v2298, 1.442695
      %v2861 = vpow.pop %v2860
      %v2862 = vmul.f32 %v2299, 1.442695
      %v2863 = vpow.pop %v2862
      %v2864 = vmul.f32 %v2300, 1.442695
      %v2865 = vpow.pop %v2864
      %v2866 = vmul.f32 %v2301, 1.442695
      %v2867 = vpow.pop %v2866
      %v2868 = vmul.f32 %v2302, 1.442695
      %v2869 = vpow.pop %v2868
      %v2870 = vmul.f32 %v2303, 1.442695
      %v2871 = vpow.pop %v2870
      %v2872 = vmul.f32 %v2304, 1.442695
      %v2873 = vpow.pop %v2872
      %v2874 = vmul.f32 %v2305, 1.442695
      %v2875 = vpow.pop %v2874
      %v2876 = vmul.f32 %v2306, 1.442695
      %v2877 = vpow.pop %v2876
      %v2878 = vmul.f32 %v2307, 1.442695
      %v2879 = vpow.pop %v2878
      %v2880 = vmul.f32 %v2308, 1.442695
      %v2881 = vpow.pop %v2880
      %v2882 = vmul.f32 %v2309, 1.442695
      %v2883 = vpow.pop %v2882
      %v2884 = vmul.f32 %v2310, 1.442695
      %v2885 = vpow.pop %v2884
      %v2886 = vmul.f32 %v2311, 1.442695
      %v2887 = vpow.pop %v2886
      %v2888 = vmul.f32 %v2312, 1.442695
      %v2889 = vpow.pop %v2888
      %v2890 = vmul.f32 %v2313, 1.442695
      %v2891 = vpow.pop %v2890
      %v2892 = vmul.f32 %v2314, 1.442695
      %v2893 = vpow.pop %v2892
      %v2894 = vmul.f32 %v2315, 1.442695
      %v2895 = vpow.pop %v2894
      %v2896 = vmul.f32 %v2316, 1.442695
      %v2897 = vpow.pop %v2896
      %v2898 = vmul.f32 %v2317, 1.442695
      %v2899 = vpow.pop %v2898
      %v2900 = vmul.f32 %v2318, 1.442695
      %v2901 = vpow.pop %v2900
      %v2902 = vmul.f32 %v2319, 1.442695
      %v2903 = vpow.pop %v2902
      %v2904 = vmul.f32 %v2320, 1.442695
      %v2905 = vpow.pop %v2904
      %v2906 = vmul.f32 %v2321, 1.442695
      %v2907 = vpow.pop %v2906
      %v2908 = vmul.f32 %v2322, 1.442695
      %v2909 = vpow.pop %v2908
      %v2910 = vmul.f32 %v2323, 1.442695
      %v2911 = vpow.pop %v2910
      %v2912 = vmul.f32 %v2324, 1.442695
      %v2913 = vpow.pop %v2912
      %v2914 = vmul.f32 %v2325, 1.442695
      %v2915 = vpow.pop %v2914
      %v2916 = vmul.f32 %v2326, 1.442695
      %v2917 = vpow.pop %v2916
      %v2918 = vmul.f32 %v2327, 1.442695
      %v2919 = vpow.pop %v2918
      %v2920 = vmul.f32 %v2328, 1.442695
      %v2921 = vpow.pop %v2920
      %v2922 = vmul.f32 %v2329, 1.442695
      %v2923 = vpow.pop %v2922
      %v2924 = vmul.f32 %v2330, 1.442695
      %v2925 = vpow.pop %v2924
      %v2926 = vmul.f32 %v2331, 1.442695
      %v2927 = vpow.pop %v2926
      %v2928 = vmul.f32 %v2332, 1.442695
      %v2929 = vpow.pop %v2928
      %v2930 = vmul.f32 %v2333, 1.442695
      %v2931 = vpow.pop %v2930
      %v2932 = vmul.f32 %v2334, 1.442695
      %v2933 = vpow.pop %v2932
      %v2934 = vmul.f32 %v2335, 1.442695
      %v2935 = vpow.pop %v2934
      %v2936 = vmul.f32 %v2336, 1.442695
      %v2937 = vpow.pop %v2936
      %v2938 = vmul.f32 %v2337, 1.442695
      %v2939 = vpow.pop %v2938
      %v2940 = vmul.f32 %v2338, 1.442695
      %v2941 = vpow.pop %v2940
      %v2942 = vmul.f32 %v2339, 1.442695
      %v2943 = vpow.pop %v2942
      %v2944 = vmul.f32 %v2340, 1.442695
      %v2945 = vpow.pop %v2944
      %v2946 = vmul.f32 %v2341, 1.442695
      %v2947 = vpow.pop %v2946
      %v2948 = vmul.f32 %v2342, 1.442695
      %v2949 = vpow.pop %v2948
      %v2950 = vmul.f32 %v2343, 1.442695
      %v2951 = vpow.pop %v2950
      %v2952 = vmul.f32 %v2344, 1.442695
      %v2953 = vpow.pop %v2952
      %v2954 = vmul.f32 %v2345, 1.442695
      %v2955 = vpow.pop %v2954
      %v2956 = vmul.f32 %v2346, 1.442695
      %v2957 = vpow.pop %v2956
      %v2958 = vmul.f32 %v2347, 1.442695
      %v2959 = vpow.pop %v2958
      %v2960 = vmul.f32 %v2348, 1.442695
      %v2961 = vpow.pop %v2960
      %v2962 = vmul.f32 %v2349, 1.442695
      %v2963 = vpow.pop %v2962
      %v2964 = vmul.f32 %v2350, 1.442695
      %v2965 = vpow.pop %v2964
      %v2966 = vmul.f32 %v2351, 1.442695
      %v2967 = vpow.pop %v2966
      %v2968 = vmul.f32 %v2352, 1.442695
      %v2969 = vpow.pop %v2968
      %v2970 = vmul.f32 %v2353, 1.442695
      %v2971 = vpow.pop %v2970
      %v2972 = vmul.f32 %v2354, 1.442695
      %v2973 = vpow.pop %v2972
      %v2974 = vmul.f32 %v2355, 1.442695
      %v2975 = vpow.pop %v2974
      %v2976 = vmul.f32 %v2356, 1.442695
      %v2977 = vpow.pop %v2976
      %v2978 = vmul.f32 %v2357, 1.442695
      %v2979 = vpow.pop %v2978
      %v2980 = vmul.f32 %v2358, 1.442695
      %v2981 = vpow.pop %v2980
      %v2982 = vmul.f32 %v2359, 1.442695
      %v2983 = vpow.pop %v2982
      %v2984 = vmul.f32 %v2360, 1.442695
      %v2985 = vpow.pop %v2984
      %v2986 = vmul.f32 %v2361, 1.442695
      %v2987 = vpow.pop %v2986
      %v2988 = vmul.f32 %v2362, 1.442695
      %v2989 = vpow.pop %v2988
      %v2990 = vmul.f32 %v2363, 1.442695
      %v2991 = vpow.pop %v2990
      %v2992 = vmul.f32 %v2364, 1.442695
      %v2993 = vpow.pop %v2992
      %v2994 = vmul.f32 %v2365, 1.442695
      %v2995 = vpow.pop %v2994
      %v2996 = vmul.f32 %v2366, 1.442695
      %v2997 = vpow.pop %v2996
      %v2998 = vmul.f32 %v2367, 1.442695
      %v2999 = vpow.pop %v2998
      %v3000 = vmul.f32 %v2368, 1.442695
      %v3001 = vpow.pop %v3000
      %v3002 = vmul.f32 %v2369, 1.442695
      %v3003 = vpow.pop %v3002
      %v3004 = vmul.f32 %v2370, 1.442695
      %v3005 = vpow.pop %v3004
      %v3006 = vmul.f32 %v2371, 1.442695
      %v3007 = vpow.pop %v3006
      %v3008 = vmul.f32 %v2372, 1.442695
      %v3009 = vpow.pop %v3008
      %v3010 = vmul.f32 %v2373, 1.442695
      %v3011 = vpow.pop %v3010
      %v3012 = vmul.f32 %v2374, 1.442695
      %v3013 = vpow.pop %v3012
      %v3014 = vmul.f32 %v2375, 1.442695
      %v3015 = vpow.pop %v3014
      %v3016 = vadd.f32 %v2377, 1.0
      %v3017 = vadd.f32 %v2379, 1.0
      %v3018 = vadd.f32 %v2381, 1.0
      %v3019 = vadd.f32 %v2383, 1.0
      %v3020 = vadd.f32 %v2385, 1.0
      %v3021 = vadd.f32 %v2387, 1.0
      %v3022 = vadd.f32 %v2389, 1.0
      %v3023 = vadd.f32 %v2391, 1.0
      %v3024 = vadd.f32 %v2393, 1.0
      %v3025 = vadd.f32 %v2395, 1.0
      %v3026 = vadd.f32 %v2397, 1.0
      %v3027 = vadd.f32 %v2399, 1.0
      %v3028 = vadd.f32 %v2401, 1.0
      %v3029 = vadd.f32 %v2403, 1.0
      %v3030 = vadd.f32 %v2405, 1.0
      %v3031 = vadd.f32 %v2407, 1.0
      %v3032 = vadd.f32 %v2409, 1.0
      %v3033 = vadd.f32 %v2411, 1.0
      %v3034 = vadd.f32 %v2413, 1.0
      %v3035 = vadd.f32 %v2415, 1.0
      %v3036 = vadd.f32 %v2417, 1.0
      %v3037 = vadd.f32 %v2419, 1.0
      %v3038 = vadd.f32 %v2421, 1.0
      %v3039 = vadd.f32 %v2423, 1.0
      %v3040 = vadd.f32 %v2425, 1.0
      %v3041 = vadd.f32 %v2427, 1.0
      %v3042 = vadd.f32 %v2429, 1.0
      %v3043 = vadd.f32 %v2431, 1.0
      %v3044 = vadd.f32 %v2433, 1.0
      %v3045 = vadd.f32 %v2435, 1.0
      %v3046 = vadd.f32 %v2437, 1.0
      %v3047 = vadd.f32 %v2439, 1.0
      %v3048 = vadd.f32 %v2441, 1.0
      %v3049 = vadd.f32 %v2443, 1.0
      %v3050 = vadd.f32 %v2445, 1.0
      %v3051 = vadd.f32 %v2447, 1.0
      %v3052 = vadd.f32 %v2449, 1.0
      %v3053 = vadd.f32 %v2451, 1.0
      %v3054 = vadd.f32 %v2453, 1.0
      %v3055 = vadd.f32 %v2455, 1.0
      %v3056 = vadd.f32 %v2457, 1.0
      %v3057 = vadd.f32 %v2459, 1.0
      %v3058 = vadd.f32 %v2461, 1.0
      %v3059 = vadd.f32 %v2463, 1.0
      %v3060 = vadd.f32 %v2465, 1.0
      %v3061 = vadd.f32 %v2467, 1.0
      %v3062 = vadd.f32 %v2469, 1.0
      %v3063 = vadd.f32 %v2471, 1.0
      %v3064 = vadd.f32 %v2473, 1.0
      %v3065 = vadd.f32 %v2475, 1.0
      %v3066 = vadd.f32 %v2477, 1.0
      %v3067 = vadd.f32 %v2479, 1.0
      %v3068 = vadd.f32 %v2481, 1.0
      %v3069 = vadd.f32 %v2483, 1.0
      %v3070 = vadd.f32 %v2485, 1.0
      %v3071 = vadd.f32 %v2487, 1.0
      %v3072 = vadd.f32 %v2489, 1.0
      %v3073 = vadd.f32 %v2491, 1.0
      %v3074 = vadd.f32 %v2493, 1.0
      %v3075 = vadd.f32 %v2495, 1.0
      %v3076 = vadd.f32 %v2497, 1.0
      %v3077 = vadd.f32 %v2499, 1.0
      %v3078 = vadd.f32 %v2501, 1.0
      %v3079 = vadd.f32 %v2503, 1.0
      %v3080 = vadd.f32 %v2505, 1.0
      %v3081 = vadd.f32 %v2507, 1.0
      %v3082 = vadd.f32 %v2509, 1.0
      %v3083 = vadd.f32 %v2511, 1.0
      %v3084 = vadd.f32 %v2513, 1.0
      %v3085 = vadd.f32 %v2515, 1.0
      %v3086 = vadd.f32 %v2517, 1.0
      %v3087 = vadd.f32 %v2519, 1.0
      %v3088 = vadd.f32 %v2521, 1.0
      %v3089 = vadd.f32 %v2523, 1.0
      %v3090 = vadd.f32 %v2525, 1.0
      %v3091 = vadd.f32 %v2527, 1.0
      %v3092 = vadd.f32 %v2529, 1.0
      %v3093 = vadd.f32 %v2531, 1.0
      %v3094 = vadd.f32 %v2533, 1.0
      %v3095 = vadd.f32 %v2535, 1.0
      %v3096 = vadd.f32 %v2537, 1.0
      %v3097 = vadd.f32 %v2539, 1.0
      %v3098 = vadd.f32 %v2541, 1.0
      %v3099 = vadd.f32 %v2543, 1.0
      %v3100 = vadd.f32 %v2545, 1.0
      %v3101 = vadd.f32 %v2547, 1.0
      %v3102 = vadd.f32 %v2549, 1.0
      %v3103 = vadd.f32 %v2551, 1.0
      %v3104 = vadd.f32 %v2553, 1.0
      %v3105 = vadd.f32 %v2555, 1.0
      %v3106 = vadd.f32 %v2557, 1.0
      %v3107 = vadd.f32 %v2559, 1.0
      %v3108 = vadd.f32 %v2561, 1.0
      %v3109 = vadd.f32 %v2563, 1.0
      %v3110 = vadd.f32 %v2565, 1.0
      %v3111 = vadd.f32 %v2567, 1.0
      %v3112 = vadd.f32 %v2569, 1.0
      %v3113 = vadd.f32 %v2571, 1.0
      %v3114 = vadd.f32 %v2573, 1.0
      %v3115 = vadd.f32 %v2575, 1.0
      %v3116 = vadd.f32 %v2577, 1.0
      %v3117 = vadd.f32 %v2579, 1.0
      %v3118 = vadd.f32 %v2581, 1.0
      %v3119 = vadd.f32 %v2583, 1.0
      %v3120 = vadd.f32 %v2585, 1.0
      %v3121 = vadd.f32 %v2587, 1.0
      %v3122 = vadd.f32 %v2589, 1.0
      %v3123 = vadd.f32 %v2591, 1.0
      %v3124 = vadd.f32 %v2593, 1.0
      %v3125 = vadd.f32 %v2595, 1.0
      %v3126 = vadd.f32 %v2597, 1.0
      %v3127 = vadd.f32 %v2599, 1.0
      %v3128 = vadd.f32 %v2601, 1.0
      %v3129 = vadd.f32 %v2603, 1.0
      %v3130 = vadd.f32 %v2605, 1.0
      %v3131 = vadd.f32 %v2607, 1.0
      %v3132 = vadd.f32 %v2609, 1.0
      %v3133 = vadd.f32 %v2611, 1.0
      %v3134 = vadd.f32 %v2613, 1.0
      %v3135 = vadd.f32 %v2615, 1.0
      %v3136 = vadd.f32 %v2617, 1.0
      %v3137 = vadd.f32 %v2619, 1.0
      %v3138 = vadd.f32 %v2621, 1.0
      %v3139 = vadd.f32 %v2623, 1.0
      %v3140 = vadd.f32 %v2625, 1.0
      %v3141 = vadd.f32 %v2627, 1.0
      %v3142 = vadd.f32 %v2629, 1.0
      %v3143 = vadd.f32 %v2631, 1.0
      %v3144 = vadd.f32 %v2633, 1.0
      %v3145 = vadd.f32 %v2635, 1.0
      %v3146 = vadd.f32 %v2637, 1.0
      %v3147 = vadd.f32 %v2639, 1.0
      %v3148 = vadd.f32 %v2641, 1.0
      %v3149 = vadd.f32 %v2643, 1.0
      %v3150 = vadd.f32 %v2645, 1.0
      %v3151 = vadd.f32 %v2647, 1.0
      %v3152 = vadd.f32 %v2649, 1.0
      %v3153 = vadd.f32 %v2651, 1.0
      %v3154 = vadd.f32 %v2653, 1.0
      %v3155 = vadd.f32 %v2655, 1.0
      %v3156 = vadd.f32 %v2657, 1.0
      %v3157 = vadd.f32 %v2659, 1.0
      %v3158 = vadd.f32 %v2661, 1.0
      %v3159 = vadd.f32 %v2663, 1.0
      %v3160 = vadd.f32 %v2665, 1.0
      %v3161 = vadd.f32 %v2667, 1.0
      %v3162 = vadd.f32 %v2669, 1.0
      %v3163 = vadd.f32 %v2671, 1.0
      %v3164 = vadd.f32 %v2673, 1.0
      %v3165 = vadd.f32 %v2675, 1.0
      %v3166 = vadd.f32 %v2677, 1.0
      %v3167 = vadd.f32 %v2679, 1.0
      %v3168 = vadd.f32 %v2681, 1.0
      %v3169 = vadd.f32 %v2683, 1.0
      %v3170 = vadd.f32 %v2685, 1.0
      %v3171 = vadd.f32 %v2687, 1.0
      %v3172 = vadd.f32 %v2689, 1.0
      %v3173 = vadd.f32 %v2691, 1.0
      %v3174 = vadd.f32 %v2693, 1.0
      %v3175 = vadd.f32 %v2695, 1.0
      %v3176 = vadd.f32 %v2697, 1.0
      %v3177 = vadd.f32 %v2699, 1.0
      %v3178 = vadd.f32 %v2701, 1.0
      %v3179 = vadd.f32 %v2703, 1.0
      %v3180 = vadd.f32 %v2705, 1.0
      %v3181 = vadd.f32 %v2707, 1.0
      %v3182 = vadd.f32 %v2709, 1.0
      %v3183 = vadd.f32 %v2711, 1.0
      %v3184 = vadd.f32 %v2713, 1.0
      %v3185 = vadd.f32 %v2715, 1.0
      %v3186 = vadd.f32 %v2717, 1.0
      %v3187 = vadd.f32 %v2719, 1.0
      %v3188 = vadd.f32 %v2721, 1.0
      %v3189 = vadd.f32 %v2723, 1.0
      %v3190 = vadd.f32 %v2725, 1.0
      %v3191 = vadd.f32 %v2727, 1.0
      %v3192 = vadd.f32 %v2729, 1.0
      %v3193 = vadd.f32 %v2731, 1.0
      %v3194 = vadd.f32 %v2733, 1.0
      %v3195 = vadd.f32 %v2735, 1.0
      %v3196 = vadd.f32 %v2737, 1.0
      %v3197 = vadd.f32 %v2739, 1.0
      %v3198 = vadd.f32 %v2741, 1.0
      %v3199 = vadd.f32 %v2743, 1.0
      %v3200 = vadd.f32 %v2745, 1.0
      %v3201 = vadd.f32 %v2747, 1.0
      %v3202 = vadd.f32 %v2749, 1.0
      %v3203 = vadd.f32 %v2751, 1.0
      %v3204 = vadd.f32 %v2753, 1.0
      %v3205 = vadd.f32 %v2755, 1.0
      %v3206 = vadd.f32 %v2757, 1.0
      %v3207 = vadd.f32 %v2759, 1.0
      %v3208 = vadd.f32 %v2761, 1.0
      %v3209 = vadd.f32 %v2763, 1.0
      %v3210 = vadd.f32 %v2765, 1.0
      %v3211 = vadd.f32 %v2767, 1.0
      %v3212 = vadd.f32 %v2769, 1.0
      %v3213 = vadd.f32 %v2771, 1.0
      %v3214 = vadd.f32 %v2773, 1.0
      %v3215 = vadd.f32 %v2775, 1.0
      %v3216 = vadd.f32 %v2777, 1.0
      %v3217 = vadd.f32 %v2779, 1.0
      %v3218 = vadd.f32 %v2781, 1.0
      %v3219 = vadd.f32 %v2783, 1.0
      %v3220 = vadd.f32 %v2785, 1.0
      %v3221 = vadd.f32 %v2787, 1.0
      %v3222 = vadd.f32 %v2789, 1.0
      %v3223 = vadd.f32 %v2791, 1.0
      %v3224 = vadd.f32 %v2793, 1.0
      %v3225 = vadd.f32 %v2795, 1.0
      %v3226 = vadd.f32 %v2797, 1.0
      %v3227 = vadd.f32 %v2799, 1.0
      %v3228 = vadd.f32 %v2801, 1.0
      %v3229 = vadd.f32 %v2803, 1.0
      %v3230 = vadd.f32 %v2805, 1.0
      %v3231 = vadd.f32 %v2807, 1.0
      %v3232 = vadd.f32 %v2809, 1.0
      %v3233 = vadd.f32 %v2811, 1.0
      %v3234 = vadd.f32 %v2813, 1.0
      %v3235 = vadd.f32 %v2815, 1.0
      %v3236 = vadd.f32 %v2817, 1.0
      %v3237 = vadd.f32 %v2819, 1.0
      %v3238 = vadd.f32 %v2821, 1.0
      %v3239 = vadd.f32 %v2823, 1.0
      %v3240 = vadd.f32 %v2825, 1.0
      %v3241 = vadd.f32 %v2827, 1.0
      %v3242 = vadd.f32 %v2829, 1.0
      %v3243 = vadd.f32 %v2831, 1.0
      %v3244 = vadd.f32 %v2833, 1.0
      %v3245 = vadd.f32 %v2835, 1.0
      %v3246 = vadd.f32 %v2837, 1.0
      %v3247 = vadd.f32 %v2839, 1.0
      %v3248 = vadd.f32 %v2841, 1.0
      %v3249 = vadd.f32 %v2843, 1.0
      %v3250 = vadd.f32 %v2845, 1.0
      %v3251 = vadd.f32 %v2847, 1.0
      %v3252 = vadd.f32 %v2849, 1.0
      %v3253 = vadd.f32 %v2851, 1.0
      %v3254 = vadd.f32 %v2853, 1.0
      %v3255 = vadd.f32 %v2855, 1.0
      %v3256 = vadd.f32 %v2857, 1.0
      %v3257 = vadd.f32 %v2859, 1.0
      %v3258 = vadd.f32 %v2861, 1.0
      %v3259 = vadd.f32 %v2863, 1.0
      %v3260 = vadd.f32 %v2865, 1.0
      %v3261 = vadd.f32 %v2867, 1.0
      %v3262 = vadd.f32 %v2869, 1.0
      %v3263 = vadd.f32 %v2871, 1.0
      %v3264 = vadd.f32 %v2873, 1.0
      %v3265 = vadd.f32 %v2875, 1.0
      %v3266 = vadd.f32 %v2877, 1.0
      %v3267 = vadd.f32 %v2879, 1.0
      %v3268 = vadd.f32 %v2881, 1.0
      %v3269 = vadd.f32 %v2883, 1.0
      %v3270 = vadd.f32 %v2885, 1.0
      %v3271 = vadd.f32 %v2887, 1.0
      %v3272 = vadd.f32 %v2889, 1.0
      %v3273 = vadd.f32 %v2891, 1.0
      %v3274 = vadd.f32 %v2893, 1.0
      %v3275 = vadd.f32 %v2895, 1.0
      %v3276 = vadd.f32 %v2897, 1.0
      %v3277 = vadd.f32 %v2899, 1.0
      %v3278 = vadd.f32 %v2901, 1.0
      %v3279 = vadd.f32 %v2903, 1.0
      %v3280 = vadd.f32 %v2905, 1.0
      %v3281 = vadd.f32 %v2907, 1.0
      %v3282 = vadd.f32 %v2909, 1.0
      %v3283 = vadd.f32 %v2911, 1.0
      %v3284 = vadd.f32 %v2913, 1.0
      %v3285 = vadd.f32 %v2915, 1.0
      %v3286 = vadd.f32 %v2917, 1.0
      %v3287 = vadd.f32 %v2919, 1.0
      %v3288 = vadd.f32 %v2921, 1.0
      %v3289 = vadd.f32 %v2923, 1.0
      %v3290 = vadd.f32 %v2925, 1.0
      %v3291 = vadd.f32 %v2927, 1.0
      %v3292 = vadd.f32 %v2929, 1.0
      %v3293 = vadd.f32 %v2931, 1.0
      %v3294 = vadd.f32 %v2933, 1.0
      %v3295 = vadd.f32 %v2935, 1.0
      %v3296 = vadd.f32 %v2937, 1.0
      %v3297 = vadd.f32 %v2939, 1.0
      %v3298 = vadd.f32 %v2941, 1.0
      %v3299 = vadd.f32 %v2943, 1.0
      %v3300 = vadd.f32 %v2945, 1.0
      %v3301 = vadd.f32 %v2947, 1.0
      %v3302 = vadd.f32 %v2949, 1.0
      %v3303 = vadd.f32 %v2951, 1.0
      %v3304 = vadd.f32 %v2953, 1.0
      %v3305 = vadd.f32 %v2955, 1.0
      %v3306 = vadd.f32 %v2957, 1.0
      %v3307 = vadd.f32 %v2959, 1.0
      %v3308 = vadd.f32 %v2961, 1.0
      %v3309 = vadd.f32 %v2963, 1.0
      %v3310 = vadd.f32 %v2965, 1.0
      %v3311 = vadd.f32 %v2967, 1.0
      %v3312 = vadd.f32 %v2969, 1.0
      %v3313 = vadd.f32 %v2971, 1.0
      %v3314 = vadd.f32 %v2973, 1.0
      %v3315 = vadd.f32 %v2975, 1.0
      %v3316 = vadd.f32 %v2977, 1.0
      %v3317 = vadd.f32 %v2979, 1.0
      %v3318 = vadd.f32 %v2981, 1.0
      %v3319 = vadd.f32 %v2983, 1.0
      %v3320 = vadd.f32 %v2985, 1.0
      %v3321 = vadd.f32 %v2987, 1.0
      %v3322 = vadd.f32 %v2989, 1.0
      %v3323 = vadd.f32 %v2991, 1.0
      %v3324 = vadd.f32 %v2993, 1.0
      %v3325 = vadd.f32 %v2995, 1.0
      %v3326 = vadd.f32 %v2997, 1.0
      %v3327 = vadd.f32 %v2999, 1.0
      %v3328 = vadd.f32 %v3001, 1.0
      %v3329 = vadd.f32 %v3003, 1.0
      %v3330 = vadd.f32 %v3005, 1.0
      %v3331 = vadd.f32 %v3007, 1.0
      %v3332 = vadd.f32 %v3009, 1.0
      %v3333 = vadd.f32 %v3011, 1.0
      %v3334 = vadd.f32 %v3013, 1.0
      %v3335 = vadd.f32 %v3015, 1.0
      %v3336 = vrcp.pop %v3016
      %v3337 = vrcp.pop %v3017
      %v3338 = vrcp.pop %v3018
      %v3339 = vrcp.pop %v3019
      %v3340 = vrcp.pop %v3020
      %v3341 = vrcp.pop %v3021
      %v3342 = vrcp.pop %v3022
      %v3343 = vrcp.pop %v3023
      %v3344 = vrcp.pop %v3024
      %v3345 = vrcp.pop %v3025
      %v3346 = vrcp.pop %v3026
      %v3347 = vrcp.pop %v3027
      %v3348 = vrcp.pop %v3028
      %v3349 = vrcp.pop %v3029
      %v3350 = vrcp.pop %v3030
      %v3351 = vrcp.pop %v3031
      %v3352 = vrcp.pop %v3032
      %v3353 = vrcp.pop %v3033
      %v3354 = vrcp.pop %v3034
      %v3355 = vrcp.pop %v3035
      %v3356 = vrcp.pop %v3036
      %v3357 = vrcp.pop %v3037
      %v3358 = vrcp.pop %v3038
      %v3359 = vrcp.pop %v3039
      %v3360 = vrcp.pop %v3040
      %v3361 = vrcp.pop %v3041
      %v3362 = vrcp.pop %v3042
      %v3363 = vrcp.pop %v3043
      %v3364 = vrcp.pop %v3044
      %v3365 = vrcp.pop %v3045
      %v3366 = vrcp.pop %v3046
      %v3367 = vrcp.pop %v3047
      %v3368 = vrcp.pop %v3048
      %v3369 = vrcp.pop %v3049
      %v3370 = vrcp.pop %v3050
      %v3371 = vrcp.pop %v3051
      %v3372 = vrcp.pop %v3052
      %v3373 = vrcp.pop %v3053
      %v3374 = vrcp.pop %v3054
      %v3375 = vrcp.pop %v3055
      %v3376 = vrcp.pop %v3056
      %v3377 = vrcp.pop %v3057
      %v3378 = vrcp.pop %v3058
      %v3379 = vrcp.pop %v3059
      %v3380 = vrcp.pop %v3060
      %v3381 = vrcp.pop %v3061
      %v3382 = vrcp.pop %v3062
      %v3383 = vrcp.pop %v3063
      %v3384 = vrcp.pop %v3064
      %v3385 = vrcp.pop %v3065
      %v3386 = vrcp.pop %v3066
      %v3387 = vrcp.pop %v3067
      %v3388 = vrcp.pop %v3068
      %v3389 = vrcp.pop %v3069
      %v3390 = vrcp.pop %v3070
      %v3391 = vrcp.pop %v3071
      %v3392 = vrcp.pop %v3072
      %v3393 = vrcp.pop %v3073
      %v3394 = vrcp.pop %v3074
      %v3395 = vrcp.pop %v3075
      %v3396 = vrcp.pop %v3076
      %v3397 = vrcp.pop %v3077
      %v3398 = vrcp.pop %v3078
      %v3399 = vrcp.pop %v3079
      %v3400 = vrcp.pop %v3080
      %v3401 = vrcp.pop %v3081
      %v3402 = vrcp.pop %v3082
      %v3403 = vrcp.pop %v3083
      %v3404 = vrcp.pop %v3084
      %v3405 = vrcp.pop %v3085
      %v3406 = vrcp.pop %v3086
      %v3407 = vrcp.pop %v3087
      %v3408 = vrcp.pop %v3088
      %v3409 = vrcp.pop %v3089
      %v3410 = vrcp.pop %v3090
      %v3411 = vrcp.pop %v3091
      %v3412 = vrcp.pop %v3092
      %v3413 = vrcp.pop %v3093
      %v3414 = vrcp.pop %v3094
      %v3415 = vrcp.pop %v3095
      %v3416 = vrcp.pop %v3096
      %v3417 = vrcp.pop %v3097
      %v3418 = vrcp.pop %v3098
      %v3419 = vrcp.pop %v3099
      %v3420 = vrcp.pop %v3100
      %v3421 = vrcp.pop %v3101
      %v3422 = vrcp.pop %v3102
      %v3423 = vrcp.pop %v3103
      %v3424 = vrcp.pop %v3104
      %v3425 = vrcp.pop %v3105
      %v3426 = vrcp.pop %v3106
      %v3427 = vrcp.pop %v3107
      %v3428 = vrcp.pop %v3108
      %v3429 = vrcp.pop %v3109
      %v3430 = vrcp.pop %v3110
      %v3431 = vrcp.pop %v3111
      %v3432 = vrcp.pop %v3112
      %v3433 = vrcp.pop %v3113
      %v3434 = vrcp.pop %v3114
      %v3435 = vrcp.pop %v3115
      %v3436 = vrcp.pop %v3116
      %v3437 = vrcp.pop %v3117
      %v3438 = vrcp.pop %v3118
      %v3439 = vrcp.pop %v3119
      %v3440 = vrcp.pop %v3120
      %v3441 = vrcp.pop %v3121
      %v3442 = vrcp.pop %v3122
      %v3443 = vrcp.pop %v3123
      %v3444 = vrcp.pop %v3124
      %v3445 = vrcp.pop %v3125
      %v3446 = vrcp.pop %v3126
      %v3447 = vrcp.pop %v3127
      %v3448 = vrcp.pop %v3128
      %v3449 = vrcp.pop %v3129
      %v3450 = vrcp.pop %v3130
      %v3451 = vrcp.pop %v3131
      %v3452 = vrcp.pop %v3132
      %v3453 = vrcp.pop %v3133
      %v3454 = vrcp.pop %v3134
      %v3455 = vrcp.pop %v3135
      %v3456 = vrcp.pop %v3136
      %v3457 = vrcp.pop %v3137
      %v3458 = vrcp.pop %v3138
      %v3459 = vrcp.pop %v3139
      %v3460 = vrcp.pop %v3140
      %v3461 = vrcp.pop %v3141
      %v3462 = vrcp.pop %v3142
      %v3463 = vrcp.pop %v3143
      %v3464 = vrcp.pop %v3144
      %v3465 = vrcp.pop %v3145
      %v3466 = vrcp.pop %v3146
      %v3467 = vrcp.pop %v3147
      %v3468 = vrcp.pop %v3148
      %v3469 = vrcp.pop %v3149
      %v3470 = vrcp.pop %v3150
      %v3471 = vrcp.pop %v3151
      %v3472 = vrcp.pop %v3152
      %v3473 = vrcp.pop %v3153
      %v3474 = vrcp.pop %v3154
      %v3475 = vrcp.pop %v3155
      %v3476 = vrcp.pop %v3156
      %v3477 = vrcp.pop %v3157
      %v3478 = vrcp.pop %v3158
      %v3479 = vrcp.pop %v3159
      %v3480 = vrcp.pop %v3160
      %v3481 = vrcp.pop %v3161
      %v3482 = vrcp.pop %v3162
      %v3483 = vrcp.pop %v3163
      %v3484 = vrcp.pop %v3164
      %v3485 = vrcp.pop %v3165
      %v3486 = vrcp.pop %v3166
      %v3487 = vrcp.pop %v3167
      %v3488 = vrcp.pop %v3168
      %v3489 = vrcp.pop %v3169
      %v3490 = vrcp.pop %v3170
      %v3491 = vrcp.pop %v3171
      %v3492 = vrcp.pop %v3172
      %v3493 = vrcp.pop %v3173
      %v3494 = vrcp.pop %v3174
      %v3495 = vrcp.pop %v3175
      %v3496 = vrcp.pop %v3176
      %v3497 = vrcp.pop %v3177
      %v3498 = vrcp.pop %v3178
      %v3499 = vrcp.pop %v3179
      %v3500 = vrcp.pop %v3180
      %v3501 = vrcp.pop %v3181
      %v3502 = vrcp.pop %v3182
      %v3503 = vrcp.pop %v3183
      %v3504 = vrcp.pop %v3184
      %v3505 = vrcp.pop %v3185
      %v3506 = vrcp.pop %v3186
      %v3507 = vrcp.pop %v3187
      %v3508 = vrcp.pop %v3188
      %v3509 = vrcp.pop %v3189
      %v3510 = vrcp.pop %v3190
      %v3511 = vrcp.pop %v3191
      %v3512 = vrcp.pop %v3192
      %v3513 = vrcp.pop %v3193
      %v3514 = vrcp.pop %v3194
      %v3515 = vrcp.pop %v3195
      %v3516 = vrcp.pop %v3196
      %v3517 = vrcp.pop %v3197
      %v3518 = vrcp.pop %v3198
      %v3519 = vrcp.pop %v3199
      %v3520 = vrcp.pop %v3200
      %v3521 = vrcp.pop %v3201
      %v3522 = vrcp.pop %v3202
      %v3523 = vrcp.pop %v3203
      %v3524 = vrcp.pop %v3204
      %v3525 = vrcp.pop %v3205
      %v3526 = vrcp.pop %v3206
      %v3527 = vrcp.pop %v3207
      %v3528 = vrcp.pop %v3208
      %v3529 = vrcp.pop %v3209
      %v3530 = vrcp.pop %v3210
      %v3531 = vrcp.pop %v3211
      %v3532 = vrcp.pop %v3212
      %v3533 = vrcp.pop %v3213
      %v3534 = vrcp.pop %v3214
      %v3535 = vrcp.pop %v3215
      %v3536 = vrcp.pop %v3216
      %v3537 = vrcp.pop %v3217
      %v3538 = vrcp.pop %v3218
      %v3539 = vrcp.pop %v3219
      %v3540 = vrcp.pop %v3220
      %v3541 = vrcp.pop %v3221
      %v3542 = vrcp.pop %v3222
      %v3543 = vrcp.pop %v3223
      %v3544 = vrcp.pop %v3224
      %v3545 = vrcp.pop %v3225
      %v3546 = vrcp.pop %v3226
      %v3547 = vrcp.pop %v3227
      %v3548 = vrcp.pop %v3228
      %v3549 = vrcp.pop %v3229
      %v3550 = vrcp.pop %v3230
      %v3551 = vrcp.pop %v3231
      %v3552 = vrcp.pop %v3232
      %v3553 = vrcp.pop %v3233
      %v3554 = vrcp.pop %v3234
      %v3555 = vrcp.pop %v3235
      %v3556 = vrcp.pop %v3236
      %v3557 = vrcp.pop %v3237
      %v3558 = vrcp.pop %v3238
      %v3559 = vrcp.pop %v3239
      %v3560 = vrcp.pop %v3240
      %v3561 = vrcp.pop %v3241
      %v3562 = vrcp.pop %v3242
      %v3563 = vrcp.pop %v3243
      %v3564 = vrcp.pop %v3244
      %v3565 = vrcp.pop %v3245
      %v3566 = vrcp.pop %v3246
      %v3567 = vrcp.pop %v3247
      %v3568 = vrcp.pop %v3248
      %v3569 = vrcp.pop %v3249
      %v3570 = vrcp.pop %v3250
      %v3571 = vrcp.pop %v3251
      %v3572 = vrcp.pop %v3252
      %v3573 = vrcp.pop %v3253
      %v3574 = vrcp.pop %v3254
      %v3575 = vrcp.pop %v3255
      %v3576 = vrcp.pop %v3256
      %v3577 = vrcp.pop %v3257
      %v3578 = vrcp.pop %v3258
      %v3579 = vrcp.pop %v3259
      %v3580 = vrcp.pop %v3260
      %v3581 = vrcp.pop %v3261
      %v3582 = vrcp.pop %v3262
      %v3583 = vrcp.pop %v3263
      %v3584 = vrcp.pop %v3264
      %v3585 = vrcp.pop %v3265
      %v3586 = vrcp.pop %v3266
      %v3587 = vrcp.pop %v3267
      %v3588 = vrcp.pop %v3268
      %v3589 = vrcp.pop %v3269
      %v3590 = vrcp.pop %v3270
      %v3591 = vrcp.pop %v3271
      %v3592 = vrcp.pop %v3272
      %v3593 = vrcp.pop %v3273
      %v3594 = vrcp.pop %v3274
      %v3595 = vrcp.pop %v3275
      %v3596 = vrcp.pop %v3276
      %v3597 = vrcp.pop %v3277
      %v3598 = vrcp.pop %v3278
      %v3599 = vrcp.pop %v3279
      %v3600 = vrcp.pop %v3280
      %v3601 = vrcp.pop %v3281
      %v3602 = vrcp.pop %v3282
      %v3603 = vrcp.pop %v3283
      %v3604 = vrcp.pop %v3284
      %v3605 = vrcp.pop %v3285
      %v3606 = vrcp.pop %v3286
      %v3607 = vrcp.pop %v3287
      %v3608 = vrcp.pop %v3288
      %v3609 = vrcp.pop %v3289
      %v3610 = vrcp.pop %v3290
      %v3611 = vrcp.pop %v3291
      %v3612 = vrcp.pop %v3292
      %v3613 = vrcp.pop %v3293
      %v3614 = vrcp.pop %v3294
      %v3615 = vrcp.pop %v3295
      %v3616 = vrcp.pop %v3296
      %v3617 = vrcp.pop %v3297
      %v3618 = vrcp.pop %v3298
      %v3619 = vrcp.pop %v3299
      %v3620 = vrcp.pop %v3300
      %v3621 = vrcp.pop %v3301
      %v3622 = vrcp.pop %v3302
      %v3623 = vrcp.pop %v3303
      %v3624 = vrcp.pop %v3304
      %v3625 = vrcp.pop %v3305
      %v3626 = vrcp.pop %v3306
      %v3627 = vrcp.pop %v3307
      %v3628 = vrcp.pop %v3308
      %v3629 = vrcp.pop %v3309
      %v3630 = vrcp.pop %v3310
      %v3631 = vrcp.pop %v3311
      %v3632 = vrcp.pop %v3312
      %v3633 = vrcp.pop %v3313
      %v3634 = vrcp.pop %v3314
      %v3635 = vrcp.pop %v3315
      %v3636 = vrcp.pop %v3316
      %v3637 = vrcp.pop %v3317
      %v3638 = vrcp.pop %v3318
      %v3639 = vrcp.pop %v3319
      %v3640 = vrcp.pop %v3320
      %v3641 = vrcp.pop %v3321
      %v3642 = vrcp.pop %v3322
      %v3643 = vrcp.pop %v3323
      %v3644 = vrcp.pop %v3324
      %v3645 = vrcp.pop %v3325
      %v3646 = vrcp.pop %v3326
      %v3647 = vrcp.pop %v3327
      %v3648 = vrcp.pop %v3328
      %v3649 = vrcp.pop %v3329
      %v3650 = vrcp.pop %v3330
      %v3651 = vrcp.pop %v3331
      %v3652 = vrcp.pop %v3332
      %v3653 = vrcp.pop %v3333
      %v3654 = vrcp.pop %v3334
      %v3655 = vrcp.pop %v3335
      %v3656 = vmul.f32 %v1126, %v3336
      %v3657 = vmul.f32 %v1128, %v3337
      %v3658 = vmul.f32 %v1319, %v3338
      %v3659 = vmul.f32 %v1321, %v3339
      %v3660 = vmul.f32 %v1512, %v3340
      %v3661 = vmul.f32 %v1514, %v3341
      %v3662 = vmul.f32 %v1705, %v3342
      %v3663 = vmul.f32 %v1707, %v3343
      %v3664 = vmul.f32 %v1898, %v3344
      %v3665 = vmul.f32 %v1900, %v3345
      %v3666 = vmul.f32 %v1130, %v3346
      %v3667 = vmul.f32 %v1132, %v3347
      %v3668 = vmul.f32 %v1323, %v3348
      %v3669 = vmul.f32 %v1325, %v3349
      %v3670 = vmul.f32 %v1516, %v3350
      %v3671 = vmul.f32 %v1518, %v3351
      %v3672 = vmul.f32 %v1709, %v3352
      %v3673 = vmul.f32 %v1711, %v3353
      %v3674 = vmul.f32 %v1902, %v3354
      %v3675 = vmul.f32 %v1904, %v3355
      %v3676 = vmul.f32 %v1136, %v3356
      %v3677 = vmul.f32 %v1138, %v3357
      %v3678 = vmul.f32 %v1329, %v3358
      %v3679 = vmul.f32 %v1331, %v3359
      %v3680 = vmul.f32 %v1522, %v3360
      %v3681 = vmul.f32 %v1524, %v3361
      %v3682 = vmul.f32 %v1715, %v3362
      %v3683 = vmul.f32 %v1717, %v3363
      %v3684 = vmul.f32 %v1908, %v3364
      %v3685 = vmul.f32 %v1910, %v3365
      %v3686 = vmul.f32 %v1140, %v3366
      %v3687 = vmul.f32 %v1142, %v3367
      %v3688 = vmul.f32 %v1333, %v3368
      %v3689 = vmul.f32 %v1335, %v3369
      %v3690 = vmul.f32 %v1526, %v3370
      %v3691 = vmul.f32 %v1528, %v3371
      %v3692 = vmul.f32 %v1719, %v3372
      %v3693 = vmul.f32 %v1721, %v3373
      %v3694 = vmul.f32 %v1912, %v3374
      %v3695 = vmul.f32 %v1914, %v3375
      %v3696 = vmul.f32 %v1146, %v3376
      %v3697 = vmul.f32 %v1148, %v3377
      %v3698 = vmul.f32 %v1339, %v3378
      %v3699 = vmul.f32 %v1341, %v3379
      %v3700 = vmul.f32 %v1532, %v3380
      %v3701 = vmul.f32 %v1534, %v3381
      %v3702 = vmul.f32 %v1725, %v3382
      %v3703 = vmul.f32 %v1727, %v3383
      %v3704 = vmul.f32 %v1918, %v3384
      %v3705 = vmul.f32 %v1920, %v3385
      %v3706 = vmul.f32 %v1150, %v3386
      %v3707 = vmul.f32 %v1152, %v3387
      %v3708 = vmul.f32 %v1343, %v3388
      %v3709 = vmul.f32 %v1345, %v3389
      %v3710 = vmul.f32 %v1536, %v3390
      %v3711 = vmul.f32 %v1538, %v3391
      %v3712 = vmul.f32 %v1729, %v3392
      %v3713 = vmul.f32 %v1731, %v3393
      %v3714 = vmul.f32 %v1922, %v3394
      %v3715 = vmul.f32 %v1924, %v3395
      %v3716 = vmul.f32 %v1156, %v3396
      %v3717 = vmul.f32 %v1158, %v3397
      %v3718 = vmul.f32 %v1349, %v3398
      %v3719 = vmul.f32 %v1351, %v3399
      %v3720 = vmul.f32 %v1542, %v3400
      %v3721 = vmul.f32 %v1544, %v3401
      %v3722 = vmul.f32 %v1735, %v3402
      %v3723 = vmul.f32 %v1737, %v3403
      %v3724 = vmul.f32 %v1928, %v3404
      %v3725 = vmul.f32 %v1930, %v3405
      %v3726 = vmul.f32 %v1160, %v3406
      %v3727 = vmul.f32 %v1162, %v3407
      %v3728 = vmul.f32 %v1353, %v3408
      %v3729 = vmul.f32 %v1355, %v3409
      %v3730 = vmul.f32 %v1546, %v3410
      %v3731 = vmul.f32 %v1548, %v3411
      %v3732 = vmul.f32 %v1739, %v3412
      %v3733 = vmul.f32 %v1741, %v3413
      %v3734 = vmul.f32 %v1932, %v3414
      %v3735 = vmul.f32 %v1934, %v3415
      %v3736 = vmul.f32 %v1166, %v3416
      %v3737 = vmul.f32 %v1168, %v3417
      %v3738 = vmul.f32 %v1359, %v3418
      %v3739 = vmul.f32 %v1361, %v3419
      %v3740 = vmul.f32 %v1552, %v3420
      %v3741 = vmul.f32 %v1554, %v3421
      %v3742 = vmul.f32 %v1745, %v3422
      %v3743 = vmul.f32 %v1747, %v3423
      %v3744 = vmul.f32 %v1938, %v3424
      %v3745 = vmul.f32 %v1940, %v3425
      %v3746 = vmul.f32 %v1170, %v3426
      %v3747 = vmul.f32 %v1172, %v3427
      %v3748 = vmul.f32 %v1363, %v3428
      %v3749 = vmul.f32 %v1365, %v3429
      %v3750 = vmul.f32 %v1556, %v3430
      %v3751 = vmul.f32 %v1558, %v3431
      %v3752 = vmul.f32 %v1749, %v3432
      %v3753 = vmul.f32 %v1751, %v3433
      %v3754 = vmul.f32 %v1942, %v3434
      %v3755 = vmul.f32 %v1944, %v3435
      %v3756 = vmul.f32 %v1176, %v3436
      %v3757 = vmul.f32 %v1178, %v3437
      %v3758 = vmul.f32 %v1369, %v3438
      %v3759 = vmul.f32 %v1371, %v3439
      %v3760 = vmul.f32 %v1562, %v3440
      %v3761 = vmul.f32 %v1564, %v3441
      %v3762 = vmul.f32 %v1755, %v3442
      %v3763 = vmul.f32 %v1757, %v3443
      %v3764 = vmul.f32 %v1948, %v3444
      %v3765 = vmul.f32 %v1950, %v3445
      %v3766 = vmul.f32 %v1180, %v3446
      %v3767 = vmul.f32 %v1182, %v3447
      %v3768 = vmul.f32 %v1373, %v3448
      %v3769 = vmul.f32 %v1375, %v3449
      %v3770 = vmul.f32 %v1566, %v3450
      %v3771 = vmul.f32 %v1568, %v3451
      %v3772 = vmul.f32 %v1759, %v3452
      %v3773 = vmul.f32 %v1761, %v3453
      %v3774 = vmul.f32 %v1952, %v3454
      %v3775 = vmul.f32 %v1954, %v3455
      %v3776 = vmul.f32 %v1186, %v3456
      %v3777 = vmul.f32 %v1188, %v3457
      %v3778 = vmul.f32 %v1379, %v3458
      %v3779 = vmul.f32 %v1381, %v3459
      %v3780 = vmul.f32 %v1572, %v3460
      %v3781 = vmul.f32 %v1574, %v3461
      %v3782 = vmul.f32 %v1765, %v3462
      %v3783 = vmul.f32 %v1767, %v3463
      %v3784 = vmul.f32 %v1958, %v3464
      %v3785 = vmul.f32 %v1960, %v3465
      %v3786 = vmul.f32 %v1190, %v3466
      %v3787 = vmul.f32 %v1192, %v3467
      %v3788 = vmul.f32 %v1383, %v3468
      %v3789 = vmul.f32 %v1385, %v3469
      %v3790 = vmul.f32 %v1576, %v3470
      %v3791 = vmul.f32 %v1578, %v3471
      %v3792 = vmul.f32 %v1769, %v3472
      %v3793 = vmul.f32 %v1771, %v3473
      %v3794 = vmul.f32 %v1962, %v3474
      %v3795 = vmul.f32 %v1964, %v3475
      %v3796 = vmul.f32 %v1196, %v3476
      %v3797 = vmul.f32 %v1198, %v3477
      %v3798 = vmul.f32 %v1389, %v3478
      %v3799 = vmul.f32 %v1391, %v3479
      %v3800 = vmul.f32 %v1582, %v3480
      %v3801 = vmul.f32 %v1584, %v3481
      %v3802 = vmul.f32 %v1775, %v3482
      %v3803 = vmul.f32 %v1777, %v3483
      %v3804 = vmul.f32 %v1968, %v3484
      %v3805 = vmul.f32 %v1970, %v3485
      %v3806 = vmul.f32 %v1200, %v3486
      %v3807 = vmul.f32 %v1202, %v3487
      %v3808 = vmul.f32 %v1393, %v3488
      %v3809 = vmul.f32 %v1395, %v3489
      %v3810 = vmul.f32 %v1586, %v3490
      %v3811 = vmul.f32 %v1588, %v3491
      %v3812 = vmul.f32 %v1779, %v3492
      %v3813 = vmul.f32 %v1781, %v3493
      %v3814 = vmul.f32 %v1972, %v3494
      %v3815 = vmul.f32 %v1974, %v3495
      %v3816 = vmul.f32 %v1206, %v3496
      %v3817 = vmul.f32 %v1208, %v3497
      %v3818 = vmul.f32 %v1399, %v3498
      %v3819 = vmul.f32 %v1401, %v3499
      %v3820 = vmul.f32 %v1592, %v3500
      %v3821 = vmul.f32 %v1594, %v3501
      %v3822 = vmul.f32 %v1785, %v3502
      %v3823 = vmul.f32 %v1787, %v3503
      %v3824 = vmul.f32 %v1978, %v3504
      %v3825 = vmul.f32 %v1980, %v3505
      %v3826 = vmul.f32 %v1210, %v3506
      %v3827 = vmul.f32 %v1212, %v3507
      %v3828 = vmul.f32 %v1403, %v3508
      %v3829 = vmul.f32 %v1405, %v3509
      %v3830 = vmul.f32 %v1596, %v3510
      %v3831 = vmul.f32 %v1598, %v3511
      %v3832 = vmul.f32 %v1789, %v3512
      %v3833 = vmul.f32 %v1791, %v3513
      %v3834 = vmul.f32 %v1982, %v3514
      %v3835 = vmul.f32 %v1984, %v3515
      %v3836 = vmul.f32 %v1216, %v3516
      %v3837 = vmul.f32 %v1218, %v3517
      %v3838 = vmul.f32 %v1409, %v3518
      %v3839 = vmul.f32 %v1411, %v3519
      %v3840 = vmul.f32 %v1602, %v3520
      %v3841 = vmul.f32 %v1604, %v3521
      %v3842 = vmul.f32 %v1795, %v3522
      %v3843 = vmul.f32 %v1797, %v3523
      %v3844 = vmul.f32 %v1988, %v3524
      %v3845 = vmul.f32 %v1990, %v3525
      %v3846 = vmul.f32 %v1220, %v3526
      %v3847 = vmul.f32 %v1222, %v3527
      %v3848 = vmul.f32 %v1413, %v3528
      %v3849 = vmul.f32 %v1415, %v3529
      %v3850 = vmul.f32 %v1606, %v3530
      %v3851 = vmul.f32 %v1608, %v3531
      %v3852 = vmul.f32 %v1799, %v3532
      %v3853 = vmul.f32 %v1801, %v3533
      %v3854 = vmul.f32 %v1992, %v3534
      %v3855 = vmul.f32 %v1994, %v3535
      %v3856 = vmul.f32 %v1226, %v3536
      %v3857 = vmul.f32 %v1228, %v3537
      %v3858 = vmul.f32 %v1419, %v3538
      %v3859 = vmul.f32 %v1421, %v3539
      %v3860 = vmul.f32 %v1612, %v3540
      %v3861 = vmul.f32 %v1614, %v3541
      %v3862 = vmul.f32 %v1805, %v3542
      %v3863 = vmul.f32 %v1807, %v3543
      %v3864 = vmul.f32 %v1998, %v3544
      %v3865 = vmul.f32 %v2000, %v3545
      %v3866 = vmul.f32 %v1230, %v3546
      %v3867 = vmul.f32 %v1232, %v3547
      %v3868 = vmul.f32 %v1423, %v3548
      %v3869 = vmul.f32 %v1425, %v3549
      %v3870 = vmul.f32 %v1616, %v3550
      %v3871 = vmul.f32 %v1618, %v3551
      %v3872 = vmul.f32 %v1809, %v3552
      %v3873 = vmul.f32 %v1811, %v3553
      %v3874 = vmul.f32 %v2002, %v3554
      %v3875 = vmul.f32 %v2004, %v3555
      %v3876 = vmul.f32 %v1236, %v3556
      %v3877 = vmul.f32 %v1238, %v3557
      %v3878 = vmul.f32 %v1429, %v3558
      %v3879 = vmul.f32 %v1431, %v3559
      %v3880 = vmul.f32 %v1622, %v3560
      %v3881 = vmul.f32 %v1624, %v3561
      %v3882 = vmul.f32 %v1815, %v3562
      %v3883 = vmul.f32 %v1817, %v3563
      %v3884 = vmul.f32 %v2008, %v3564
      %v3885 = vmul.f32 %v2010, %v3565
      %v3886 = vmul.f32 %v1240, %v3566
      %v3887 = vmul.f32 %v1242, %v3567
      %v3888 = vmul.f32 %v1433, %v3568
      %v3889 = vmul.f32 %v1435, %v3569
      %v3890 = vmul.f32 %v1626, %v3570
      %v3891 = vmul.f32 %v1628, %v3571
      %v3892 = vmul.f32 %v1819, %v3572
      %v3893 = vmul.f32 %v1821, %v3573
      %v3894 = vmul.f32 %v2012, %v3574
      %v3895 = vmul.f32 %v2014, %v3575
      %v3896 = vmul.f32 %v1246, %v3576
      %v3897 = vmul.f32 %v1248, %v3577
      %v3898 = vmul.f32 %v1439, %v3578
      %v3899 = vmul.f32 %v1441, %v3579
      %v3900 = vmul.f32 %v1632, %v3580
      %v3901 = vmul.f32 %v1634, %v3581
      %v3902 = vmul.f32 %v1825, %v3582
      %v3903 = vmul.f32 %v1827, %v3583
      %v3904 = vmul.f32 %v2018, %v3584
      %v3905 = vmul.f32 %v2020, %v3585
      %v3906 = vmul.f32 %v1250, %v3586
      %v3907 = vmul.f32 %v1252, %v3587
      %v3908 = vmul.f32 %v1443, %v3588
      %v3909 = vmul.f32 %v1445, %v3589
      %v3910 = vmul.f32 %v1636, %v3590
      %v3911 = vmul.f32 %v1638, %v3591
      %v3912 = vmul.f32 %v1829, %v3592
      %v3913 = vmul.f32 %v1831, %v3593
      %v3914 = vmul.f32 %v2022, %v3594
      %v3915 = vmul.f32 %v2024, %v3595
      %v3916 = vmul.f32 %v1256, %v3596
      %v3917 = vmul.f32 %v1258, %v3597
      %v3918 = vmul.f32 %v1449, %v3598
      %v3919 = vmul.f32 %v1451, %v3599
      %v3920 = vmul.f32 %v1642, %v3600
      %v3921 = vmul.f32 %v1644, %v3601
      %v3922 = vmul.f32 %v1835, %v3602
      %v3923 = vmul.f32 %v1837, %v3603
      %v3924 = vmul.f32 %v2028, %v3604
      %v3925 = vmul.f32 %v2030, %v3605
      %v3926 = vmul.f32 %v1260, %v3606
      %v3927 = vmul.f32 %v1262, %v3607
      %v3928 = vmul.f32 %v1453, %v3608
      %v3929 = vmul.f32 %v1455, %v3609
      %v3930 = vmul.f32 %v1646, %v3610
      %v3931 = vmul.f32 %v1648, %v3611
      %v3932 = vmul.f32 %v1839, %v3612
      %v3933 = vmul.f32 %v1841, %v3613
      %v3934 = vmul.f32 %v2032, %v3614
      %v3935 = vmul.f32 %v2034, %v3615
      %v3936 = vmul.f32 %v1266, %v3616
      %v3937 = vmul.f32 %v1268, %v3617
      %v3938 = vmul.f32 %v1459, %v3618
      %v3939 = vmul.f32 %v1461, %v3619
      %v3940 = vmul.f32 %v1652, %v3620
      %v3941 = vmul.f32 %v1654, %v3621
      %v3942 = vmul.f32 %v1845, %v3622
      %v3943 = vmul.f32 %v1847, %v3623
      %v3944 = vmul.f32 %v2038, %v3624
      %v3945 = vmul.f32 %v2040, %v3625
      %v3946 = vmul.f32 %v1270, %v3626
      %v3947 = vmul.f32 %v1272, %v3627
      %v3948 = vmul.f32 %v1463, %v3628
      %v3949 = vmul.f32 %v1465, %v3629
      %v3950 = vmul.f32 %v1656, %v3630
      %v3951 = vmul.f32 %v1658, %v3631
      %v3952 = vmul.f32 %v1849, %v3632
      %v3953 = vmul.f32 %v1851, %v3633
      %v3954 = vmul.f32 %v2042, %v3634
      %v3955 = vmul.f32 %v2044, %v3635
      %v3956 = vmul.f32 %v1276, %v3636
      %v3957 = vmul.f32 %v1278, %v3637
      %v3958 = vmul.f32 %v1469, %v3638
      %v3959 = vmul.f32 %v1471, %v3639
      %v3960 = vmul.f32 %v1662, %v3640
      %v3961 = vmul.f32 %v1664, %v3641
      %v3962 = vmul.f32 %v1855, %v3642
      %v3963 = vmul.f32 %v1857, %v3643
      %v3964 = vmul.f32 %v2048, %v3644
      %v3965 = vmul.f32 %v2050, %v3645
      %v3966 = vmul.f32 %v1280, %v3646
      %v3967 = vmul.f32 %v1282, %v3647
      %v3968 = vmul.f32 %v1473, %v3648
      %v3969 = vmul.f32 %v1475, %v3649
      %v3970 = vmul.f32 %v1666, %v3650
      %v3971 = vmul.f32 %v1668, %v3651
      %v3972 = vmul.f32 %v1859, %v3652
      %v3973 = vmul.f32 %v1861, %v3653
      %v3974 = vmul.f32 %v2052, %v3654
      %v3975 = vmul.f32 %v2054, %v3655
      %v3976 = vld [vmem:[#allocation2] sm:$0xff]
      %v3977 = vld [vmem:[#allocation2 + $0x8] sm:$0x3]
      %v3978 = vadd.f32 %v3656, %v3666
      %v3979 = vadd.f32 %v3978, %v3676
      %v3980 = vadd.f32 %v3979, %v3686
      %v3981 = vadd.f32 %v3980, %v3696
      %v3982 = vadd.f32 %v3981, %v3706
      %v3983 = vadd.f32 %v3982, %v3716
      %v3984 = vadd.f32 %v3983, %v3726
      %v3985 = vadd.f32 %v3984, %v3736
      %v3986 = vadd.f32 %v3985, %v3746
      %v3987 = vadd.f32 %v3986, %v3756
      %v3988 = vadd.f32 %v3987, %v3766
      %v3989 = vadd.f32 %v3988, %v3776
      %v3990 = vadd.f32 %v3989, %v3786
      %v3991 = vadd.f32 %v3990, %v3796
      %v3992 = vadd.f32 %v3991, %v3806
      %v3993 = vadd.f32 %v3992, %v3816
      %v3994 = vadd.f32 %v3993, %v3826
      %v3995 = vadd.f32 %v3994, %v3836
      %v3996 = vadd.f32 %v3995, %v3846
      %v3997 = vadd.f32 %v3996, %v3856
      %v3998 = vadd.f32 %v3997, %v3866
      %v3999 = vadd.f32 %v3998, %v3876
      %v4000 = vadd.f32 %v3999, %v3886
      %v4001 = vadd.f32 %v4000, %v3896
      %v4002 = vadd.f32 %v4001, %v3906
      %v4003 = vadd.f32 %v4002, %v3916
      %v4004 = vadd.f32 %v4003, %v3926
      %v4005 = vadd.f32 %v4004, %v3936
      %v4006 = vadd.f32 %v4005, %v3946
      %v4007 = vadd.f32 %v4006, %v3956
      %v4008 = vadd.f32 %v4007, %v3966
      %v4009 = vrot.slane %v4008, 4
      %v4010 = vadd.f32 %v4008, %v4009
      %v4011 = vrot.slane %v4010, 2
      %v4012 = vadd.f32 %v4010, %v4011
      %v4013 = vrot.slane %v4012, 1
      %v4014 = vadd.f32 %v4012, %v4013
      %v4015 = vadd.f32 %v3657, %v3667
      %v4016 = vadd.f32 %v4015, %v3677
      %v4017 = vadd.f32 %v4016, %v3687
      %v4018 = vadd.f32 %v4017, %v3697
      %v4019 = vadd.f32 %v4018, %v3707
      %v4020 = vadd.f32 %v4019, %v3717
      %v4021 = vadd.f32 %v4020, %v3727
      %v4022 = vadd.f32 %v4021, %v3737
      %v4023 = vadd.f32 %v4022, %v3747
      %v4024 = vadd.f32 %v4023, %v3757
      %v4025 = vadd.f32 %v4024, %v3767
      %v4026 = vadd.f32 %v4025, %v3777
      %v4027 = vadd.f32 %v4026, %v3787
      %v4028 = vadd.f32 %v4027, %v3797
      %v4029 = vadd.f32 %v4028, %v3807
      %v4030 = vadd.f32 %v4029, %v3817
      %v4031 = vadd.f32 %v4030, %v3827
      %v4032 = vadd.f32 %v4031, %v3837
      %v4033 = vadd.f32 %v4032, %v3847
      %v4034 = vadd.f32 %v4033, %v3857
      %v4035 = vadd.f32 %v4034, %v3867
      %v4036 = vadd.f32 %v4035, %v3877
      %v4037 = vadd.f32 %v4036, %v3887
      %v4038 = vadd.f32 %v4037, %v3897
      %v4039 = vadd.f32 %v4038, %v3907
      %v4040 = vadd.f32 %v4039, %v3917
      %v4041 = vadd.f32 %v4040, %v3927
      %v4042 = vadd.f32 %v4041, %v3937
      %v4043 = vadd.f32 %v4042, %v3947
      %v4044 = vadd.f32 %v4043, %v3957
      %v4045 = vadd.f32 %v4044, %v3967
      %v4046 = vrot.slane %v4045, 4
      %v4047 = vadd.f32 %v4045, %v4046
      %v4048 = vrot.slane %v4047, 2
      %v4049 = vadd.f32 %v4047, %v4048
      %v4050 = vrot.slane %v4049, 1
      %v4051 = vadd.f32 %v4049, %v4050
      %v4052 = vadd.f32 %v3658, %v3668
      %v4053 = vadd.f32 %v4052, %v3678
      %v4054 = vadd.f32 %v4053, %v3688
      %v4055 = vadd.f32 %v4054, %v3698
      %v4056 = vadd.f32 %v4055, %v3708
      %v4057 = vadd.f32 %v4056, %v3718
      %v4058 = vadd.f32 %v4057, %v3728
      %v4059 = vadd.f32 %v4058, %v3738
      %v4060 = vadd.f32 %v4059, %v3748
      %v4061 = vadd.f32 %v4060, %v3758
      %v4062 = vadd.f32 %v4061, %v3768
      %v4063 = vadd.f32 %v4062, %v3778
      %v4064 = vadd.f32 %v4063, %v3788
      %v4065 = vadd.f32 %v4064, %v3798
      %v4066 = vadd.f32 %v4065, %v3808
      %v4067 = vadd.f32 %v4066, %v3818
      %v4068 = vadd.f32 %v4067, %v3828
      %v4069 = vadd.f32 %v4068, %v3838
      %v4070 = vadd.f32 %v4069, %v3848
      %v4071 = vadd.f32 %v4070, %v3858
      %v4072 = vadd.f32 %v4071, %v3868
      %v4073 = vadd.f32 %v4072, %v3878
      %v4074 = vadd.f32 %v4073, %v3888
      %v4075 = vadd.f32 %v4074, %v3898
      %v4076 = vadd.f32 %v4075, %v3908
      %v4077 = vadd.f32 %v4076, %v3918
      %v4078 = vadd.f32 %v4077, %v3928
      %v4079 = vadd.f32 %v4078, %v3938
      %v4080 = vadd.f32 %v4079, %v3948
      %v4081 = vadd.f32 %v4080, %v3958
      %v4082 = vadd.f32 %v4081, %v3968
      %v4083 = vrot.slane %v4082, 4
      %v4084 = vadd.f32 %v4082, %v4083
      %v4085 = vrot.slane %v4084, 2
      %v4086 = vadd.f32 %v4084, %v4085
      %v4087 = vrot.slane %v4086, 1
      %v4088 = vadd.f32 %v4086, %v4087
      %v4089 = vadd.f32 %v3659, %v3669
      %v4090 = vadd.f32 %v4089, %v3679
      %v4091 = vadd.f32 %v4090, %v3689
      %v4092 = vadd.f32 %v4091, %v3699
      %v4093 = vadd.f32 %v4092, %v3709
      %v4094 = vadd.f32 %v4093, %v3719
      %v4095 = vadd.f32 %v4094, %v3729
      %v4096 = vadd.f32 %v4095, %v3739
      %v4097 = vadd.f32 %v4096, %v3749
      %v4098 = vadd.f32 %v4097, %v3759
      %v4099 = vadd.f32 %v4098, %v3769
      %v4100 = vadd.f32 %v4099, %v3779
      %v4101 = vadd.f32 %v4100, %v3789
      %v4102 = vadd.f32 %v4101, %v3799
      %v4103 = vadd.f32 %v4102, %v3809
      %v4104 = vadd.f32 %v4103, %v3819
      %v4105 = vadd.f32 %v4104, %v3829
      %v4106 = vadd.f32 %v4105, %v3839
      %v4107 = vadd.f32 %v4106, %v3849
      %v4108 = vadd.f32 %v4107, %v3859
      %v4109 = vadd.f32 %v4108, %v3869
      %v4110 = vadd.f32 %v4109, %v3879
      %v4111 = vadd.f32 %v4110, %v3889
      %v4112 = vadd.f32 %v4111, %v3899
      %v4113 = vadd.f32 %v4112, %v3909
      %v4114 = vadd.f32 %v4113, %v3919
      %v4115 = vadd.f32 %v4114, %v3929
      %v4116 = vadd.f32 %v4115, %v3939
      %v4117 = vadd.f32 %v4116, %v3949
      %v4118 = vadd.f32 %v4117, %v3959
      %v4119 = vadd.f32 %v4118, %v3969
      %v4120 = vrot.slane %v4119, 4
      %v4121 = vadd.f32 %v4119, %v4120
      %v4122 = vrot.slane %v4121, 2
      %v4123 = vadd.f32 %v4121, %v4122
      %v4124 = vrot.slane %v4123, 1
      %v4125 = vadd.f32 %v4123, %v4124
      %v4126 = vadd.f32 %v3660, %v3670
      %v4127 = vadd.f32 %v4126, %v3680
      %v4128 = vadd.f32 %v4127, %v3690
      %v4129 = vadd.f32 %v4128, %v3700
      %v4130 = vadd.f32 %v4129, %v3710
      %v4131 = vadd.f32 %v4130, %v3720
      %v4132 = vadd.f32 %v4131, %v3730
      %v4133 = vadd.f32 %v4132, %v3740
      %v4134 = vadd.f32 %v4133, %v3750
      %v4135 = vadd.f32 %v4134, %v3760
      %v4136 = vadd.f32 %v4135, %v3770
      %v4137 = vadd.f32 %v4136, %v3780
      %v4138 = vadd.f32 %v4137, %v3790
      %v4139 = vadd.f32 %v4138, %v3800
      %v4140 = vadd.f32 %v4139, %v3810
      %v4141 = vadd.f32 %v4140, %v3820
      %v4142 = vadd.f32 %v4141, %v3830
      %v4143 = vadd.f32 %v4142, %v3840
      %v4144 = vadd.f32 %v4143, %v3850
      %v4145 = vadd.f32 %v4144, %v3860
      %v4146 = vadd.f32 %v4145, %v3870
      %v4147 = vadd.f32 %v4146, %v3880
      %v4148 = vadd.f32 %v4147, %v3890
      %v4149 = vadd.f32 %v4148, %v3900
      %v4150 = vadd.f32 %v4149, %v3910
      %v4151 = vadd.f32 %v4150, %v3920
      %v4152 = vadd.f32 %v4151, %v3930
      %v4153 = vadd.f32 %v4152, %v3940
      %v4154 = vadd.f32 %v4153, %v3950
      %v4155 = vadd.f32 %v4154, %v3960
      %v4156 = vadd.f32 %v4155, %v3970
      %v4157 = vrot.slane %v4156, 4
      %v4158 = vadd.f32 %v4156, %v4157
      %v4159 = vrot.slane %v4158, 2
      %v4160 = vadd.f32 %v4158, %v4159
      %v4161 = vrot.slane %v4160, 1
      %v4162 = vadd.f32 %v4160, %v4161
      %v4163 = vadd.f32 %v3661, %v3671
      %v4164 = vadd.f32 %v4163, %v3681
      %v4165 = vadd.f32 %v4164, %v3691
      %v4166 = vadd.f32 %v4165, %v3701
      %v4167 = vadd.f32 %v4166, %v3711
      %v4168 = vadd.f32 %v4167, %v3721
      %v4169 = vadd.f32 %v4168, %v3731
      %v4170 = vadd.f32 %v4169, %v3741
      %v4171 = vadd.f32 %v4170, %v3751
      %v4172 = vadd.f32 %v4171, %v3761
      %v4173 = vadd.f32 %v4172, %v3771
      %v4174 = vadd.f32 %v4173, %v3781
      %v4175 = vadd.f32 %v4174, %v3791
      %v4176 = vadd.f32 %v4175, %v3801
      %v4177 = vadd.f32 %v4176, %v3811
      %v4178 = vadd.f32 %v4177, %v3821
      %v4179 = vadd.f32 %v4178, %v3831
      %v4180 = vadd.f32 %v4179, %v3841
      %v4181 = vadd.f32 %v4180, %v3851
      %v4182 = vadd.f32 %v4181, %v3861
      %v4183 = vadd.f32 %v4182, %v3871
      %v4184 = vadd.f32 %v4183, %v3881
      %v4185 = vadd.f32 %v4184, %v3891
      %v4186 = vadd.f32 %v4185, %v3901
      %v4187 = vadd.f32 %v4186, %v3911
      %v4188 = vadd.f32 %v4187, %v3921
      %v4189 = vadd.f32 %v4188, %v3931
      %v4190 = vadd.f32 %v4189, %v3941
      %v4191 = vadd.f32 %v4190, %v3951
      %v4192 = vadd.f32 %v4191, %v3961
      %v4193 = vadd.f32 %v4192, %v3971
      %v4194 = vrot.slane %v4193, 4
      %v4195 = vadd.f32 %v4193, %v4194
      %v4196 = vrot.slane %v4195, 2
      %v4197 = vadd.f32 %v4195, %v4196
      %v4198 = vrot.slane %v4197, 1
      %v4199 = vadd.f32 %v4197, %v4198
      %v4200 = vadd.f32 %v3662, %v3672
      %v4201 = vadd.f32 %v4200, %v3682
      %v4202 = vadd.f32 %v4201, %v3692
      %v4203 = vadd.f32 %v4202, %v3702
      %v4204 = vadd.f32 %v4203, %v3712
      %v4205 = vadd.f32 %v4204, %v3722
      %v4206 = vadd.f32 %v4205, %v3732
      %v4207 = vadd.f32 %v4206, %v3742
      %v4208 = vadd.f32 %v4207, %v3752
      %v4209 = vadd.f32 %v4208, %v3762
      %v4210 = vadd.f32 %v4209, %v3772
      %v4211 = vadd.f32 %v4210, %v3782
      %v4212 = vadd.f32 %v4211, %v3792
      %v4213 = vadd.f32 %v4212, %v3802
      %v4214 = vadd.f32 %v4213, %v3812
      %v4215 = vadd.f32 %v4214, %v3822
      %v4216 = vadd.f32 %v4215, %v3832
      %v4217 = vadd.f32 %v4216, %v3842
      %v4218 = vadd.f32 %v4217, %v3852
      %v4219 = vadd.f32 %v4218, %v3862
      %v4220 = vadd.f32 %v4219, %v3872
      %v4221 = vadd.f32 %v4220, %v3882
      %v4222 = vadd.f32 %v4221, %v3892
      %v4223 = vadd.f32 %v4222, %v3902
      %v4224 = vadd.f32 %v4223, %v3912
      %v4225 = vadd.f32 %v4224, %v3922
      %v4226 = vadd.f32 %v4225, %v3932
      %v4227 = vadd.f32 %v4226, %v3942
      %v4228 = vadd.f32 %v4227, %v3952
      %v4229 = vadd.f32 %v4228, %v3962
      %v4230 = vadd.f32 %v4229, %v3972
      %v4231 = vrot.slane %v4230, 4
      %v4232 = vadd.f32 %v4230, %v4231
      %v4233 = vrot.slane %v4232, 2
      %v4234 = vadd.f32 %v4232, %v4233
      %v4235 = vrot.slane %v4234, 1
      %v4236 = vadd.f32 %v4234, %v4235
      %v4237 = vadd.f32 %v3663, %v3673
      %v4238 = vadd.f32 %v4237, %v3683
      %v4239 = vadd.f32 %v4238, %v3693
      %v4240 = vadd.f32 %v4239, %v3703
      %v4241 = vadd.f32 %v4240, %v3713
      %v4242 = vadd.f32 %v4241, %v3723
      %v4243 = vadd.f32 %v4242, %v3733
      %v4244 = vadd.f32 %v4243, %v3743
      %v4245 = vadd.f32 %v4244, %v3753
      %v4246 = vadd.f32 %v4245, %v3763
      %v4247 = vadd.f32 %v4246, %v3773
      %v4248 = vadd.f32 %v4247, %v3783
      %v4249 = vadd.f32 %v4248, %v3793
      %v4250 = vadd.f32 %v4249, %v3803
      %v4251 = vadd.f32 %v4250, %v3813
      %v4252 = vadd.f32 %v4251, %v3823
      %v4253 = vadd.f32 %v4252, %v3833
      %v4254 = vadd.f32 %v4253, %v3843
      %v4255 = vadd.f32 %v4254, %v3853
      %v4256 = vadd.f32 %v4255, %v3863
      %v4257 = vadd.f32 %v4256, %v3873
      %v4258 = vadd.f32 %v4257, %v3883
      %v4259 = vadd.f32 %v4258, %v3893
      %v4260 = vadd.f32 %v4259, %v3903
      %v4261 = vadd.f32 %v4260, %v3913
      %v4262 = vadd.f32 %v4261, %v3923
      %v4263 = vadd.f32 %v4262, %v3933
      %v4264 = vadd.f32 %v4263, %v3943
      %v4265 = vadd.f32 %v4264, %v3953
      %v4266 = vadd.f32 %v4265, %v3963
      %v4267 = vadd.f32 %v4266, %v3973
      %v4268 = vrot.slane %v4267, 4
      %v4269 = vadd.f32 %v4267, %v4268
      %v4270 = vrot.slane %v4269, 2
      %v4271 = vadd.f32 %v4269, %v4270
      %v4272 = vrot.slane %v4271, 1
      %v4273 = vadd.f32 %v4271, %v4272
      %v4274 = vadd.f32 %v3664, %v3674
      %v4275 = vadd.f32 %v4274, %v3684
      %v4276 = vadd.f32 %v4275, %v3694
      %v4277 = vadd.f32 %v4276, %v3704
      %v4278 = vadd.f32 %v4277, %v3714
      %v4279 = vadd.f32 %v4278, %v3724
      %v4280 = vadd.f32 %v4279, %v3734
      %v4281 = vadd.f32 %v4280, %v3744
      %v4282 = vadd.f32 %v4281, %v3754
      %v4283 = vadd.f32 %v4282, %v3764
      %v4284 = vadd.f32 %v4283, %v3774
      %v4285 = vadd.f32 %v4284, %v3784
      %v4286 = vadd.f32 %v4285, %v3794
      %v4287 = vadd.f32 %v4286, %v3804
      %v4288 = vadd.f32 %v4287, %v3814
      %v4289 = vadd.f32 %v4288, %v3824
      %v4290 = vadd.f32 %v4289, %v3834
      %v4291 = vadd.f32 %v4290, %v3844
      %v4292 = vadd.f32 %v4291, %v3854
      %v4293 = vadd.f32 %v4292, %v3864
      %v4294 = vadd.f32 %v4293, %v3874
      %v4295 = vadd.f32 %v4294, %v3884
      %v4296 = vadd.f32 %v4295, %v3894
      %v4297 = vadd.f32 %v4296, %v3904
      %v4298 = vadd.f32 %v4297, %v3914
      %v4299 = vadd.f32 %v4298, %v3924
      %v4300 = vadd.f32 %v4299, %v3934
      %v4301 = vadd.f32 %v4300, %v3944
      %v4302 = vadd.f32 %v4301, %v3954
      %v4303 = vadd.f32 %v4302, %v3964
      %v4304 = vadd.f32 %v4303, %v3974
      %v4305 = vrot.slane %v4304, 4
      %v4306 = vadd.f32 %v4304, %v4305
      %v4307 = vrot.slane %v4306, 2
      %v4308 = vadd.f32 %v4306, %v4307
      %v4309 = vrot.slane %v4308, 1
      %v4310 = vadd.f32 %v4308, %v4309
      %v4311 = vadd.f32 %v3665, %v3675
      %v4312 = vadd.f32 %v4311, %v3685
      %v4313 = vadd.f32 %v4312, %v3695
      %v4314 = vadd.f32 %v4313, %v3705
      %v4315 = vadd.f32 %v4314, %v3715
      %v4316 = vadd.f32 %v4315, %v3725
      %v4317 = vadd.f32 %v4316, %v3735
      %v4318 = vadd.f32 %v4317, %v3745
      %v4319 = vadd.f32 %v4318, %v3755
      %v4320 = vadd.f32 %v4319, %v3765
      %v4321 = vadd.f32 %v4320, %v3775
      %v4322 = vadd.f32 %v4321, %v3785
      %v4323 = vadd.f32 %v4322, %v3795
      %v4324 = vadd.f32 %v4323, %v3805
      %v4325 = vadd.f32 %v4324, %v3815
      %v4326 = vadd.f32 %v4325, %v3825
      %v4327 = vadd.f32 %v4326, %v3835
      %v4328 = vadd.f32 %v4327, %v3845
      %v4329 = vadd.f32 %v4328, %v3855
      %v4330 = vadd.f32 %v4329, %v3865
      %v4331 = vadd.f32 %v4330, %v3875
      %v4332 = vadd.f32 %v4331, %v3885
      %v4333 = vadd.f32 %v4332, %v3895
      %v4334 = vadd.f32 %v4333, %v3905
      %v4335 = vadd.f32 %v4334, %v3915
      %v4336 = vadd.f32 %v4335, %v3925
      %v4337 = vadd.f32 %v4336, %v3935
      %v4338 = vadd.f32 %v4337, %v3945
      %v4339 = vadd.f32 %v4338, %v3955
      %v4340 = vadd.f32 %v4339, %v3965
      %v4341 = vadd.f32 %v4340, %v3975
      %v4342 = vrot.slane %v4341, 4
      %v4343 = vadd.f32 %v4341, %v4342
      %v4344 = vrot.slane %v4343, 2
      %v4345 = vadd.f32 %v4343, %v4344
      %v4346 = vrot.slane %v4345, 1
      %v4347 = vadd.f32 %v4345, %v4346
      %v4358 = vcombine.low %v4014, %v4051
      %v4359 = vcombine.low %v4088, %v4125
      %v4360 = vcombine.low %v4162, %v4199
      %v4361 = vcombine.low %v4236, %v4273
      %v4363 = vunpack.c.l.s4 1966171168
      %v4364 = vunpack.c.0.s8 %v4363
      %v4365 = vlaneseq
      %v4366 = vshrl.u32 %v4365, 7
      %v4367 = vsub.s32 %v4364, %v4366
      %v4368 = vrot.slane %v4358, %v4367
      %v4370 = vunpack.c.l.s4 1966171168
      %v4371 = vunpack.c.0.s8 %v4370
      %v4372 = vlaneseq
      %v4373 = vshrl.u32 %v4372, 7
      %v4374 = vsub.s32 %v4371, %v4373
      %v4375 = vrot.slane %v4359, %v4374
      %v4377 = vunpack.c.l.s4 1966171168
      %v4378 = vunpack.c.0.s8 %v4377
      %v4379 = vlaneseq
      %v4380 = vshrl.u32 %v4379, 7
      %v4381 = vsub.s32 %v4378, %v4380
      %v4382 = vrot.slane %v4360, %v4381
      %v4384 = vunpack.c.l.s4 1966171168
      %v4385 = vunpack.c.0.s8 %v4384
      %v4386 = vlaneseq
      %v4387 = vshrl.u32 %v4386, 7
      %v4388 = vsub.s32 %v4385, %v4387
      %v4389 = vrot.slane %v4361, %v4388
      %v4390 = vcombine.low %v4368, %v4375
      %v4391 = vcombine.low %v4382, %v4389
      %v4393 = vunpack.c.l.s4 1966171168
      %v4394 = vunpack.c.0.s8 %v4393
      %v4395 = vlaneseq
      %v4396 = vshrl.u32 %v4395, 7
      %v4397 = vsub.s32 %v4394, %v4396
      %v4398 = vrot.slane %v4390, %v4397
      %v4400 = vunpack.c.l.s4 1966171168
      %v4401 = vunpack.c.0.s8 %v4400
      %v4402 = vlaneseq
      %v4403 = vshrl.u32 %v4402, 7
      %v4404 = vsub.s32 %v4401, %v4403
      %v4405 = vrot.slane %v4391, %v4404
      %v4406 = vcombine.low %v4398, %v4405
      %v4407 = vcombine.low %v4310, %v4347
      %v4409 = vunpack.c.l.s4 1966171168
      %v4410 = vunpack.c.0.s8 %v4409
      %v4411 = vlaneseq
      %v4412 = vshrl.u32 %v4411, 7
      %v4413 = vsub.s32 %v4410, %v4412
      %v4414 = vrot.slane %v4407, %v4413
      %v4416 = vunpack.c.l.s4 1966171168
      %v4417 = vunpack.c.0.s8 %v4416
      %v4418 = vlaneseq
      %v4419 = vshrl.u32 %v4418, 7
      %v4420 = vsub.s32 %v4417, %v4419
      %v4421 = vrot.slane %v4414, %v4420
      %v4424 = vadd.f32 %v3976, %v4406
      %v4425 = vadd.f32 %v3977, %v4421
      %4426 = vst [vmem:[#allocation2] sm:$0xff] %v4424
      %v4427 = vlaneseq
      %vm4428 = vcmp.ge.s32.totalorder %v4427, 0
      %vm4429 = vcmp.lt.s32.totalorder %v4427, 256
      %vm4430 = vmand %vm4428, %vm4429
      %4431 = vst.msk [vmem:[#allocation2 + $0x8] sm:$0x3] %vm4430, %v4425
      // Predicated region
      $region53: #{net_forward.1} parent=47 // pred_check
        %p4432 = pneg %p306
      $region54: #{net_forward.1} parent=47 // pred_check_branch
        %4434 = sbr.rel (%p4432) target = $region56
      $region55: #{net_forward.1} parent=47 // pred_region
        %v4435 = vld [vmem:[#allocation2] sm:$0xff]
        %v4436 = vld [vmem:[#allocation2 + $0x8] sm:$0x3]
        %v4437 = vmul.f32 %v4435, 0.00390625
        %v4438 = vmul.f32 %v4436, 0.00390625
        %v4439 = vld [vmem:[%s5] sm:$0xff]
        %v4440 = vld [vmem:[%s5 + $0x8] sm:$0x3]
        %v4441 = vmul.f32 %v4437, %v4439
        %v4442 = vmul.f32 %v4438, %v4440
        %v4445 = vlaneseq
        %v4446 = vshrl.u32 %v4445, 7
        %v4447 = vsub.s32 0, %v4446
        %v4448 = vrot.slane %v4441, %v4447
        %v4449 = vlaneseq
        %v4450 = vshrl.u32 %v4449, 7
        %v4451 = vsub.s32 1, %v4450
        %v4452 = vrot.slane %v4441, %v4451
        %v4453 = vlaneseq
        %v4454 = vshrl.u32 %v4453, 7
        %v4455 = vsub.s32 2, %v4454
        %v4456 = vrot.slane %v4441, %v4455
        %v4457 = vlaneseq
        %v4458 = vshrl.u32 %v4457, 7
        %v4459 = vsub.s32 3, %v4458
        %v4460 = vrot.slane %v4441, %v4459
        %v4461 = vlaneseq
        %v4462 = vshrl.u32 %v4461, 7
        %v4463 = vsub.s32 4, %v4462
        %v4464 = vrot.slane %v4441, %v4463
        %v4465 = vlaneseq
        %v4466 = vshrl.u32 %v4465, 7
        %v4467 = vsub.s32 5, %v4466
        %v4468 = vrot.slane %v4441, %v4467
        %v4469 = vlaneseq
        %v4470 = vshrl.u32 %v4469, 7
        %v4471 = vsub.s32 6, %v4470
        %v4472 = vrot.slane %v4441, %v4471
        %v4473 = vlaneseq
        %v4474 = vshrl.u32 %v4473, 7
        %v4475 = vsub.s32 7, %v4474
        %v4476 = vrot.slane %v4441, %v4475
        %v4477 = vlaneseq
        %v4478 = vshrl.u32 %v4477, 7
        %v4479 = vsub.s32 0, %v4478
        %v4480 = vrot.slane %v4442, %v4479
        %v4481 = vlaneseq
        %v4482 = vshrl.u32 %v4481, 7
        %v4483 = vsub.s32 1, %v4482
        %v4484 = vrot.slane %v4442, %v4483
        %vm4495 = vcmask 1040384
        %v4496 = vsel %vm4495, %v4448, 0.0
        %v4497 = vsel %vm4495, %v4452, 0.0
        %v4498 = vadd.f32 %v4496, %v4497
        %v4499 = vsel %vm4495, %v4456, 0.0
        %v4500 = vadd.f32 %v4498, %v4499
        %v4501 = vsel %vm4495, %v4460, 0.0
        %v4502 = vadd.f32 %v4500, %v4501
        %v4503 = vsel %vm4495, %v4464, 0.0
        %v4504 = vadd.f32 %v4502, %v4503
        %v4505 = vsel %vm4495, %v4468, 0.0
        %v4506 = vadd.f32 %v4504, %v4505
        %v4507 = vsel %vm4495, %v4472, 0.0
        %v4508 = vadd.f32 %v4506, %v4507
        %v4509 = vsel %vm4495, %v4476, 0.0
        %v4510 = vadd.f32 %v4508, %v4509
        %v4511 = vsel %vm4495, %v4480, 0.0
        %v4512 = vadd.f32 %v4510, %v4511
        %v4513 = vsel %vm4495, %v4484, 0.0
        %v4514 = vadd.f32 %v4512, %v4513
        %4515 = vadd.xlane.f32.xlu0 %v4514
        %v4516 = vpop.xlane.xlu0 %4515
        %v4517 = vld [vmem:[#allocation3] sm:$0x1]
        %v4518 = vadd.f32 %v4516, %v4517
        %vm4519 = vcmask 0
        %4520 = vst.msk [vmem:[%s304] sm:$0x1] %vm4519, %v4518
      $region56: #{net_forward.1} parent=47 // pred_fallthru
        _
      %p4521 = scmp.lt.s32.totalorder %s24, 1
      %s4522 = scalar_select %p4521, %s24, 1
      %s4523 = scalar_lea.vmem %s7, %s4522
      // Predicated region
      $region57: #{net_forward.1} parent=47 // pred_check
        %p4524 = pneg %p204
      $region58: #{net_forward.1} parent=47 // pred_check_branch
        %4526 = sbr.rel (%p4524) target = $region60
      $region59: #{net_forward.1} parent=47 // pred_region
        _
      $region60: #{net_forward.1} parent=47 // pred_fallthru
        _
    $region48: #{net_forward.1} parent=5 // pred_fallthru
      _
    %p4527 = scmp.le.s32.totalorder 2, %s15
    // Predicated region
    $region61: #{net_forward.1} parent=5 // pred_check
      %p4528 = pneg %p4527
    $region62: #{net_forward.1} parent=5 // pred_check_branch
      %4530 = sbr.rel (%p4528) target = $region64
    $region63: #{net_forward.1} parent=5 // pred_region
      %s4531 = ssub.s32 %s15, 2
      // Predicated region
      $region65: #{net_forward.1} parent=63 // pred_check
        %p4532 = pneg %p210
      $region66: #{net_forward.1} parent=63 // pred_check_branch
        %4534 = sbr.rel (%p4532) target = $region68
      $region67: #{net_forward.1} parent=63 // pred_region
        %p4535 = scmp.lt.s32.totalorder %s26, 1
        %s4536 = scalar_select %p4535, %s26, 1
        %s4537 = scalar_lea.vmem %s7, %s4536
      $region68: #{net_forward.1} parent=63 // pred_fallthru
        _
    $region64: #{net_forward.1} parent=5 // pred_fallthru
      _
  $region6: #{net_forward.1} parent=0 // loop_footer
    %s19 = sadd.s32 1, %s15
  $region7: #{net_forward.1} parent=0 // loop_footer_branch
    %14 = sbr.rel target = $region3
  $region8: #{net_forward.1} parent=0 // loop_exit
    _

</llo_original>
